<compile_context>
chip_gen: v7x
topology: tpu7x:2x2x1
jax: 0.10.0
libtpu: 0.0.40
codegen_flags: <defaults>
</compile_context>

<pallas_src>
import jax
import jax.numpy as jnp
from jax.experimental import pallas as pl
from jax.experimental.pallas import tpu as pltpu


# ---------------------------------------------------------------------------
# Pallas kernel
# ---------------------------------------------------------------------------
def make_kernel(nlayers, G0, G, W, mxu_dtype):
    H = 3
    Cfinal = G0 + nlayers * G
    nparams = 6 * nlayers + 2  # per layer: w1,b1,w2,b2,wc,bc ; plus LFF w,b

    def kernel(*refs):
        x_ref = refs[0]
        params = refs[1:1 + nparams]
        o_ref = refs[1 + nparams]
        feat_ref = refs[2 + nparams]    # (1, 3, W+6, Cfinal) width-padded features
        x3pad_ref = refs[3 + nparams]   # (1, 5, W+2, G)      padded 3x3-conv input
        col_ref = refs[4 + nparams]     # (3*W, Kmax)         im2col staging

        def mdot(a, b):
            return jnp.dot(a.astype(mxu_dtype), b,
                           preferred_element_type=jnp.float32)

        # Zero ONLY the zero-pad borders.  The interiors are fully overwritten
        # every step, but VMEM scratch is per-core and persists across grid
        # steps, so the borders are (cheaply) re-zeroed once per body
        # invocation — never inside the layer/chunk loops.
        feat_ref[:, :, 0:3, :] = jnp.zeros((1, H, 3, Cfinal), jnp.float32)
        feat_ref[:, :, 3 + W:6 + W, :] = jnp.zeros((1, H, 3, Cfinal), jnp.float32)
        x3pad_ref[:, 0:1, :, :] = jnp.zeros((1, 1, W + 2, G), jnp.float32)
        x3pad_ref[:, H + 1:H + 2, :, :] = jnp.zeros((1, 1, W + 2, G), jnp.float32)
        x3pad_ref[:, :, 0:1, :] = jnp.zeros((1, H + 2, 1, G), jnp.float32)
        x3pad_ref[:, :, W + 1:W + 2, :] = jnp.zeros((1, H + 2, 1, G), jnp.float32)

        # Seed the feature buffer with x (the first G0 channels of the concat).
        feat_ref[:, :, 3:3 + W, 0:G0] = x_ref[...].astype(jnp.float32)

        for l in range(nlayers):
            Cin = G0 + l * G
            w1 = params[6 * l + 0][...]   # (3*Cin, 3G)  row h*Cin+cin, col k*G+g
            b1 = params[6 * l + 1][...]   # (1, 3G)
            w2 = params[6 * l + 2][...]   # (7*Cin, G)   row kw*Cin+cin
            b2 = params[6 * l + 3][...]   # (1, G)
            wc = params[6 * l + 4][...]   # (9*G, G)     row (kh*3+kw)*G+gin
            bc = params[6 * l + 5][...]   # (1, G)

            # ---- conv_1: Conv2d(Cin, 3G, (3,1), valid) + ReLU — one matmul.
            for h in range(3):
                slab = feat_ref[:, h:h + 1, 3:3 + W, 0:Cin].reshape(W, Cin)
                col_ref[0:W, h * Cin:(h + 1) * Cin] = slab.astype(col_ref.dtype)
            out1 = jnp.maximum(mdot(col_ref[0:W, 0:3 * Cin], w1) + b1, 0.0)  # (W,3G)
            # out1 column k*G+g == torch channel 3g+k -> (chan g, row k) after
            # the module's reshape([B, C//3, 3, W]).
            x1 = jnp.concatenate(
                [out1[:, k * G:(k + 1) * G].reshape(1, W, G) for k in range(3)],
                axis=0)                                                      # (3,W,G)

            # ---- conv_2: Conv2d(Cin, G, (1,7), pad (0,3)) + ReLU — one matmul.
            for kw in range(7):
                slab = feat_ref[:, :, kw:kw + W, 0:Cin].reshape(H * W, Cin)
                col_ref[0:H * W, kw * Cin:(kw + 1) * Cin] = slab.astype(col_ref.dtype)
            x2 = jnp.maximum(mdot(col_ref[0:H * W, 0:7 * Cin], w2) + b2, 0.0)
            x2 = x2.reshape(H, W, G)

            # x3 = x1 + x2, written to the padded 3x3-conv input in ONE store.
            x3pad_ref[:, 1:1 + H, 1:1 + W, :] = (x1 + x2).reshape(1, H, W, G)

            # ---- conv: Conv2d(G, G, (3,3), pad 1), no ReLU — one matmul.
            for kh in range(3):
                for kw in range(3):
                    t = kh * 3 + kw
                    slab = x3pad_ref[:, kh:kh + H, kw:kw + W, :].reshape(H * W, G)
                    col_ref[0:H * W, t * G:(t + 1) * G] = slab.astype(col_ref.dtype)
            out = (mdot(col_ref[0:H * W, 0:9 * G], wc) + bc).reshape(1, H, W, G)

            # torch.cat((x, out), 1): append into the lane-contiguous buffer.
            feat_ref[:, :, 3:3 + W, G0 + l * G:G0 + (l + 1) * G] = out

        # ---- LFF: 1x1 conv over all Cfinal channels + residual.
        wl = params[6 * nlayers + 0][...]     # (Cfinal, G0)
        bl = params[6 * nlayers + 1][...]     # (1, G0)
        featflat = feat_ref[:, :, 3:3 + W, :].reshape(H * W, Cfinal)
        y = (mdot(featflat, wl) + bl).reshape(1, H, W, G0)
        o_ref[...] = (y + x_ref[...].astype(jnp.float32)).astype(o_ref.dtype)

    return kernel


# ---------------------------------------------------------------------------
# Parameter setup (deterministic, PyTorch weight layouts) + host-side fusion of
# the per-tap weight slices into single im2col matmul weights.
# ---------------------------------------------------------------------------
def init_params(key, G0, G, nlayers):
    layer_params = []
    Cin = G0
    for _ in range(nlayers):
        key, k0, k1, k2, k3, k4, k5 = jax.random.split(key, 7)
        layer_params.append(dict(
            w1=jax.random.normal(k0, (3 * G, Cin, 3, 1), jnp.float32) * 0.1,
            b1=jax.random.normal(k1, (3 * G,), jnp.float32) * 0.1,
            w2=jax.random.normal(k2, (G, Cin, 1, 7), jnp.float32) * 0.1,
            b2=jax.random.normal(k3, (G,), jnp.float32) * 0.1,
            wc=jax.random.normal(k4, (G, G, 3, 3), jnp.float32) * 0.1,
            bc=jax.random.normal(k5, (G,), jnp.float32) * 0.1,
        ))
        Cin += G
    key, ka, kb = jax.random.split(key, 3)
    lff = (jax.random.normal(ka, (G0, Cin, 1, 1), jnp.float32) * 0.1,
           jax.random.normal(kb, (G0,), jnp.float32) * 0.1)
    return layer_params, lff


def rearrange_params(layer_params, lff, G0, G, mxu_dtype=jnp.float32):
    flat = []
    for p in layer_params:
        Cin = p['w1'].shape[1]
        # conv_1 (3G,Cin,3,1), out chan o = 3g+k  ->  [h*Cin+cin, k*G+g]
        w1 = jnp.transpose(p['w1'].reshape(G, 3, Cin, 3),
                           (3, 2, 1, 0)).reshape(3 * Cin, 3 * G)
        b1 = jnp.transpose(p['b1'].reshape(G, 3), (1, 0)).reshape(1, 3 * G)
        # conv_2 (G,Cin,1,7) -> [kw*Cin+cin, g]
        w2 = jnp.transpose(p['w2'].reshape(G, Cin, 7),
                           (2, 1, 0)).reshape(7 * Cin, G)
        b2 = p['b2'].reshape(1, G)
        # conv (Gout,Gin,3,3) -> [(kh*3+kw)*G+gin, gout]
        wc = jnp.transpose(p['wc'], (2, 3, 1, 0)).reshape(9 * G, G)
        bc = p['bc'].reshape(1, G)
        flat += [w1.astype(mxu_dtype), b1.astype(jnp.float32),
                 w2.astype(mxu_dtype), b2.astype(jnp.float32),
                 wc.astype(mxu_dtype), bc.astype(jnp.float32)]
    wl, bl = lff
    Cfinal = wl.shape[1]
    flat += [jnp.transpose(wl.reshape(G0, Cfinal), (1, 0)).astype(mxu_dtype),
             bl.reshape(1, G0).astype(jnp.float32)]
    return flat


def epi_block_pallas(x_nchw, layer_params, lff, *, G0, G, nlayers,
                     mxu_dtype=jnp.float32):
    B, C0, H, W = x_nchw.shape
    assert H == 3 and C0 == G0, "EPI_Block reshape semantics require H == 3"
    x_bhwc = jnp.transpose(x_nchw, (0, 2, 3, 1))             # NCHW -> BHWC
    flat = rearrange_params(layer_params, lff, G0, G, mxu_dtype)

    Cfinal = G0 + nlayers * G
    Cin_max = G0 + (nlayers - 1) * G
    kmax = max(7 * Cin_max, 9 * G, Cfinal)                   # widest im2col K

    kernel = make_kernel(nlayers, G0, G, W, mxu_dtype)
    grid_spec = pltpu.PrefetchScalarGridSpec(
        num_scalar_prefetch=0,
        grid=(B,),                                           # batch-parallel grid
        in_specs=[pl.BlockSpec((1, H, W, G0), lambda b: (b, 0, 0, 0))]
                 + [pl.BlockSpec(p.shape, lambda b: (0, 0)) for p in flat],
        out_specs=pl.BlockSpec((1, H, W, G0), lambda b: (b, 0, 0, 0)),
        scratch_shapes=[
            pltpu.VMEM((1, H, W + 6, Cfinal), jnp.float32),   # padded features
            pltpu.VMEM((1, H + 2, W + 2, G), jnp.float32),    # padded x3
            pltpu.VMEM((H * W, kmax), mxu_dtype),             # im2col staging
        ],
    )
    # TODO(synk): for production-size W, also tile W (multiple of 8, 3-column
    # halo for the 1x7 conv) and set vmem_limit_bytes for v7x's 64 MiB VMEM.
    out = pl.pallas_call(
        kernel,
        out_shape=jax.ShapeDtypeStruct((B, H, W, G0), x_nchw.dtype),
        grid_spec=grid_spec,
        compiler_params=pltpu.CompilerParams(
            dimension_semantics=("parallel",)),
    )(x_bhwc, *flat)
    return jnp.transpose(out, (0, 3, 1, 2))                  # back to NCHW


# ---------------------------------------------------------------------------
# Pure-JAX reference (NCHW, mirrors the PyTorch module) for validation
# ---------------------------------------------------------------------------
def _conv2d_nchw(x, w, b, pad):
    y = jax.lax.conv_general_dilated(x, w, (1, 1), padding=pad,
                                     dimension_numbers=('NCHW', 'OIHW', 'NCHW'))
    return y + b[None, :, None, None]


def epi_block_ref(x, layer_params, lff):
    feat = x
    for p in layer_params:
        x1 = jax.nn.relu(_conv2d_nchw(feat, p['w1'], p['b1'], ((0, 0), (0, 0))))
        x2 = jax.nn.relu(_conv2d_nchw(feat, p['w2'], p['b2'], ((0, 0), (3, 3))))
        B, C, Hh, W = x1.shape
        x1 = x1.reshape(B, C // 3, 3, W)
        x3 = x1 + x2
        out = _conv2d_nchw(x3, p['wc'], p['bc'], ((1, 1), (1, 1)))
        feat = jnp.concatenate([feat, out], axis=1)
    wl, bl = lff
    return _conv2d_nchw(feat, wl, bl, ((0, 0), (0, 0))) + x


# ---------------------------------------------------------------------------
if __name__ == "__main__":
    key = jax.random.PRNGKey(0)
    B, G0, G, nConvLayers, W = 2, 8, 8, 4, 16
    nlayers = nConvLayers // 2

    kx, kp = jax.random.split(key)
    x = jax.random.normal(kx, (B, G0, 3, W), jnp.float32)    # NCHW, H must be 3
    layer_params, lff = init_params(kp, G0, G, nlayers)

    out = epi_block_pallas(x, layer_params, lff, G0=G0, G=G, nlayers=nlayers)
    out = jax.block_until_ready(out)

    ref = epi_block_ref(x, layer_params, lff)
    assert out.shape == ref.shape == (B, G0, 3, W)
    err = float(jnp.max(jnp.abs(out - ref)))
    assert jnp.allclose(out, ref, atol=1e-4, rtol=1e-4), f"max abs err {err}"

    print("KERNEL_OK")
</pallas_src>

<mosaic_0001>
module attributes {stable_mosaic.version = 11 : i64} {
  func.func @kernel(%arg0: i32, %arg1: memref<1x3x16x8xf32, #tpu.memory_space<vmem>>, %arg2: memref<24x24xf32, #tpu.memory_space<vmem>>, %arg3: memref<1x24xf32, #tpu.memory_space<vmem>>, %arg4: memref<56x8xf32, #tpu.memory_space<vmem>>, %arg5: memref<1x8xf32, #tpu.memory_space<vmem>>, %arg6: memref<72x8xf32, #tpu.memory_space<vmem>>, %arg7: memref<1x8xf32, #tpu.memory_space<vmem>>, %arg8: memref<48x24xf32, #tpu.memory_space<vmem>>, %arg9: memref<1x24xf32, #tpu.memory_space<vmem>>, %arg10: memref<112x8xf32, #tpu.memory_space<vmem>>, %arg11: memref<1x8xf32, #tpu.memory_space<vmem>>, %arg12: memref<72x8xf32, #tpu.memory_space<vmem>>, %arg13: memref<1x8xf32, #tpu.memory_space<vmem>>, %arg14: memref<24x8xf32, #tpu.memory_space<vmem>>, %arg15: memref<1x8xf32, #tpu.memory_space<vmem>>, %arg16: memref<1x3x16x8xf32, #tpu.memory_space<vmem>>, %arg17: memref<1x3x22x24xf32, #tpu.memory_space<vmem>>, %arg18: memref<1x5x18x8xf32, #tpu.memory_space<vmem>>, %arg19: memref<48x112xf32, #tpu.memory_space<vmem>>) attributes {dimension_semantics = [#tpu.dimension_semantics<parallel>], iteration_bounds = array<i64: 2>, scalar_prefetch = 0 : i64, scratch_operands = 3 : i64, tpu.core_type = #tpu.core_type<tc>, window_params = [{transform_indices = @transform_0, window_bounds = array<i64: 1, 3, 16, 8>}, {pipeline_mode = #tpu.pipeline_mode<synchronous>, transform_indices = @transform_1, window_bounds = array<i64: 24, 24>}, {pipeline_mode = #tpu.pipeline_mode<synchronous>, transform_indices = @transform_2, window_bounds = array<i64: 1, 24>}, {pipeline_mode = #tpu.pipeline_mode<synchronous>, transform_indices = @transform_3, window_bounds = array<i64: 56, 8>}, {pipeline_mode = #tpu.pipeline_mode<synchronous>, transform_indices = @transform_4, window_bounds = array<i64: 1, 8>}, {pipeline_mode = #tpu.pipeline_mode<synchronous>, transform_indices = @transform_5, window_bounds = array<i64: 72, 8>}, {pipeline_mode = #tpu.pipeline_mode<synchronous>, transform_indices = @transform_6, window_bounds = array<i64: 1, 8>}, {pipeline_mode = #tpu.pipeline_mode<synchronous>, transform_indices = @transform_7, window_bounds = array<i64: 48, 24>}, {pipeline_mode = #tpu.pipeline_mode<synchronous>, transform_indices = @transform_8, window_bounds = array<i64: 1, 24>}, {pipeline_mode = #tpu.pipeline_mode<synchronous>, transform_indices = @transform_9, window_bounds = array<i64: 112, 8>}, {pipeline_mode = #tpu.pipeline_mode<synchronous>, transform_indices = @transform_10, window_bounds = array<i64: 1, 8>}, {pipeline_mode = #tpu.pipeline_mode<synchronous>, transform_indices = @transform_11, window_bounds = array<i64: 72, 8>}, {pipeline_mode = #tpu.pipeline_mode<synchronous>, transform_indices = @transform_12, window_bounds = array<i64: 1, 8>}, {pipeline_mode = #tpu.pipeline_mode<synchronous>, transform_indices = @transform_13, window_bounds = array<i64: 24, 8>}, {pipeline_mode = #tpu.pipeline_mode<synchronous>, transform_indices = @transform_14, window_bounds = array<i64: 1, 8>}, {transform_indices = @transform_15, window_bounds = array<i64: 1, 3, 16, 8>}]} {
    %cst = arith.constant 0.000000e+00 : f32
    %0 = vector.broadcast %cst : f32 to vector<1x3x3x24xf32>
    %c0 = arith.constant 0 : index
    %c0_0 = arith.constant 0 : index
    %c0_1 = arith.constant 0 : index
    %c0_2 = arith.constant 0 : index
    %1 = vector.load %arg17[%c0, %c0_0, %c0_1, %c0_2] : memref<1x3x22x24xf32, #tpu.memory_space<vmem>>, vector<1x3x3x24xf32>
    tpu.vector_store %arg17[%c0, %c0_0, %c0_1, %c0_2], %0 {strides = array<i32>} : memref<1x3x22x24xf32, #tpu.memory_space<vmem>>, vector<1x3x3x24xf32>,
    %cst_3 = arith.constant 0.000000e+00 : f32
    %2 = vector.broadcast %cst_3 : f32 to vector<1x3x3x24xf32>
    %c0_4 = arith.constant 0 : index
    %c0_5 = arith.constant 0 : index
    %c19 = arith.constant 19 : index
    %c0_6 = arith.constant 0 : index
    %3 = vector.load %arg17[%c0_4, %c0_5, %c19, %c0_6] : memref<1x3x22x24xf32, #tpu.memory_space<vmem>>, vector<1x3x3x24xf32>
    tpu.vector_store %arg17[%c0_4, %c0_5, %c19, %c0_6], %2 {strides = array<i32>} : memref<1x3x22x24xf32, #tpu.memory_space<vmem>>, vector<1x3x3x24xf32>,
    %cst_7 = arith.constant 0.000000e+00 : f32
    %4 = vector.broadcast %cst_7 : f32 to vector<1x1x18x8xf32>
    %c0_8 = arith.constant 0 : index
    %c0_9 = arith.constant 0 : index
    %c0_10 = arith.constant 0 : index
    %c0_11 = arith.constant 0 : index
    %5 = vector.load %arg18[%c0_8, %c0_9, %c0_10, %c0_11] : memref<1x5x18x8xf32, #tpu.memory_space<vmem>>, vector<1x1x18x8xf32>
    tpu.vector_store %arg18[%c0_8, %c0_9, %c0_10, %c0_11], %4 {strides = array<i32>} : memref<1x5x18x8xf32, #tpu.memory_space<vmem>>, vector<1x1x18x8xf32>,
    %cst_12 = arith.constant 0.000000e+00 : f32
    %6 = vector.broadcast %cst_12 : f32 to vector<1x1x18x8xf32>
    %c0_13 = arith.constant 0 : index
    %c4 = arith.constant 4 : index
    %c0_14 = arith.constant 0 : index
    %c0_15 = arith.constant 0 : index
    %7 = vector.load %arg18[%c0_13, %c4, %c0_14, %c0_15] : memref<1x5x18x8xf32, #tpu.memory_space<vmem>>, vector<1x1x18x8xf32>
    tpu.vector_store %arg18[%c0_13, %c4, %c0_14, %c0_15], %6 {strides = array<i32>} : memref<1x5x18x8xf32, #tpu.memory_space<vmem>>, vector<1x1x18x8xf32>,
    %cst_16 = arith.constant 0.000000e+00 : f32
    %8 = vector.broadcast %cst_16 : f32 to vector<1x5x1x8xf32>
    %c0_17 = arith.constant 0 : index
    %c0_18 = arith.constant 0 : index
    %c0_19 = arith.constant 0 : index
    %c0_20 = arith.constant 0 : index
    %9 = vector.load %arg18[%c0_17, %c0_18, %c0_19, %c0_20] : memref<1x5x18x8xf32, #tpu.memory_space<vmem>>, vector<1x5x1x8xf32>
    tpu.vector_store %arg18[%c0_17, %c0_18, %c0_19, %c0_20], %8 {strides = array<i32>} : memref<1x5x18x8xf32, #tpu.memory_space<vmem>>, vector<1x5x1x8xf32>,
    %cst_21 = arith.constant 0.000000e+00 : f32
    %10 = vector.broadcast %cst_21 : f32 to vector<1x5x1x8xf32>
    %c0_22 = arith.constant 0 : index
    %c0_23 = arith.constant 0 : index
    %c17 = arith.constant 17 : index
    %c0_24 = arith.constant 0 : index
    %11 = vector.load %arg18[%c0_22, %c0_23, %c17, %c0_24] : memref<1x5x18x8xf32, #tpu.memory_space<vmem>>, vector<1x5x1x8xf32>
    tpu.vector_store %arg18[%c0_22, %c0_23, %c17, %c0_24], %10 {strides = array<i32>} : memref<1x5x18x8xf32, #tpu.memory_space<vmem>>, vector<1x5x1x8xf32>,
    %c0_25 = arith.constant 0 : index
    %c0_26 = arith.constant 0 : index
    %c0_27 = arith.constant 0 : index
    %c0_28 = arith.constant 0 : index
    %12 = vector.load %arg1[%c0_25, %c0_26, %c0_27, %c0_28] : memref<1x3x16x8xf32, #tpu.memory_space<vmem>>, vector<1x3x16x8xf32>
    %c0_29 = arith.constant 0 : index
    %c0_30 = arith.constant 0 : index
    %c3 = arith.constant 3 : index
    %c0_31 = arith.constant 0 : index
    %13 = vector.load %arg17[%c0_29, %c0_30, %c3, %c0_31] : memref<1x3x22x24xf32, #tpu.memory_space<vmem>>, vector<1x3x16x8xf32>
    tpu.vector_store %arg17[%c0_29, %c0_30, %c3, %c0_31], %12 {strides = array<i32>} : memref<1x3x22x24xf32, #tpu.memory_space<vmem>>, vector<1x3x16x8xf32>,
    %c0_32 = arith.constant 0 : index
    %c0_33 = arith.constant 0 : index
    %14 = vector.load %arg2[%c0_32, %c0_33] : memref<24x24xf32, #tpu.memory_space<vmem>>, vector<24x24xf32>
    %c0_34 = arith.constant 0 : index
    %c0_35 = arith.constant 0 : index
    %15 = vector.load %arg3[%c0_34, %c0_35] : memref<1x24xf32, #tpu.memory_space<vmem>>, vector<1x24xf32>
    %c0_36 = arith.constant 0 : index
    %c0_37 = arith.constant 0 : index
    %16 = vector.load %arg4[%c0_36, %c0_37] : memref<56x8xf32, #tpu.memory_space<vmem>>, vector<56x8xf32>
    %c0_38 = arith.constant 0 : index
    %c0_39 = arith.constant 0 : index
    %17 = vector.load %arg5[%c0_38, %c0_39] : memref<1x8xf32, #tpu.memory_space<vmem>>, vector<1x8xf32>
    %c0_40 = arith.constant 0 : index
    %c0_41 = arith.constant 0 : index
    %18 = vector.load %arg6[%c0_40, %c0_41] : memref<72x8xf32, #tpu.memory_space<vmem>>, vector<72x8xf32>
    %c0_42 = arith.constant 0 : index
    %c0_43 = arith.constant 0 : index
    %19 = vector.load %arg7[%c0_42, %c0_43] : memref<1x8xf32, #tpu.memory_space<vmem>>, vector<1x8xf32>
    %c0_44 = arith.constant 0 : index
    %c0_45 = arith.constant 0 : index
    %c3_46 = arith.constant 3 : index
    %c0_47 = arith.constant 0 : index
    %20 = vector.load %arg17[%c0_44, %c0_45, %c3_46, %c0_47] : memref<1x3x22x24xf32, #tpu.memory_space<vmem>>, vector<1x1x16x8xf32>
    %21 = vector.shape_cast %20 : vector<1x1x16x8xf32> to vector<16x8xf32>
    %c0_48 = arith.constant 0 : index
    %c0_49 = arith.constant 0 : index
    %22 = vector.load %arg19[%c0_48, %c0_49] : memref<48x112xf32, #tpu.memory_space<vmem>>, vector<16x8xf32>
    tpu.vector_store %arg19[%c0_48, %c0_49], %21 {strides = array<i32>} : memref<48x112xf32, #tpu.memory_space<vmem>>, vector<16x8xf32>,
    %c0_50 = arith.constant 0 : index
    %c1 = arith.constant 1 : index
    %c3_51 = arith.constant 3 : index
    %c0_52 = arith.constant 0 : index
    %23 = vector.load %arg17[%c0_50, %c1, %c3_51, %c0_52] : memref<1x3x22x24xf32, #tpu.memory_space<vmem>>, vector<1x1x16x8xf32>
    %24 = vector.shape_cast %23 : vector<1x1x16x8xf32> to vector<16x8xf32>
    %c0_53 = arith.constant 0 : index
    %c8 = arith.constant 8 : index
    %25 = vector.load %arg19[%c0_53, %c8] : memref<48x112xf32, #tpu.memory_space<vmem>>, vector<16x8xf32>
    tpu.vector_store %arg19[%c0_53, %c8], %24 {strides = array<i32>} : memref<48x112xf32, #tpu.memory_space<vmem>>, vector<16x8xf32>,
    %c0_54 = arith.constant 0 : index
    %c2 = arith.constant 2 : index
    %c3_55 = arith.constant 3 : index
    %c0_56 = arith.constant 0 : index
    %26 = vector.load %arg17[%c0_54, %c2, %c3_55, %c0_56] : memref<1x3x22x24xf32, #tpu.memory_space<vmem>>, vector<1x1x16x8xf32>
    %27 = vector.shape_cast %26 : vector<1x1x16x8xf32> to vector<16x8xf32>
    %c0_57 = arith.constant 0 : index
    %c16 = arith.constant 16 : index
    %28 = vector.load %arg19[%c0_57, %c16] : memref<48x112xf32, #tpu.memory_space<vmem>>, vector<16x8xf32>
    tpu.vector_store %arg19[%c0_57, %c16], %27 {strides = array<i32>} : memref<48x112xf32, #tpu.memory_space<vmem>>, vector<16x8xf32>,
    %c0_58 = arith.constant 0 : index
    %c0_59 = arith.constant 0 : index
    %29 = vector.load %arg19[%c0_58, %c0_59] : memref<48x112xf32, #tpu.memory_space<vmem>>, vector<16x24xf32>
    %cst_60 = arith.constant dense<0.000000e+00> : vector<16x24xf32>
    %30 = tpu.matmul %29, %14, %cst_60 {dimension_numbers = #tpu.dot_dimension_numbers<[1], [0], [0], [1], [0, 0, 1, 1], [], []>} : vector<16x24xf32>, vector<24x24xf32>, vector<16x24xf32> -> vector<16x24xf32>
    %31 = vector.broadcast %15 : vector<1x24xf32> to vector<16x24xf32>
    %32 = arith.addf %30, %31 : vector<16x24xf32>
    %cst_61 = arith.constant 0.000000e+00 : f32
    %33 = vector.broadcast %cst_61 : f32 to vector<16x24xf32>
    %34 = arith.maximumf %32, %33 : vector<16x24xf32>
    %35 = vector.extract_strided_slice %34 {offsets = [0, 0], sizes = [16, 8], strides = [1, 1]} : vector<16x24xf32> to vector<16x8xf32>
    %36 = vector.shape_cast %35 : vector<16x8xf32> to vector<1x16x8xf32>
    %37 = vector.extract_strided_slice %34 {offsets = [0, 8], sizes = [16, 8], strides = [1, 1]} : vector<16x24xf32> to vector<16x8xf32>
    %38 = vector.shape_cast %37 : vector<16x8xf32> to vector<1x16x8xf32>
    %39 = vector.extract_strided_slice %34 {offsets = [0, 16], sizes = [16, 8], strides = [1, 1]} : vector<16x24xf32> to vector<16x8xf32>
    %40 = vector.shape_cast %39 : vector<16x8xf32> to vector<1x16x8xf32>
    %41 = tpu.concatenate %36, %38, %40 in 0 : vector<1x16x8xf32>, vector<1x16x8xf32>, vector<1x16x8xf32> -> vector<3x16x8xf32>
    %c0_62 = arith.constant 0 : index
    %c0_63 = arith.constant 0 : index
    %c0_64 = arith.constant 0 : index
    %c0_65 = arith.constant 0 : index
    %42 = vector.load %arg17[%c0_62, %c0_63, %c0_64, %c0_65] : memref<1x3x22x24xf32, #tpu.memory_space<vmem>>, vector<1x3x16x8xf32>
    %43 = vector.shape_cast %42 : vector<1x3x16x8xf32> to vector<48x8xf32>
    %c0_66 = arith.constant 0 : index
    %c0_67 = arith.constant 0 : index
    %44 = vector.load %arg19[%c0_66, %c0_67] : memref<48x112xf32, #tpu.memory_space<vmem>>, vector<48x8xf32>
    tpu.vector_store %arg19[%c0_66, %c0_67], %43 {strides = array<i32>} : memref<48x112xf32, #tpu.memory_space<vmem>>, vector<48x8xf32>,
    %c0_68 = arith.constant 0 : index
    %c0_69 = arith.constant 0 : index
    %c1_70 = arith.constant 1 : index
    %c0_71 = arith.constant 0 : index
    %45 = vector.load %arg17[%c0_68, %c0_69, %c1_70, %c0_71] : memref<1x3x22x24xf32, #tpu.memory_space<vmem>>, vector<1x3x16x8xf32>
    %46 = vector.shape_cast %45 : vector<1x3x16x8xf32> to vector<48x8xf32>
    %c0_72 = arith.constant 0 : index
    %c8_73 = arith.constant 8 : index
    %47 = vector.load %arg19[%c0_72, %c8_73] : memref<48x112xf32, #tpu.memory_space<vmem>>, vector<48x8xf32>
    tpu.vector_store %arg19[%c0_72, %c8_73], %46 {strides = array<i32>} : memref<48x112xf32, #tpu.memory_space<vmem>>, vector<48x8xf32>,
    %c0_74 = arith.constant 0 : index
    %c0_75 = arith.constant 0 : index
    %c2_76 = arith.constant 2 : index
    %c0_77 = arith.constant 0 : index
    %48 = vector.load %arg17[%c0_74, %c0_75, %c2_76, %c0_77] : memref<1x3x22x24xf32, #tpu.memory_space<vmem>>, vector<1x3x16x8xf32>
    %49 = vector.shape_cast %48 : vector<1x3x16x8xf32> to vector<48x8xf32>
    %c0_78 = arith.constant 0 : index
    %c16_79 = arith.constant 16 : index
    %50 = vector.load %arg19[%c0_78, %c16_79] : memref<48x112xf32, #tpu.memory_space<vmem>>, vector<48x8xf32>
    tpu.vector_store %arg19[%c0_78, %c16_79], %49 {strides = array<i32>} : memref<48x112xf32, #tpu.memory_space<vmem>>, vector<48x8xf32>,
    %c0_80 = arith.constant 0 : index
    %c0_81 = arith.constant 0 : index
    %c3_82 = arith.constant 3 : index
    %c0_83 = arith.constant 0 : index
    %51 = vector.load %arg17[%c0_80, %c0_81, %c3_82, %c0_83] : memref<1x3x22x24xf32, #tpu.memory_space<vmem>>, vector<1x3x16x8xf32>
    %52 = vector.shape_cast %51 : vector<1x3x16x8xf32> to vector<48x8xf32>
    %c0_84 = arith.constant 0 : index
    %c24 = arith.constant 24 : index
    %53 = vector.load %arg19[%c0_84, %c24] : memref<48x112xf32, #tpu.memory_space<vmem>>, vector<48x8xf32>
    tpu.vector_store %arg19[%c0_84, %c24], %52 {strides = array<i32>} : memref<48x112xf32, #tpu.memory_space<vmem>>, vector<48x8xf32>,
    %c0_85 = arith.constant 0 : index
    %c0_86 = arith.constant 0 : index
    %c4_87 = arith.constant 4 : index
    %c0_88 = arith.constant 0 : index
    %54 = vector.load %arg17[%c0_85, %c0_86, %c4_87, %c0_88] : memref<1x3x22x24xf32, #tpu.memory_space<vmem>>, vector<1x3x16x8xf32>
    %55 = vector.shape_cast %54 : vector<1x3x16x8xf32> to vector<48x8xf32>
    %c0_89 = arith.constant 0 : index
    %c32 = arith.constant 32 : index
    %56 = vector.load %arg19[%c0_89, %c32] : memref<48x112xf32, #tpu.memory_space<vmem>>, vector<48x8xf32>
    tpu.vector_store %arg19[%c0_89, %c32], %55 {strides = array<i32>} : memref<48x112xf32, #tpu.memory_space<vmem>>, vector<48x8xf32>,
    %c0_90 = arith.constant 0 : index
    %c0_91 = arith.constant 0 : index
    %c5 = arith.constant 5 : index
    %c0_92 = arith.constant 0 : index
    %57 = vector.load %arg17[%c0_90, %c0_91, %c5, %c0_92] : memref<1x3x22x24xf32, #tpu.memory_space<vmem>>, vector<1x3x16x8xf32>
    %58 = vector.shape_cast %57 : vector<1x3x16x8xf32> to vector<48x8xf32>
    %c0_93 = arith.constant 0 : index
    %c40 = arith.constant 40 : index
    %59 = vector.load %arg19[%c0_93, %c40] : memref<48x112xf32, #tpu.memory_space<vmem>>, vector<48x8xf32>
    tpu.vector_store %arg19[%c0_93, %c40], %58 {strides = array<i32>} : memref<48x112xf32, #tpu.memory_space<vmem>>, vector<48x8xf32>,
    %c0_94 = arith.constant 0 : index
    %c0_95 = arith.constant 0 : index
    %c6 = arith.constant 6 : index
    %c0_96 = arith.constant 0 : index
    %60 = vector.load %arg17[%c0_94, %c0_95, %c6, %c0_96] : memref<1x3x22x24xf32, #tpu.memory_space<vmem>>, vector<1x3x16x8xf32>
    %61 = vector.shape_cast %60 : vector<1x3x16x8xf32> to vector<48x8xf32>
    %c0_97 = arith.constant 0 : index
    %c48 = arith.constant 48 : index
    %62 = vector.load %arg19[%c0_97, %c48] : memref<48x112xf32, #tpu.memory_space<vmem>>, vector<48x8xf32>
    tpu.vector_store %arg19[%c0_97, %c48], %61 {strides = array<i32>} : memref<48x112xf32, #tpu.memory_space<vmem>>, vector<48x8xf32>,
    %c0_98 = arith.constant 0 : index
    %c0_99 = arith.constant 0 : index
    %63 = vector.load %arg19[%c0_98, %c0_99] : memref<48x112xf32, #tpu.memory_space<vmem>>, vector<48x56xf32>
    %cst_100 = arith.constant dense<0.000000e+00> : vector<48x8xf32>
    %64 = tpu.matmul %63, %16, %cst_100 {dimension_numbers = #tpu.dot_dimension_numbers<[1], [0], [0], [1], [0, 0, 1, 1], [], []>} : vector<48x56xf32>, vector<56x8xf32>, vector<48x8xf32> -> vector<48x8xf32>
    %65 = vector.broadcast %17 : vector<1x8xf32> to vector<48x8xf32>
    %66 = arith.addf %64, %65 : vector<48x8xf32>
    %cst_101 = arith.constant 0.000000e+00 : f32
    %67 = vector.broadcast %cst_101 : f32 to vector<48x8xf32>
    %68 = arith.maximumf %66, %67 : vector<48x8xf32>
    %69 = vector.shape_cast %68 : vector<48x8xf32> to vector<3x16x8xf32>
    %70 = arith.addf %41, %69 : vector<3x16x8xf32>
    %71 = vector.shape_cast %70 : vector<3x16x8xf32> to vector<1x3x16x8xf32>
    %c0_102 = arith.constant 0 : index
    %c1_103 = arith.constant 1 : index
    %c1_104 = arith.constant 1 : index
    %c0_105 = arith.constant 0 : index
    %72 = vector.load %arg18[%c0_102, %c1_103, %c1_104, %c0_105] : memref<1x5x18x8xf32, #tpu.memory_space<vmem>>, vector<1x3x16x8xf32>
    tpu.vector_store %arg18[%c0_102, %c1_103, %c1_104, %c0_105], %71 {strides = array<i32>} : memref<1x5x18x8xf32, #tpu.memory_space<vmem>>, vector<1x3x16x8xf32>,
    %c0_106 = arith.constant 0 : index
    %c0_107 = arith.constant 0 : index
    %c0_108 = arith.constant 0 : index
    %c0_109 = arith.constant 0 : index
    %73 = vector.load %arg18[%c0_106, %c0_107, %c0_108, %c0_109] : memref<1x5x18x8xf32, #tpu.memory_space<vmem>>, vector<1x3x16x8xf32>
    %74 = vector.shape_cast %73 : vector<1x3x16x8xf32> to vector<48x8xf32>
    %c0_110 = arith.constant 0 : index
    %c0_111 = arith.constant 0 : index
    %75 = vector.load %arg19[%c0_110, %c0_111] : memref<48x112xf32, #tpu.memory_space<vmem>>, vector<48x8xf32>
    tpu.vector_store %arg19[%c0_110, %c0_111], %74 {strides = array<i32>} : memref<48x112xf32, #tpu.memory_space<vmem>>, vector<48x8xf32>,
    %c0_112 = arith.constant 0 : index
    %c0_113 = arith.constant 0 : index
    %c1_114 = arith.constant 1 : index
    %c0_115 = arith.constant 0 : index
    %76 = vector.load %arg18[%c0_112, %c0_113, %c1_114, %c0_115] : memref<1x5x18x8xf32, #tpu.memory_space<vmem>>, vector<1x3x16x8xf32>
    %77 = vector.shape_cast %76 : vector<1x3x16x8xf32> to vector<48x8xf32>
    %c0_116 = arith.constant 0 : index
    %c8_117 = arith.constant 8 : index
    %78 = vector.load %arg19[%c0_116, %c8_117] : memref<48x112xf32, #tpu.memory_space<vmem>>, vector<48x8xf32>
    tpu.vector_store %arg19[%c0_116, %c8_117], %77 {strides = array<i32>} : memref<48x112xf32, #tpu.memory_space<vmem>>, vector<48x8xf32>,
    %c0_118 = arith.constant 0 : index
    %c0_119 = arith.constant 0 : index
    %c2_120 = arith.constant 2 : index
    %c0_121 = arith.constant 0 : index
    %79 = vector.load %arg18[%c0_118, %c0_119, %c2_120, %c0_121] : memref<1x5x18x8xf32, #tpu.memory_space<vmem>>, vector<1x3x16x8xf32>
    %80 = vector.shape_cast %79 : vector<1x3x16x8xf32> to vector<48x8xf32>
    %c0_122 = arith.constant 0 : index
    %c16_123 = arith.constant 16 : index
    %81 = vector.load %arg19[%c0_122, %c16_123] : memref<48x112xf32, #tpu.memory_space<vmem>>, vector<48x8xf32>
    tpu.vector_store %arg19[%c0_122, %c16_123], %80 {strides = array<i32>} : memref<48x112xf32, #tpu.memory_space<vmem>>, vector<48x8xf32>,
    %c0_124 = arith.constant 0 : index
    %c1_125 = arith.constant 1 : index
    %c0_126 = arith.constant 0 : index
    %c0_127 = arith.constant 0 : index
    %82 = vector.load %arg18[%c0_124, %c1_125, %c0_126, %c0_127] : memref<1x5x18x8xf32, #tpu.memory_space<vmem>>, vector<1x3x16x8xf32>
    %83 = vector.shape_cast %82 : vector<1x3x16x8xf32> to vector<48x8xf32>
    %c0_128 = arith.constant 0 : index
    %c24_129 = arith.constant 24 : index
    %84 = vector.load %arg19[%c0_128, %c24_129] : memref<48x112xf32, #tpu.memory_space<vmem>>, vector<48x8xf32>
    tpu.vector_store %arg19[%c0_128, %c24_129], %83 {strides = array<i32>} : memref<48x112xf32, #tpu.memory_space<vmem>>, vector<48x8xf32>,
    %c0_130 = arith.constant 0 : index
    %c1_131 = arith.constant 1 : index
    %c1_132 = arith.constant 1 : index
    %c0_133 = arith.constant 0 : index
    %85 = vector.load %arg18[%c0_130, %c1_131, %c1_132, %c0_133] : memref<1x5x18x8xf32, #tpu.memory_space<vmem>>, vector<1x3x16x8xf32>
    %86 = vector.shape_cast %85 : vector<1x3x16x8xf32> to vector<48x8xf32>
    %c0_134 = arith.constant 0 : index
    %c32_135 = arith.constant 32 : index
    %87 = vector.load %arg19[%c0_134, %c32_135] : memref<48x112xf32, #tpu.memory_space<vmem>>, vector<48x8xf32>
    tpu.vector_store %arg19[%c0_134, %c32_135], %86 {strides = array<i32>} : memref<48x112xf32, #tpu.memory_space<vmem>>, vector<48x8xf32>,
    %c0_136 = arith.constant 0 : index
    %c1_137 = arith.constant 1 : index
    %c2_138 = arith.constant 2 : index
    %c0_139 = arith.constant 0 : index
    %88 = vector.load %arg18[%c0_136, %c1_137, %c2_138, %c0_139] : memref<1x5x18x8xf32, #tpu.memory_space<vmem>>, vector<1x3x16x8xf32>
    %89 = vector.shape_cast %88 : vector<1x3x16x8xf32> to vector<48x8xf32>
    %c0_140 = arith.constant 0 : index
    %c40_141 = arith.constant 40 : index
    %90 = vector.load %arg19[%c0_140, %c40_141] : memref<48x112xf32, #tpu.memory_space<vmem>>, vector<48x8xf32>
    tpu.vector_store %arg19[%c0_140, %c40_141], %89 {strides = array<i32>} : memref<48x112xf32, #tpu.memory_space<vmem>>, vector<48x8xf32>,
    %c0_142 = arith.constant 0 : index
    %c2_143 = arith.constant 2 : index
    %c0_144 = arith.constant 0 : index
    %c0_145 = arith.constant 0 : index
    %91 = vector.load %arg18[%c0_142, %c2_143, %c0_144, %c0_145] : memref<1x5x18x8xf32, #tpu.memory_space<vmem>>, vector<1x3x16x8xf32>
    %92 = vector.shape_cast %91 : vector<1x3x16x8xf32> to vector<48x8xf32>
    %c0_146 = arith.constant 0 : index
    %c48_147 = arith.constant 48 : index
    %93 = vector.load %arg19[%c0_146, %c48_147] : memref<48x112xf32, #tpu.memory_space<vmem>>, vector<48x8xf32>
    tpu.vector_store %arg19[%c0_146, %c48_147], %92 {strides = array<i32>} : memref<48x112xf32, #tpu.memory_space<vmem>>, vector<48x8xf32>,
    %c0_148 = arith.constant 0 : index
    %c2_149 = arith.constant 2 : index
    %c1_150 = arith.constant 1 : index
    %c0_151 = arith.constant 0 : index
    %94 = vector.load %arg18[%c0_148, %c2_149, %c1_150, %c0_151] : memref<1x5x18x8xf32, #tpu.memory_space<vmem>>, vector<1x3x16x8xf32>
    %95 = vector.shape_cast %94 : vector<1x3x16x8xf32> to vector<48x8xf32>
    %c0_152 = arith.constant 0 : index
    %c56 = arith.constant 56 : index
    %96 = vector.load %arg19[%c0_152, %c56] : memref<48x112xf32, #tpu.memory_space<vmem>>, vector<48x8xf32>
    tpu.vector_store %arg19[%c0_152, %c56], %95 {strides = array<i32>} : memref<48x112xf32, #tpu.memory_space<vmem>>, vector<48x8xf32>,
    %c0_153 = arith.constant 0 : index
    %c2_154 = arith.constant 2 : index
    %c2_155 = arith.constant 2 : index
    %c0_156 = arith.constant 0 : index
    %97 = vector.load %arg18[%c0_153, %c2_154, %c2_155, %c0_156] : memref<1x5x18x8xf32, #tpu.memory_space<vmem>>, vector<1x3x16x8xf32>
    %98 = vector.shape_cast %97 : vector<1x3x16x8xf32> to vector<48x8xf32>
    %c0_157 = arith.constant 0 : index
    %c64 = arith.constant 64 : index
    %99 = vector.load %arg19[%c0_157, %c64] : memref<48x112xf32, #tpu.memory_space<vmem>>, vector<48x8xf32>
    tpu.vector_store %arg19[%c0_157, %c64], %98 {strides = array<i32>} : memref<48x112xf32, #tpu.memory_space<vmem>>, vector<48x8xf32>,
    %c0_158 = arith.constant 0 : index
    %c0_159 = arith.constant 0 : index
    %100 = vector.load %arg19[%c0_158, %c0_159] : memref<48x112xf32, #tpu.memory_space<vmem>>, vector<48x72xf32>
    %cst_160 = arith.constant dense<0.000000e+00> : vector<48x8xf32>
    %101 = tpu.matmul %100, %18, %cst_160 {dimension_numbers = #tpu.dot_dimension_numbers<[1], [0], [0], [1], [0, 0, 1, 1], [], []>} : vector<48x72xf32>, vector<72x8xf32>, vector<48x8xf32> -> vector<48x8xf32>
    %102 = vector.broadcast %19 : vector<1x8xf32> to vector<48x8xf32>
    %103 = arith.addf %101, %102 : vector<48x8xf32>
    %104 = vector.shape_cast %103 : vector<48x8xf32> to vector<1x3x16x8xf32>
    %c0_161 = arith.constant 0 : index
    %c0_162 = arith.constant 0 : index
    %c3_163 = arith.constant 3 : index
    %c8_164 = arith.constant 8 : index
    %105 = vector.load %arg17[%c0_161, %c0_162, %c3_163, %c8_164] : memref<1x3x22x24xf32, #tpu.memory_space<vmem>>, vector<1x3x16x8xf32>
    tpu.vector_store %arg17[%c0_161, %c0_162, %c3_163, %c8_164], %104 {strides = array<i32>} : memref<1x3x22x24xf32, #tpu.memory_space<vmem>>, vector<1x3x16x8xf32>,
    %c0_165 = arith.constant 0 : index
    %c0_166 = arith.constant 0 : index
    %106 = vector.load %arg8[%c0_165, %c0_166] : memref<48x24xf32, #tpu.memory_space<vmem>>, vector<48x24xf32>
    %c0_167 = arith.constant 0 : index
    %c0_168 = arith.constant 0 : index
    %107 = vector.load %arg9[%c0_167, %c0_168] : memref<1x24xf32, #tpu.memory_space<vmem>>, vector<1x24xf32>
    %c0_169 = arith.constant 0 : index
    %c0_170 = arith.constant 0 : index
    %108 = vector.load %arg10[%c0_169, %c0_170] : memref<112x8xf32, #tpu.memory_space<vmem>>, vector<112x8xf32>
    %c0_171 = arith.constant 0 : index
    %c0_172 = arith.constant 0 : index
    %109 = vector.load %arg11[%c0_171, %c0_172] : memref<1x8xf32, #tpu.memory_space<vmem>>, vector<1x8xf32>
    %c0_173 = arith.constant 0 : index
    %c0_174 = arith.constant 0 : index
    %110 = vector.load %arg12[%c0_173, %c0_174] : memref<72x8xf32, #tpu.memory_space<vmem>>, vector<72x8xf32>
    %c0_175 = arith.constant 0 : index
    %c0_176 = arith.constant 0 : index
    %111 = vector.load %arg13[%c0_175, %c0_176] : memref<1x8xf32, #tpu.memory_space<vmem>>, vector<1x8xf32>
    %c0_177 = arith.constant 0 : index
    %c0_178 = arith.constant 0 : index
    %c3_179 = arith.constant 3 : index
    %c0_180 = arith.constant 0 : index
    %112 = vector.load %arg17[%c0_177, %c0_178, %c3_179, %c0_180] : memref<1x3x22x24xf32, #tpu.memory_space<vmem>>, vector<1x1x16x16xf32>
    %113 = vector.shape_cast %112 : vector<1x1x16x16xf32> to vector<16x16xf32>
    %c0_181 = arith.constant 0 : index
    %c0_182 = arith.constant 0 : index
    %114 = vector.load %arg19[%c0_181, %c0_182] : memref<48x112xf32, #tpu.memory_space<vmem>>, vector<16x16xf32>
    tpu.vector_store %arg19[%c0_181, %c0_182], %113 {strides = array<i32>} : memref<48x112xf32, #tpu.memory_space<vmem>>, vector<16x16xf32>,
    %c0_183 = arith.constant 0 : index
    %c1_184 = arith.constant 1 : index
    %c3_185 = arith.constant 3 : index
    %c0_186 = arith.constant 0 : index
    %115 = vector.load %arg17[%c0_183, %c1_184, %c3_185, %c0_186] : memref<1x3x22x24xf32, #tpu.memory_space<vmem>>, vector<1x1x16x16xf32>
    %116 = vector.shape_cast %115 : vector<1x1x16x16xf32> to vector<16x16xf32>
    %c0_187 = arith.constant 0 : index
    %c16_188 = arith.constant 16 : index
    %117 = vector.load %arg19[%c0_187, %c16_188] : memref<48x112xf32, #tpu.memory_space<vmem>>, vector<16x16xf32>
    tpu.vector_store %arg19[%c0_187, %c16_188], %116 {strides = array<i32>} : memref<48x112xf32, #tpu.memory_space<vmem>>, vector<16x16xf32>,
    %c0_189 = arith.constant 0 : index
    %c2_190 = arith.constant 2 : index
    %c3_191 = arith.constant 3 : index
    %c0_192 = arith.constant 0 : index
    %118 = vector.load %arg17[%c0_189, %c2_190, %c3_191, %c0_192] : memref<1x3x22x24xf32, #tpu.memory_space<vmem>>, vector<1x1x16x16xf32>
    %119 = vector.shape_cast %118 : vector<1x1x16x16xf32> to vector<16x16xf32>
    %c0_193 = arith.constant 0 : index
    %c32_194 = arith.constant 32 : index
    %120 = vector.load %arg19[%c0_193, %c32_194] : memref<48x112xf32, #tpu.memory_space<vmem>>, vector<16x16xf32>
    tpu.vector_store %arg19[%c0_193, %c32_194], %119 {strides = array<i32>} : memref<48x112xf32, #tpu.memory_space<vmem>>, vector<16x16xf32>,
    %c0_195 = arith.constant 0 : index
    %c0_196 = arith.constant 0 : index
    %121 = vector.load %arg19[%c0_195, %c0_196] : memref<48x112xf32, #tpu.memory_space<vmem>>, vector<16x48xf32>
    %cst_197 = arith.constant dense<0.000000e+00> : vector<16x24xf32>
    %122 = tpu.matmul %121, %106, %cst_197 {dimension_numbers = #tpu.dot_dimension_numbers<[1], [0], [0], [1], [0, 0, 1, 1], [], []>} : vector<16x48xf32>, vector<48x24xf32>, vector<16x24xf32> -> vector<16x24xf32>
    %123 = vector.broadcast %107 : vector<1x24xf32> to vector<16x24xf32>
    %124 = arith.addf %122, %123 : vector<16x24xf32>
    %cst_198 = arith.constant 0.000000e+00 : f32
    %125 = vector.broadcast %cst_198 : f32 to vector<16x24xf32>
    %126 = arith.maximumf %124, %125 : vector<16x24xf32>
    %127 = vector.extract_strided_slice %126 {offsets = [0, 0], sizes = [16, 8], strides = [1, 1]} : vector<16x24xf32> to vector<16x8xf32>
    %128 = vector.shape_cast %127 : vector<16x8xf32> to vector<1x16x8xf32>
    %129 = vector.extract_strided_slice %126 {offsets = [0, 8], sizes = [16, 8], strides = [1, 1]} : vector<16x24xf32> to vector<16x8xf32>
    %130 = vector.shape_cast %129 : vector<16x8xf32> to vector<1x16x8xf32>
    %131 = vector.extract_strided_slice %126 {offsets = [0, 16], sizes = [16, 8], strides = [1, 1]} : vector<16x24xf32> to vector<16x8xf32>
    %132 = vector.shape_cast %131 : vector<16x8xf32> to vector<1x16x8xf32>
    %133 = tpu.concatenate %128, %130, %132 in 0 : vector<1x16x8xf32>, vector<1x16x8xf32>, vector<1x16x8xf32> -> vector<3x16x8xf32>
    %c0_199 = arith.constant 0 : index
    %c0_200 = arith.constant 0 : index
    %c0_201 = arith.constant 0 : index
    %c0_202 = arith.constant 0 : index
    %134 = vector.load %arg17[%c0_199, %c0_200, %c0_201, %c0_202] : memref<1x3x22x24xf32, #tpu.memory_space<vmem>>, vector<1x3x16x16xf32>
    %135 = vector.shape_cast %134 : vector<1x3x16x16xf32> to vector<48x16xf32>
    %c0_203 = arith.constant 0 : index
    %c0_204 = arith.constant 0 : index
    %136 = vector.load %arg19[%c0_203, %c0_204] : memref<48x112xf32, #tpu.memory_space<vmem>>, vector<48x16xf32>
    tpu.vector_store %arg19[%c0_203, %c0_204], %135 {strides = array<i32>} : memref<48x112xf32, #tpu.memory_space<vmem>>, vector<48x16xf32>,
    %c0_205 = arith.constant 0 : index
    %c0_206 = arith.constant 0 : index
    %c1_207 = arith.constant 1 : index
    %c0_208 = arith.constant 0 : index
    %137 = vector.load %arg17[%c0_205, %c0_206, %c1_207, %c0_208] : memref<1x3x22x24xf32, #tpu.memory_space<vmem>>, vector<1x3x16x16xf32>
    %138 = vector.shape_cast %137 : vector<1x3x16x16xf32> to vector<48x16xf32>
    %c0_209 = arith.constant 0 : index
    %c16_210 = arith.constant 16 : index
    %139 = vector.load %arg19[%c0_209, %c16_210] : memref<48x112xf32, #tpu.memory_space<vmem>>, vector<48x16xf32>
    tpu.vector_store %arg19[%c0_209, %c16_210], %138 {strides = array<i32>} : memref<48x112xf32, #tpu.memory_space<vmem>>, vector<48x16xf32>,
    %c0_211 = arith.constant 0 : index
    %c0_212 = arith.constant 0 : index
    %c2_213 = arith.constant 2 : index
    %c0_214 = arith.constant 0 : index
    %140 = vector.load %arg17[%c0_211, %c0_212, %c2_213, %c0_214] : memref<1x3x22x24xf32, #tpu.memory_space<vmem>>, vector<1x3x16x16xf32>
    %141 = vector.shape_cast %140 : vector<1x3x16x16xf32> to vector<48x16xf32>
    %c0_215 = arith.constant 0 : index
    %c32_216 = arith.constant 32 : index
    %142 = vector.load %arg19[%c0_215, %c32_216] : memref<48x112xf32, #tpu.memory_space<vmem>>, vector<48x16xf32>
    tpu.vector_store %arg19[%c0_215, %c32_216], %141 {strides = array<i32>} : memref<48x112xf32, #tpu.memory_space<vmem>>, vector<48x16xf32>,
    %c0_217 = arith.constant 0 : index
    %c0_218 = arith.constant 0 : index
    %c3_219 = arith.constant 3 : index
    %c0_220 = arith.constant 0 : index
    %143 = vector.load %arg17[%c0_217, %c0_218, %c3_219, %c0_220] : memref<1x3x22x24xf32, #tpu.memory_space<vmem>>, vector<1x3x16x16xf32>
    %144 = vector.shape_cast %143 : vector<1x3x16x16xf32> to vector<48x16xf32>
    %c0_221 = arith.constant 0 : index
    %c48_222 = arith.constant 48 : index
    %145 = vector.load %arg19[%c0_221, %c48_222] : memref<48x112xf32, #tpu.memory_space<vmem>>, vector<48x16xf32>
    tpu.vector_store %arg19[%c0_221, %c48_222], %144 {strides = array<i32>} : memref<48x112xf32, #tpu.memory_space<vmem>>, vector<48x16xf32>,
    %c0_223 = arith.constant 0 : index
    %c0_224 = arith.constant 0 : index
    %c4_225 = arith.constant 4 : index
    %c0_226 = arith.constant 0 : index
    %146 = vector.load %arg17[%c0_223, %c0_224, %c4_225, %c0_226] : memref<1x3x22x24xf32, #tpu.memory_space<vmem>>, vector<1x3x16x16xf32>
    %147 = vector.shape_cast %146 : vector<1x3x16x16xf32> to vector<48x16xf32>
    %c0_227 = arith.constant 0 : index
    %c64_228 = arith.constant 64 : index
    %148 = vector.load %arg19[%c0_227, %c64_228] : memref<48x112xf32, #tpu.memory_space<vmem>>, vector<48x16xf32>
    tpu.vector_store %arg19[%c0_227, %c64_228], %147 {strides = array<i32>} : memref<48x112xf32, #tpu.memory_space<vmem>>, vector<48x16xf32>,
    %c0_229 = arith.constant 0 : index
    %c0_230 = arith.constant 0 : index
    %c5_231 = arith.constant 5 : index
    %c0_232 = arith.constant 0 : index
    %149 = vector.load %arg17[%c0_229, %c0_230, %c5_231, %c0_232] : memref<1x3x22x24xf32, #tpu.memory_space<vmem>>, vector<1x3x16x16xf32>
    %150 = vector.shape_cast %149 : vector<1x3x16x16xf32> to vector<48x16xf32>
    %c0_233 = arith.constant 0 : index
    %c80 = arith.constant 80 : index
    %151 = vector.load %arg19[%c0_233, %c80] : memref<48x112xf32, #tpu.memory_space<vmem>>, vector<48x16xf32>
    tpu.vector_store %arg19[%c0_233, %c80], %150 {strides = array<i32>} : memref<48x112xf32, #tpu.memory_space<vmem>>, vector<48x16xf32>,
    %c0_234 = arith.constant 0 : index
    %c0_235 = arith.constant 0 : index
    %c6_236 = arith.constant 6 : index
    %c0_237 = arith.constant 0 : index
    %152 = vector.load %arg17[%c0_234, %c0_235, %c6_236, %c0_237] : memref<1x3x22x24xf32, #tpu.memory_space<vmem>>, vector<1x3x16x16xf32>
    %153 = vector.shape_cast %152 : vector<1x3x16x16xf32> to vector<48x16xf32>
    %c0_238 = arith.constant 0 : index
    %c96 = arith.constant 96 : index
    %154 = vector.load %arg19[%c0_238, %c96] : memref<48x112xf32, #tpu.memory_space<vmem>>, vector<48x16xf32>
    tpu.vector_store %arg19[%c0_238, %c96], %153 {strides = array<i32>} : memref<48x112xf32, #tpu.memory_space<vmem>>, vector<48x16xf32>,
    %c0_239 = arith.constant 0 : index
    %c0_240 = arith.constant 0 : index
    %155 = vector.load %arg19[%c0_239, %c0_240] : memref<48x112xf32, #tpu.memory_space<vmem>>, vector<48x112xf32>
    %cst_241 = arith.constant dense<0.000000e+00> : vector<48x8xf32>
    %156 = tpu.matmul %155, %108, %cst_241 {dimension_numbers = #tpu.dot_dimension_numbers<[1], [0], [0], [1], [0, 0, 1, 1], [], []>} : vector<48x112xf32>, vector<112x8xf32>, vector<48x8xf32> -> vector<48x8xf32>
    %157 = vector.broadcast %109 : vector<1x8xf32> to vector<48x8xf32>
    %158 = arith.addf %156, %157 : vector<48x8xf32>
    %cst_242 = arith.constant 0.000000e+00 : f32
    %159 = vector.broadcast %cst_242 : f32 to vector<48x8xf32>
    %160 = arith.maximumf %158, %159 : vector<48x8xf32>
    %161 = vector.shape_cast %160 : vector<48x8xf32> to vector<3x16x8xf32>
    %162 = arith.addf %133, %161 : vector<3x16x8xf32>
    %163 = vector.shape_cast %162 : vector<3x16x8xf32> to vector<1x3x16x8xf32>
    %c0_243 = arith.constant 0 : index
    %c1_244 = arith.constant 1 : index
    %c1_245 = arith.constant 1 : index
    %c0_246 = arith.constant 0 : index
    %164 = vector.load %arg18[%c0_243, %c1_244, %c1_245, %c0_246] : memref<1x5x18x8xf32, #tpu.memory_space<vmem>>, vector<1x3x16x8xf32>
    tpu.vector_store %arg18[%c0_243, %c1_244, %c1_245, %c0_246], %163 {strides = array<i32>} : memref<1x5x18x8xf32, #tpu.memory_space<vmem>>, vector<1x3x16x8xf32>,
    %c0_247 = arith.constant 0 : index
    %c0_248 = arith.constant 0 : index
    %c0_249 = arith.constant 0 : index
    %c0_250 = arith.constant 0 : index
    %165 = vector.load %arg18[%c0_247, %c0_248, %c0_249, %c0_250] : memref<1x5x18x8xf32, #tpu.memory_space<vmem>>, vector<1x3x16x8xf32>
    %166 = vector.shape_cast %165 : vector<1x3x16x8xf32> to vector<48x8xf32>
    %c0_251 = arith.constant 0 : index
    %c0_252 = arith.constant 0 : index
    %167 = vector.load %arg19[%c0_251, %c0_252] : memref<48x112xf32, #tpu.memory_space<vmem>>, vector<48x8xf32>
    tpu.vector_store %arg19[%c0_251, %c0_252], %166 {strides = array<i32>} : memref<48x112xf32, #tpu.memory_space<vmem>>, vector<48x8xf32>,
    %c0_253 = arith.constant 0 : index
    %c0_254 = arith.constant 0 : index
    %c1_255 = arith.constant 1 : index
    %c0_256 = arith.constant 0 : index
    %168 = vector.load %arg18[%c0_253, %c0_254, %c1_255, %c0_256] : memref<1x5x18x8xf32, #tpu.memory_space<vmem>>, vector<1x3x16x8xf32>
    %169 = vector.shape_cast %168 : vector<1x3x16x8xf32> to vector<48x8xf32>
    %c0_257 = arith.constant 0 : index
    %c8_258 = arith.constant 8 : index
    %170 = vector.load %arg19[%c0_257, %c8_258] : memref<48x112xf32, #tpu.memory_space<vmem>>, vector<48x8xf32>
    tpu.vector_store %arg19[%c0_257, %c8_258], %169 {strides = array<i32>} : memref<48x112xf32, #tpu.memory_space<vmem>>, vector<48x8xf32>,
    %c0_259 = arith.constant 0 : index
    %c0_260 = arith.constant 0 : index
    %c2_261 = arith.constant 2 : index
    %c0_262 = arith.constant 0 : index
    %171 = vector.load %arg18[%c0_259, %c0_260, %c2_261, %c0_262] : memref<1x5x18x8xf32, #tpu.memory_space<vmem>>, vector<1x3x16x8xf32>
    %172 = vector.shape_cast %171 : vector<1x3x16x8xf32> to vector<48x8xf32>
    %c0_263 = arith.constant 0 : index
    %c16_264 = arith.constant 16 : index
    %173 = vector.load %arg19[%c0_263, %c16_264] : memref<48x112xf32, #tpu.memory_space<vmem>>, vector<48x8xf32>
    tpu.vector_store %arg19[%c0_263, %c16_264], %172 {strides = array<i32>} : memref<48x112xf32, #tpu.memory_space<vmem>>, vector<48x8xf32>,
    %c0_265 = arith.constant 0 : index
    %c1_266 = arith.constant 1 : index
    %c0_267 = arith.constant 0 : index
    %c0_268 = arith.constant 0 : index
    %174 = vector.load %arg18[%c0_265, %c1_266, %c0_267, %c0_268] : memref<1x5x18x8xf32, #tpu.memory_space<vmem>>, vector<1x3x16x8xf32>
    %175 = vector.shape_cast %174 : vector<1x3x16x8xf32> to vector<48x8xf32>
    %c0_269 = arith.constant 0 : index
    %c24_270 = arith.constant 24 : index
    %176 = vector.load %arg19[%c0_269, %c24_270] : memref<48x112xf32, #tpu.memory_space<vmem>>, vector<48x8xf32>
    tpu.vector_store %arg19[%c0_269, %c24_270], %175 {strides = array<i32>} : memref<48x112xf32, #tpu.memory_space<vmem>>, vector<48x8xf32>,
    %c0_271 = arith.constant 0 : index
    %c1_272 = arith.constant 1 : index
    %c1_273 = arith.constant 1 : index
    %c0_274 = arith.constant 0 : index
    %177 = vector.load %arg18[%c0_271, %c1_272, %c1_273, %c0_274] : memref<1x5x18x8xf32, #tpu.memory_space<vmem>>, vector<1x3x16x8xf32>
    %178 = vector.shape_cast %177 : vector<1x3x16x8xf32> to vector<48x8xf32>
    %c0_275 = arith.constant 0 : index
    %c32_276 = arith.constant 32 : index
    %179 = vector.load %arg19[%c0_275, %c32_276] : memref<48x112xf32, #tpu.memory_space<vmem>>, vector<48x8xf32>
    tpu.vector_store %arg19[%c0_275, %c32_276], %178 {strides = array<i32>} : memref<48x112xf32, #tpu.memory_space<vmem>>, vector<48x8xf32>,
    %c0_277 = arith.constant 0 : index
    %c1_278 = arith.constant 1 : index
    %c2_279 = arith.constant 2 : index
    %c0_280 = arith.constant 0 : index
    %180 = vector.load %arg18[%c0_277, %c1_278, %c2_279, %c0_280] : memref<1x5x18x8xf32, #tpu.memory_space<vmem>>, vector<1x3x16x8xf32>
    %181 = vector.shape_cast %180 : vector<1x3x16x8xf32> to vector<48x8xf32>
    %c0_281 = arith.constant 0 : index
    %c40_282 = arith.constant 40 : index
    %182 = vector.load %arg19[%c0_281, %c40_282] : memref<48x112xf32, #tpu.memory_space<vmem>>, vector<48x8xf32>
    tpu.vector_store %arg19[%c0_281, %c40_282], %181 {strides = array<i32>} : memref<48x112xf32, #tpu.memory_space<vmem>>, vector<48x8xf32>,
    %c0_283 = arith.constant 0 : index
    %c2_284 = arith.constant 2 : index
    %c0_285 = arith.constant 0 : index
    %c0_286 = arith.constant 0 : index
    %183 = vector.load %arg18[%c0_283, %c2_284, %c0_285, %c0_286] : memref<1x5x18x8xf32, #tpu.memory_space<vmem>>, vector<1x3x16x8xf32>
    %184 = vector.shape_cast %183 : vector<1x3x16x8xf32> to vector<48x8xf32>
    %c0_287 = arith.constant 0 : index
    %c48_288 = arith.constant 48 : index
    %185 = vector.load %arg19[%c0_287, %c48_288] : memref<48x112xf32, #tpu.memory_space<vmem>>, vector<48x8xf32>
    tpu.vector_store %arg19[%c0_287, %c48_288], %184 {strides = array<i32>} : memref<48x112xf32, #tpu.memory_space<vmem>>, vector<48x8xf32>,
    %c0_289 = arith.constant 0 : index
    %c2_290 = arith.constant 2 : index
    %c1_291 = arith.constant 1 : index
    %c0_292 = arith.constant 0 : index
    %186 = vector.load %arg18[%c0_289, %c2_290, %c1_291, %c0_292] : memref<1x5x18x8xf32, #tpu.memory_space<vmem>>, vector<1x3x16x8xf32>
    %187 = vector.shape_cast %186 : vector<1x3x16x8xf32> to vector<48x8xf32>
    %c0_293 = arith.constant 0 : index
    %c56_294 = arith.constant 56 : index
    %188 = vector.load %arg19[%c0_293, %c56_294] : memref<48x112xf32, #tpu.memory_space<vmem>>, vector<48x8xf32>
    tpu.vector_store %arg19[%c0_293, %c56_294], %187 {strides = array<i32>} : memref<48x112xf32, #tpu.memory_space<vmem>>, vector<48x8xf32>,
    %c0_295 = arith.constant 0 : index
    %c2_296 = arith.constant 2 : index
    %c2_297 = arith.constant 2 : index
    %c0_298 = arith.constant 0 : index
    %189 = vector.load %arg18[%c0_295, %c2_296, %c2_297, %c0_298] : memref<1x5x18x8xf32, #tpu.memory_space<vmem>>, vector<1x3x16x8xf32>
    %190 = vector.shape_cast %189 : vector<1x3x16x8xf32> to vector<48x8xf32>
    %c0_299 = arith.constant 0 : index
    %c64_300 = arith.constant 64 : index
    %191 = vector.load %arg19[%c0_299, %c64_300] : memref<48x112xf32, #tpu.memory_space<vmem>>, vector<48x8xf32>
    tpu.vector_store %arg19[%c0_299, %c64_300], %190 {strides = array<i32>} : memref<48x112xf32, #tpu.memory_space<vmem>>, vector<48x8xf32>,
    %c0_301 = arith.constant 0 : index
    %c0_302 = arith.constant 0 : index
    %192 = vector.load %arg19[%c0_301, %c0_302] : memref<48x112xf32, #tpu.memory_space<vmem>>, vector<48x72xf32>
    %cst_303 = arith.constant dense<0.000000e+00> : vector<48x8xf32>
    %193 = tpu.matmul %192, %110, %cst_303 {dimension_numbers = #tpu.dot_dimension_numbers<[1], [0], [0], [1], [0, 0, 1, 1], [], []>} : vector<48x72xf32>, vector<72x8xf32>, vector<48x8xf32> -> vector<48x8xf32>
    %194 = vector.broadcast %111 : vector<1x8xf32> to vector<48x8xf32>
    %195 = arith.addf %193, %194 : vector<48x8xf32>
    %196 = vector.shape_cast %195 : vector<48x8xf32> to vector<1x3x16x8xf32>
    %c0_304 = arith.constant 0 : index
    %c0_305 = arith.constant 0 : index
    %c3_306 = arith.constant 3 : index
    %c16_307 = arith.constant 16 : index
    %197 = vector.load %arg17[%c0_304, %c0_305, %c3_306, %c16_307] : memref<1x3x22x24xf32, #tpu.memory_space<vmem>>, vector<1x3x16x8xf32>
    tpu.vector_store %arg17[%c0_304, %c0_305, %c3_306, %c16_307], %196 {strides = array<i32>} : memref<1x3x22x24xf32, #tpu.memory_space<vmem>>, vector<1x3x16x8xf32>,
    %c0_308 = arith.constant 0 : index
    %c0_309 = arith.constant 0 : index
    %198 = vector.load %arg14[%c0_308, %c0_309] : memref<24x8xf32, #tpu.memory_space<vmem>>, vector<24x8xf32>
    %c0_310 = arith.constant 0 : index
    %c0_311 = arith.constant 0 : index
    %199 = vector.load %arg15[%c0_310, %c0_311] : memref<1x8xf32, #tpu.memory_space<vmem>>, vector<1x8xf32>
    %c0_312 = arith.constant 0 : index
    %c0_313 = arith.constant 0 : index
    %c3_314 = arith.constant 3 : index
    %c0_315 = arith.constant 0 : index
    %200 = vector.load %arg17[%c0_312, %c0_313, %c3_314, %c0_315] : memref<1x3x22x24xf32, #tpu.memory_space<vmem>>, vector<1x3x16x24xf32>
    %201 = vector.shape_cast %200 : vector<1x3x16x24xf32> to vector<48x24xf32>
    %cst_316 = arith.constant dense<0.000000e+00> : vector<48x8xf32>
    %202 = tpu.matmul %201, %198, %cst_316 {dimension_numbers = #tpu.dot_dimension_numbers<[1], [0], [0], [1], [0, 0, 1, 1], [], []>} : vector<48x24xf32>, vector<24x8xf32>, vector<48x8xf32> -> vector<48x8xf32>
    %203 = vector.broadcast %199 : vector<1x8xf32> to vector<48x8xf32>
    %204 = arith.addf %202, %203 : vector<48x8xf32>
    %205 = vector.shape_cast %204 : vector<48x8xf32> to vector<1x3x16x8xf32>
    %c0_317 = arith.constant 0 : index
    %c0_318 = arith.constant 0 : index
    %c0_319 = arith.constant 0 : index
    %c0_320 = arith.constant 0 : index
    %206 = vector.load %arg1[%c0_317, %c0_318, %c0_319, %c0_320] : memref<1x3x16x8xf32, #tpu.memory_space<vmem>>, vector<1x3x16x8xf32>
    %207 = arith.addf %205, %206 : vector<1x3x16x8xf32>
    %c0_321 = arith.constant 0 : index
    %c0_322 = arith.constant 0 : index
    %c0_323 = arith.constant 0 : index
    %c0_324 = arith.constant 0 : index
    %208 = vector.load %arg16[%c0_321, %c0_322, %c0_323, %c0_324] : memref<1x3x16x8xf32, #tpu.memory_space<vmem>>, vector<1x3x16x8xf32>
    tpu.vector_store %arg16[%c0_321, %c0_322, %c0_323, %c0_324], %207 {strides = array<i32>} : memref<1x3x16x8xf32, #tpu.memory_space<vmem>>, vector<1x3x16x8xf32>,
    return
  }
  func.func @transform_0(%arg0: i32) -> (i32, i32, i32, i32) {
    %c0_i32 = arith.constant 0 : i32
    %c0_i32_0 = arith.constant 0 : i32
    %c0_i32_1 = arith.constant 0 : i32
    %c0_i32_2 = arith.constant 0 : i32
    return %arg0, %c0_i32, %c0_i32_0, %c0_i32_1 : i32, i32, i32, i32
  }
  func.func @transform_1(%arg0: i32) -> (i32, i32) {
    %c0_i32 = arith.constant 0 : i32
    %c0_i32_0 = arith.constant 0 : i32
    %c0_i32_1 = arith.constant 0 : i32
    return %c0_i32, %c0_i32_0 : i32, i32
  }
  func.func @transform_2(%arg0: i32) -> (i32, i32) {
    %c0_i32 = arith.constant 0 : i32
    %c0_i32_0 = arith.constant 0 : i32
    %c0_i32_1 = arith.constant 0 : i32
    return %c0_i32, %c0_i32_0 : i32, i32
  }
  func.func @transform_3(%arg0: i32) -> (i32, i32) {
    %c0_i32 = arith.constant 0 : i32
    %c0_i32_0 = arith.constant 0 : i32
    %c0_i32_1 = arith.constant 0 : i32
    return %c0_i32, %c0_i32_0 : i32, i32
  }
  func.func @transform_4(%arg0: i32) -> (i32, i32) {
    %c0_i32 = arith.constant 0 : i32
    %c0_i32_0 = arith.constant 0 : i32
    %c0_i32_1 = arith.constant 0 : i32
    return %c0_i32, %c0_i32_0 : i32, i32
  }
  func.func @transform_5(%arg0: i32) -> (i32, i32) {
    %c0_i32 = arith.constant 0 : i32
    %c0_i32_0 = arith.constant 0 : i32
    %c0_i32_1 = arith.constant 0 : i32
    return %c0_i32, %c0_i32_0 : i32, i32
  }
  func.func @transform_6(%arg0: i32) -> (i32, i32) {
    %c0_i32 = arith.constant 0 : i32
    %c0_i32_0 = arith.constant 0 : i32
    %c0_i32_1 = arith.constant 0 : i32
    return %c0_i32, %c0_i32_0 : i32, i32
  }
  func.func @transform_7(%arg0: i32) -> (i32, i32) {
    %c0_i32 = arith.constant 0 : i32
    %c0_i32_0 = arith.constant 0 : i32
    %c0_i32_1 = arith.constant 0 : i32
    return %c0_i32, %c0_i32_0 : i32, i32
  }
  func.func @transform_8(%arg0: i32) -> (i32, i32) {
    %c0_i32 = arith.constant 0 : i32
    %c0_i32_0 = arith.constant 0 : i32
    %c0_i32_1 = arith.constant 0 : i32
    return %c0_i32, %c0_i32_0 : i32, i32
  }
  func.func @transform_9(%arg0: i32) -> (i32, i32) {
    %c0_i32 = arith.constant 0 : i32
    %c0_i32_0 = arith.constant 0 : i32
    %c0_i32_1 = arith.constant 0 : i32
    return %c0_i32, %c0_i32_0 : i32, i32
  }
  func.func @transform_10(%arg0: i32) -> (i32, i32) {
    %c0_i32 = arith.constant 0 : i32
    %c0_i32_0 = arith.constant 0 : i32
    %c0_i32_1 = arith.constant 0 : i32
    return %c0_i32, %c0_i32_0 : i32, i32
  }
  func.func @transform_11(%arg0: i32) -> (i32, i32) {
    %c0_i32 = arith.constant 0 : i32
    %c0_i32_0 = arith.constant 0 : i32
    %c0_i32_1 = arith.constant 0 : i32
    return %c0_i32, %c0_i32_0 : i32, i32
  }
  func.func @transform_12(%arg0: i32) -> (i32, i32) {
    %c0_i32 = arith.constant 0 : i32
    %c0_i32_0 = arith.constant 0 : i32
    %c0_i32_1 = arith.constant 0 : i32
    return %c0_i32, %c0_i32_0 : i32, i32
  }
  func.func @transform_13(%arg0: i32) -> (i32, i32) {
    %c0_i32 = arith.constant 0 : i32
    %c0_i32_0 = arith.constant 0 : i32
    %c0_i32_1 = arith.constant 0 : i32
    return %c0_i32, %c0_i32_0 : i32, i32
  }
  func.func @transform_14(%arg0: i32) -> (i32, i32) {
    %c0_i32 = arith.constant 0 : i32
    %c0_i32_0 = arith.constant 0 : i32
    %c0_i32_1 = arith.constant 0 : i32
    return %c0_i32, %c0_i32_0 : i32, i32
  }
  func.func @transform_15(%arg0: i32) -> (i32, i32, i32, i32) {
    %c0_i32 = arith.constant 0 : i32
    %c0_i32_0 = arith.constant 0 : i32
    %c0_i32_1 = arith.constant 0 : i32
    %c0_i32_2 = arith.constant 0 : i32
    return %arg0, %c0_i32, %c0_i32_0, %c0_i32_1 : i32, i32, i32, i32
  }
}

</mosaic_0001>

<llo_original>
// kernel: tpu_custom_call.1
$region0: #{tpu_custom_call.1}
  #allocation0 [shape = 'u32[]', space=smem, size = 0x4, offset = 0x4, fixed_abs, tag = 'smem constant byte address 0x4 - core index']
  #allocation1 [shape = 'u32[144,128]{1,0:T(1,128)}', space=vmem, size = 0x12000, scoped, tag = 'internal scratch']
  #allocation2 [shape = 'f32[1,3,22,24]{3,2,1,0:T(8,128)}', space=vmem, size = 0x9000, scoped, tag = 'scratch operand']
  #allocation3 [shape = 'f32[1,5,18,8]{3,2,1,0:T(8,128)}', space=vmem, size = 0xf000, scoped, tag = 'scratch operand']
  #allocation4 [shape = 'f32[48,112]{1,0:T(8,128)}', space=vmem, size = 0x6000, scoped, tag = 'scratch operand']
  %s0 = inlined_call_operand.vmem [shape: f32[2,3,16,8], index: 0, kind: input, shape index: {}]
  %s1 = inlined_call_operand.vmem [shape: f32[24,24], index: 1, kind: input, shape index: {}]
  %s2 = inlined_call_operand.vmem [shape: f32[1,24], index: 2, kind: input, shape index: {}]
  %s3 = inlined_call_operand.vmem [shape: f32[56,8], index: 3, kind: input, shape index: {}]
  %s4 = inlined_call_operand.vmem [shape: f32[1,8], index: 4, kind: input, shape index: {}]
  %s5 = inlined_call_operand.vmem [shape: f32[72,8], index: 5, kind: input, shape index: {}]
  %s6 = inlined_call_operand.vmem [shape: f32[1,8], index: 6, kind: input, shape index: {}]
  %s7 = inlined_call_operand.vmem [shape: f32[48,24], index: 7, kind: input, shape index: {}]
  %s8 = inlined_call_operand.vmem [shape: f32[1,24], index: 8, kind: input, shape index: {}]
  %s9 = inlined_call_operand.vmem [shape: f32[112,8], index: 9, kind: input, shape index: {}]
  %s10 = inlined_call_operand.vmem [shape: f32[1,8], index: 10, kind: input, shape index: {}]
  %s11 = inlined_call_operand.vmem [shape: f32[72,8], index: 11, kind: input, shape index: {}]
  %s12 = inlined_call_operand.vmem [shape: f32[1,8], index: 12, kind: input, shape index: {}]
  %s13 = inlined_call_operand.vmem [shape: f32[24,8], index: 13, kind: input, shape index: {}]
  %s14 = inlined_call_operand.vmem [shape: f32[1,8], index: 14, kind: input, shape index: {}]
  %s15 = inlined_call_operand.vmem [shape: f32[2,3,16,8], index: 15, kind: output, shape index: {}]
  %s16 = sld [smem:[#allocation0]]
  $region93: #{tpu_custom_call.1} parent=0
    _
  %s18 = ssub.s32 1, %s16
  %s19 = scalar_select 0, %s18, %s16
  loop: start=0, step=1, limit=4
  $region2: #{tpu_custom_call.1} parent=0 // loop_pre_header
    _
  $region3: #{tpu_custom_call.1} parent=0 // loop_header
    %s21 = sphi 0, %s25
    %p22 = scmp.ge.s32.totalorder %s21, 4
    %s31 = sphi 0, %s33
    %s34 = sphi 0, %s31
    %s35 = sphi 0, %s34
    %s51 = sphi 0, %s35
    %s55 = sphi 0, %s55
    %s57 = sphi 0, %s55
    %s58 = sphi 0, %s57
    %s72 = sphi 0, %s58
    %s76 = sphi 0, %s76
    %s78 = sphi 0, %s76
    %s79 = sphi 0, %s78
    %s93 = sphi 0, %s79
    %s97 = sphi 0, %s97
    %s99 = sphi 0, %s97
    %s100 = sphi 0, %s99
    %s114 = sphi 0, %s100
    %s118 = sphi 0, %s118
    %s120 = sphi 0, %s118
    %s121 = sphi 0, %s120
    %s135 = sphi 0, %s121
    %s139 = sphi 0, %s139
    %s141 = sphi 0, %s139
    %s142 = sphi 0, %s141
    %s156 = sphi 0, %s142
    %s160 = sphi 0, %s160
    %s162 = sphi 0, %s160
    %s163 = sphi 0, %s162
    %s177 = sphi 0, %s163
    %s181 = sphi 0, %s181
    %s183 = sphi 0, %s181
    %s184 = sphi 0, %s183
    %s198 = sphi 0, %s184
    %s202 = sphi 0, %s202
    %s204 = sphi 0, %s202
    %s205 = sphi 0, %s204
    %s219 = sphi 0, %s205
    %s223 = sphi 0, %s223
    %s225 = sphi 0, %s223
    %s226 = sphi 0, %s225
    %s240 = sphi 0, %s226
    %s244 = sphi 0, %s244
    %s246 = sphi 0, %s244
    %s247 = sphi 0, %s246
    %s261 = sphi 0, %s247
    %s265 = sphi 0, %s265
    %s267 = sphi 0, %s265
    %s268 = sphi 0, %s267
    %s282 = sphi 0, %s268
    %s286 = sphi 0, %s286
    %s288 = sphi 0, %s286
    %s289 = sphi 0, %s288
    %s303 = sphi 0, %s289
    %s307 = sphi 0, %s307
    %s309 = sphi 0, %s307
    %s310 = sphi 0, %s309
    %s324 = sphi 0, %s310
    %s328 = sphi 0, %s328
    %s330 = sphi 0, %s328
    %s331 = sphi 0, %s330
    %s345 = sphi 0, %s331
    %s351 = sphi 0, %s353
    %s354 = sphi 0, %s351
    %s355 = sphi 0, %s354
    %s371 = sphi 0, %s355
  $region4: #{tpu_custom_call.1} parent=0 // loop_header_branch
    %24 = sbr.rel (%p22) target = $region8
  $region5: #{tpu_custom_call.1} parent=0 // loop_body
    %s26 = ssub.s32 %s21, 1
    %s27 = ssub.s32 %s21, 2
    %s28 = sadd.s32 %s21, 1
    %s29 = ssub.s32 %s21, %s28
    %p30 = scmp.eq.s32.totalorder %s29, 0
    %s32 = sadd.s32 %s31, 1
    %s33 = scalar_select %p30, %s31, %s32
    %p36 = pneg %p30
    %p37 = scmp.eq.s32.totalorder %s21, 1
    %p38 = por %p36, %p37
    %p39 = scmp.ne.s32.totalorder %s31, %s34
    %p40 = scmp.eq.s32.totalorder %s21, 0
    %p41 = por %p39, %p40
    %p42 = scmp.ne.s32.totalorder %s31, %s34
    %p43 = scmp.eq.s32.totalorder %s26, 1
    %p44 = por %p42, %p43
    %p45 = scmp.ne.s32.totalorder %s34, %s35
    %p46 = scmp.eq.s32.totalorder %s26, 0
    %p47 = por %p45, %p46
    %p48 = scmp.ne.s32.totalorder %s34, %s35
    %p49 = scmp.eq.s32.totalorder %s27, 1
    %p50 = por %p48, %p49
    %p52 = scmp.ne.s32.totalorder %s35, %s51
    %p53 = scmp.eq.s32.totalorder %s27, 0
    %p54 = por %p52, %p53
    %s56 = sadd.s32 %s55, 1
    %p59 = scmp.eq.s32.totalorder %s21, 1
    %p60 = scmp.ne.s32.totalorder %s55, %s57
    %p61 = scmp.eq.s32.totalorder %s21, 0
    %p62 = por %p60, %p61
    %p63 = scmp.ne.s32.totalorder %s55, %s57
    %p64 = scmp.eq.s32.totalorder %s26, 1
    %p65 = por %p63, %p64
    %p66 = scmp.ne.s32.totalorder %s57, %s58
    %p67 = scmp.eq.s32.totalorder %s26, 0
    %p68 = por %p66, %p67
    %p69 = scmp.ne.s32.totalorder %s57, %s58
    %p70 = scmp.eq.s32.totalorder %s27, 1
    %p71 = por %p69, %p70
    %p73 = scmp.ne.s32.totalorder %s58, %s72
    %p74 = scmp.eq.s32.totalorder %s27, 0
    %p75 = por %p73, %p74
    %s77 = sadd.s32 %s76, 1
    %p80 = scmp.eq.s32.totalorder %s21, 1
    %p81 = scmp.ne.s32.totalorder %s76, %s78
    %p82 = scmp.eq.s32.totalorder %s21, 0
    %p83 = por %p81, %p82
    %p84 = scmp.ne.s32.totalorder %s76, %s78
    %p85 = scmp.eq.s32.totalorder %s26, 1
    %p86 = por %p84, %p85
    %p87 = scmp.ne.s32.totalorder %s78, %s79
    %p88 = scmp.eq.s32.totalorder %s26, 0
    %p89 = por %p87, %p88
    %p90 = scmp.ne.s32.totalorder %s78, %s79
    %p91 = scmp.eq.s32.totalorder %s27, 1
    %p92 = por %p90, %p91
    %p94 = scmp.ne.s32.totalorder %s79, %s93
    %p95 = scmp.eq.s32.totalorder %s27, 0
    %p96 = por %p94, %p95
    %s98 = sadd.s32 %s97, 1
    %p101 = scmp.eq.s32.totalorder %s21, 1
    %p102 = scmp.ne.s32.totalorder %s97, %s99
    %p103 = scmp.eq.s32.totalorder %s21, 0
    %p104 = por %p102, %p103
    %p105 = scmp.ne.s32.totalorder %s97, %s99
    %p106 = scmp.eq.s32.totalorder %s26, 1
    %p107 = por %p105, %p106
    %p108 = scmp.ne.s32.totalorder %s99, %s100
    %p109 = scmp.eq.s32.totalorder %s26, 0
    %p110 = por %p108, %p109
    %p111 = scmp.ne.s32.totalorder %s99, %s100
    %p112 = scmp.eq.s32.totalorder %s27, 1
    %p113 = por %p111, %p112
    %p115 = scmp.ne.s32.totalorder %s100, %s114
    %p116 = scmp.eq.s32.totalorder %s27, 0
    %p117 = por %p115, %p116
    %s119 = sadd.s32 %s118, 1
    %p122 = scmp.eq.s32.totalorder %s21, 1
    %p123 = scmp.ne.s32.totalorder %s118, %s120
    %p124 = scmp.eq.s32.totalorder %s21, 0
    %p125 = por %p123, %p124
    %p126 = scmp.ne.s32.totalorder %s118, %s120
    %p127 = scmp.eq.s32.totalorder %s26, 1
    %p128 = por %p126, %p127
    %p129 = scmp.ne.s32.totalorder %s120, %s121
    %p130 = scmp.eq.s32.totalorder %s26, 0
    %p131 = por %p129, %p130
    %p132 = scmp.ne.s32.totalorder %s120, %s121
    %p133 = scmp.eq.s32.totalorder %s27, 1
    %p134 = por %p132, %p133
    %p136 = scmp.ne.s32.totalorder %s121, %s135
    %p137 = scmp.eq.s32.totalorder %s27, 0
    %p138 = por %p136, %p137
    %s140 = sadd.s32 %s139, 1
    %p143 = scmp.eq.s32.totalorder %s21, 1
    %p144 = scmp.ne.s32.totalorder %s139, %s141
    %p145 = scmp.eq.s32.totalorder %s21, 0
    %p146 = por %p144, %p145
    %p147 = scmp.ne.s32.totalorder %s139, %s141
    %p148 = scmp.eq.s32.totalorder %s26, 1
    %p149 = por %p147, %p148
    %p150 = scmp.ne.s32.totalorder %s141, %s142
    %p151 = scmp.eq.s32.totalorder %s26, 0
    %p152 = por %p150, %p151
    %p153 = scmp.ne.s32.totalorder %s141, %s142
    %p154 = scmp.eq.s32.totalorder %s27, 1
    %p155 = por %p153, %p154
    %p157 = scmp.ne.s32.totalorder %s142, %s156
    %p158 = scmp.eq.s32.totalorder %s27, 0
    %p159 = por %p157, %p158
    %s161 = sadd.s32 %s160, 1
    %p164 = scmp.eq.s32.totalorder %s21, 1
    %p165 = scmp.ne.s32.totalorder %s160, %s162
    %p166 = scmp.eq.s32.totalorder %s21, 0
    %p167 = por %p165, %p166
    %p168 = scmp.ne.s32.totalorder %s160, %s162
    %p169 = scmp.eq.s32.totalorder %s26, 1
    %p170 = por %p168, %p169
    %p171 = scmp.ne.s32.totalorder %s162, %s163
    %p172 = scmp.eq.s32.totalorder %s26, 0
    %p173 = por %p171, %p172
    %p174 = scmp.ne.s32.totalorder %s162, %s163
    %p175 = scmp.eq.s32.totalorder %s27, 1
    %p176 = por %p174, %p175
    %p178 = scmp.ne.s32.totalorder %s163, %s177
    %p179 = scmp.eq.s32.totalorder %s27, 0
    %p180 = por %p178, %p179
    %s182 = sadd.s32 %s181, 1
    %p185 = scmp.eq.s32.totalorder %s21, 1
    %p186 = scmp.ne.s32.totalorder %s181, %s183
    %p187 = scmp.eq.s32.totalorder %s21, 0
    %p188 = por %p186, %p187
    %p189 = scmp.ne.s32.totalorder %s181, %s183
    %p190 = scmp.eq.s32.totalorder %s26, 1
    %p191 = por %p189, %p190
    %p192 = scmp.ne.s32.totalorder %s183, %s184
    %p193 = scmp.eq.s32.totalorder %s26, 0
    %p194 = por %p192, %p193
    %p195 = scmp.ne.s32.totalorder %s183, %s184
    %p196 = scmp.eq.s32.totalorder %s27, 1
    %p197 = por %p195, %p196
    %p199 = scmp.ne.s32.totalorder %s184, %s198
    %p200 = scmp.eq.s32.totalorder %s27, 0
    %p201 = por %p199, %p200
    %s203 = sadd.s32 %s202, 1
    %p206 = scmp.eq.s32.totalorder %s21, 1
    %p207 = scmp.ne.s32.totalorder %s202, %s204
    %p208 = scmp.eq.s32.totalorder %s21, 0
    %p209 = por %p207, %p208
    %p210 = scmp.ne.s32.totalorder %s202, %s204
    %p211 = scmp.eq.s32.totalorder %s26, 1
    %p212 = por %p210, %p211
    %p213 = scmp.ne.s32.totalorder %s204, %s205
    %p214 = scmp.eq.s32.totalorder %s26, 0
    %p215 = por %p213, %p214
    %p216 = scmp.ne.s32.totalorder %s204, %s205
    %p217 = scmp.eq.s32.totalorder %s27, 1
    %p218 = por %p216, %p217
    %p220 = scmp.ne.s32.totalorder %s205, %s219
    %p221 = scmp.eq.s32.totalorder %s27, 0
    %p222 = por %p220, %p221
    %s224 = sadd.s32 %s223, 1
    %p227 = scmp.eq.s32.totalorder %s21, 1
    %p228 = scmp.ne.s32.totalorder %s223, %s225
    %p229 = scmp.eq.s32.totalorder %s21, 0
    %p230 = por %p228, %p229
    %p231 = scmp.ne.s32.totalorder %s223, %s225
    %p232 = scmp.eq.s32.totalorder %s26, 1
    %p233 = por %p231, %p232
    %p234 = scmp.ne.s32.totalorder %s225, %s226
    %p235 = scmp.eq.s32.totalorder %s26, 0
    %p236 = por %p234, %p235
    %p237 = scmp.ne.s32.totalorder %s225, %s226
    %p238 = scmp.eq.s32.totalorder %s27, 1
    %p239 = por %p237, %p238
    %p241 = scmp.ne.s32.totalorder %s226, %s240
    %p242 = scmp.eq.s32.totalorder %s27, 0
    %p243 = por %p241, %p242
    %s245 = sadd.s32 %s244, 1
    %p248 = scmp.eq.s32.totalorder %s21, 1
    %p249 = scmp.ne.s32.totalorder %s244, %s246
    %p250 = scmp.eq.s32.totalorder %s21, 0
    %p251 = por %p249, %p250
    %p252 = scmp.ne.s32.totalorder %s244, %s246
    %p253 = scmp.eq.s32.totalorder %s26, 1
    %p254 = por %p252, %p253
    %p255 = scmp.ne.s32.totalorder %s246, %s247
    %p256 = scmp.eq.s32.totalorder %s26, 0
    %p257 = por %p255, %p256
    %p258 = scmp.ne.s32.totalorder %s246, %s247
    %p259 = scmp.eq.s32.totalorder %s27, 1
    %p260 = por %p258, %p259
    %p262 = scmp.ne.s32.totalorder %s247, %s261
    %p263 = scmp.eq.s32.totalorder %s27, 0
    %p264 = por %p262, %p263
    %s266 = sadd.s32 %s265, 1
    %p269 = scmp.eq.s32.totalorder %s21, 1
    %p270 = scmp.ne.s32.totalorder %s265, %s267
    %p271 = scmp.eq.s32.totalorder %s21, 0
    %p272 = por %p270, %p271
    %p273 = scmp.ne.s32.totalorder %s265, %s267
    %p274 = scmp.eq.s32.totalorder %s26, 1
    %p275 = por %p273, %p274
    %p276 = scmp.ne.s32.totalorder %s267, %s268
    %p277 = scmp.eq.s32.totalorder %s26, 0
    %p278 = por %p276, %p277
    %p279 = scmp.ne.s32.totalorder %s267, %s268
    %p280 = scmp.eq.s32.totalorder %s27, 1
    %p281 = por %p279, %p280
    %p283 = scmp.ne.s32.totalorder %s268, %s282
    %p284 = scmp.eq.s32.totalorder %s27, 0
    %p285 = por %p283, %p284
    %s287 = sadd.s32 %s286, 1
    %p290 = scmp.eq.s32.totalorder %s21, 1
    %p291 = scmp.ne.s32.totalorder %s286, %s288
    %p292 = scmp.eq.s32.totalorder %s21, 0
    %p293 = por %p291, %p292
    %p294 = scmp.ne.s32.totalorder %s286, %s288
    %p295 = scmp.eq.s32.totalorder %s26, 1
    %p296 = por %p294, %p295
    %p297 = scmp.ne.s32.totalorder %s288, %s289
    %p298 = scmp.eq.s32.totalorder %s26, 0
    %p299 = por %p297, %p298
    %p300 = scmp.ne.s32.totalorder %s288, %s289
    %p301 = scmp.eq.s32.totalorder %s27, 1
    %p302 = por %p300, %p301
    %p304 = scmp.ne.s32.totalorder %s289, %s303
    %p305 = scmp.eq.s32.totalorder %s27, 0
    %p306 = por %p304, %p305
    %s308 = sadd.s32 %s307, 1
    %p311 = scmp.eq.s32.totalorder %s21, 1
    %p312 = scmp.ne.s32.totalorder %s307, %s309
    %p313 = scmp.eq.s32.totalorder %s21, 0
    %p314 = por %p312, %p313
    %p315 = scmp.ne.s32.totalorder %s307, %s309
    %p316 = scmp.eq.s32.totalorder %s26, 1
    %p317 = por %p315, %p316
    %p318 = scmp.ne.s32.totalorder %s309, %s310
    %p319 = scmp.eq.s32.totalorder %s26, 0
    %p320 = por %p318, %p319
    %p321 = scmp.ne.s32.totalorder %s309, %s310
    %p322 = scmp.eq.s32.totalorder %s27, 1
    %p323 = por %p321, %p322
    %p325 = scmp.ne.s32.totalorder %s310, %s324
    %p326 = scmp.eq.s32.totalorder %s27, 0
    %p327 = por %p325, %p326
    %s329 = sadd.s32 %s328, 1
    %p332 = scmp.eq.s32.totalorder %s21, 1
    %p333 = scmp.ne.s32.totalorder %s328, %s330
    %p334 = scmp.eq.s32.totalorder %s21, 0
    %p335 = por %p333, %p334
    %p336 = scmp.ne.s32.totalorder %s328, %s330
    %p337 = scmp.eq.s32.totalorder %s26, 1
    %p338 = por %p336, %p337
    %p339 = scmp.ne.s32.totalorder %s330, %s331
    %p340 = scmp.eq.s32.totalorder %s26, 0
    %p341 = por %p339, %p340
    %p342 = scmp.ne.s32.totalorder %s330, %s331
    %p343 = scmp.eq.s32.totalorder %s27, 1
    %p344 = por %p342, %p343
    %p346 = scmp.ne.s32.totalorder %s331, %s345
    %p347 = scmp.eq.s32.totalorder %s27, 0
    %p348 = por %p346, %p347
    %s349 = ssub.s32 %s21, %s28
    %p350 = scmp.eq.s32.totalorder %s349, 0
    %s352 = sadd.s32 %s351, 1
    %s353 = scalar_select %p350, %s351, %s352
    %p356 = pneg %p350
    %p357 = scmp.eq.s32.totalorder %s21, 1
    %p358 = por %p356, %p357
    %p359 = scmp.ne.s32.totalorder %s351, %s354
    %p360 = scmp.eq.s32.totalorder %s21, 0
    %p361 = por %p359, %p360
    %p362 = scmp.ne.s32.totalorder %s351, %s354
    %p363 = scmp.eq.s32.totalorder %s26, 1
    %p364 = por %p362, %p363
    %p365 = scmp.ne.s32.totalorder %s354, %s355
    %p366 = scmp.eq.s32.totalorder %s26, 0
    %p367 = por %p365, %p366
    %p368 = scmp.ne.s32.totalorder %s354, %s355
    %p369 = scmp.eq.s32.totalorder %s27, 1
    %p370 = por %p368, %p369
    %p372 = scmp.ne.s32.totalorder %s355, %s371
    %p373 = scmp.eq.s32.totalorder %s27, 0
    %p374 = por %p372, %p373
    %p375 = scmp.le.s32.totalorder 1, %s21
    %p376 = scmp.lt.s32.totalorder %s21, 3
    %p377 = pnand %p375, %p376
    %p378 = pneg %p377
    // Predicated region
    $region9: #{tpu_custom_call.1} parent=5 // pred_check
      _
    $region10: #{tpu_custom_call.1} parent=5 // pred_check_branch
      %380 = sbr.rel (%p377) target = $region12
    $region11: #{tpu_custom_call.1} parent=5 // pred_region
      %s381 = ssub.s32 %s21, 1
      // Predicated region
      $region13: #{tpu_custom_call.1} parent=11 // pred_check
        %p382 = pneg %p68
      $region14: #{tpu_custom_call.1} parent=11 // pred_check_branch
        %384 = sbr.rel (%p382) target = $region16
      $region15: #{tpu_custom_call.1} parent=11 // pred_region
        _
      $region16: #{tpu_custom_call.1} parent=11 // pred_fallthru
        _
      // Predicated region
      $region17: #{tpu_custom_call.1} parent=11 // pred_check
        %p385 = pneg %p89
      $region18: #{tpu_custom_call.1} parent=11 // pred_check_branch
        %387 = sbr.rel (%p385) target = $region20
      $region19: #{tpu_custom_call.1} parent=11 // pred_region
        _
      $region20: #{tpu_custom_call.1} parent=11 // pred_fallthru
        _
      // Predicated region
      $region21: #{tpu_custom_call.1} parent=11 // pred_check
        %p388 = pneg %p110
      $region22: #{tpu_custom_call.1} parent=11 // pred_check_branch
        %390 = sbr.rel (%p388) target = $region24
      $region23: #{tpu_custom_call.1} parent=11 // pred_region
        _
      $region24: #{tpu_custom_call.1} parent=11 // pred_fallthru
        _
      // Predicated region
      $region25: #{tpu_custom_call.1} parent=11 // pred_check
        %p391 = pneg %p131
      $region26: #{tpu_custom_call.1} parent=11 // pred_check_branch
        %393 = sbr.rel (%p391) target = $region28
      $region27: #{tpu_custom_call.1} parent=11 // pred_region
        _
      $region28: #{tpu_custom_call.1} parent=11 // pred_fallthru
        _
      // Predicated region
      $region29: #{tpu_custom_call.1} parent=11 // pred_check
        %p394 = pneg %p152
      $region30: #{tpu_custom_call.1} parent=11 // pred_check_branch
        %396 = sbr.rel (%p394) target = $region32
      $region31: #{tpu_custom_call.1} parent=11 // pred_region
        _
      $region32: #{tpu_custom_call.1} parent=11 // pred_fallthru
        _
      // Predicated region
      $region33: #{tpu_custom_call.1} parent=11 // pred_check
        %p397 = pneg %p173
      $region34: #{tpu_custom_call.1} parent=11 // pred_check_branch
        %399 = sbr.rel (%p397) target = $region36
      $region35: #{tpu_custom_call.1} parent=11 // pred_region
        _
      $region36: #{tpu_custom_call.1} parent=11 // pred_fallthru
        _
      // Predicated region
      $region37: #{tpu_custom_call.1} parent=11 // pred_check
        %p400 = pneg %p194
      $region38: #{tpu_custom_call.1} parent=11 // pred_check_branch
        %402 = sbr.rel (%p400) target = $region40
      $region39: #{tpu_custom_call.1} parent=11 // pred_region
        _
      $region40: #{tpu_custom_call.1} parent=11 // pred_fallthru
        _
      // Predicated region
      $region41: #{tpu_custom_call.1} parent=11 // pred_check
        %p403 = pneg %p215
      $region42: #{tpu_custom_call.1} parent=11 // pred_check_branch
        %405 = sbr.rel (%p403) target = $region44
      $region43: #{tpu_custom_call.1} parent=11 // pred_region
        _
      $region44: #{tpu_custom_call.1} parent=11 // pred_fallthru
        _
      // Predicated region
      $region45: #{tpu_custom_call.1} parent=11 // pred_check
        %p406 = pneg %p236
      $region46: #{tpu_custom_call.1} parent=11 // pred_check_branch
        %408 = sbr.rel (%p406) target = $region48
      $region47: #{tpu_custom_call.1} parent=11 // pred_region
        _
      $region48: #{tpu_custom_call.1} parent=11 // pred_fallthru
        _
      // Predicated region
      $region49: #{tpu_custom_call.1} parent=11 // pred_check
        %p409 = pneg %p257
      $region50: #{tpu_custom_call.1} parent=11 // pred_check_branch
        %411 = sbr.rel (%p409) target = $region52
      $region51: #{tpu_custom_call.1} parent=11 // pred_region
        _
      $region52: #{tpu_custom_call.1} parent=11 // pred_fallthru
        _
      // Predicated region
      $region53: #{tpu_custom_call.1} parent=11 // pred_check
        %p412 = pneg %p278
      $region54: #{tpu_custom_call.1} parent=11 // pred_check_branch
        %414 = sbr.rel (%p412) target = $region56
      $region55: #{tpu_custom_call.1} parent=11 // pred_region
        _
      $region56: #{tpu_custom_call.1} parent=11 // pred_fallthru
        _
      // Predicated region
      $region57: #{tpu_custom_call.1} parent=11 // pred_check
        %p415 = pneg %p299
      $region58: #{tpu_custom_call.1} parent=11 // pred_check_branch
        %417 = sbr.rel (%p415) target = $region60
      $region59: #{tpu_custom_call.1} parent=11 // pred_region
        _
      $region60: #{tpu_custom_call.1} parent=11 // pred_fallthru
        _
      // Predicated region
      $region61: #{tpu_custom_call.1} parent=11 // pred_check
        %p418 = pneg %p320
      $region62: #{tpu_custom_call.1} parent=11 // pred_check_branch
        %420 = sbr.rel (%p418) target = $region64
      $region63: #{tpu_custom_call.1} parent=11 // pred_region
        _
      $region64: #{tpu_custom_call.1} parent=11 // pred_fallthru
        _
      // Predicated region
      $region65: #{tpu_custom_call.1} parent=11 // pred_check
        %p421 = pneg %p341
      $region66: #{tpu_custom_call.1} parent=11 // pred_check_branch
        %423 = sbr.rel (%p421) target = $region68
      $region67: #{tpu_custom_call.1} parent=11 // pred_region
        _
      $region68: #{tpu_custom_call.1} parent=11 // pred_fallthru
        _
    $region12: #{tpu_custom_call.1} parent=5 // pred_fallthru
      _
    %p424 = scmp.lt.s32.totalorder %s21, 2
    // Predicated region
    $region69: #{tpu_custom_call.1} parent=5 // pred_check
      %p425 = pneg %p424
    $region70: #{tpu_custom_call.1} parent=5 // pred_check_branch
      %427 = sbr.rel (%p425) target = $region72
    $region71: #{tpu_custom_call.1} parent=5 // pred_region
      // Predicated region
      $region73: #{tpu_custom_call.1} parent=71 // pred_check
        %p428 = pneg %p41
      $region74: #{tpu_custom_call.1} parent=71 // pred_check_branch
        %430 = sbr.rel (%p428) target = $region76
      $region75: #{tpu_custom_call.1} parent=71 // pred_region
        %p431 = scmp.lt.s32.totalorder %s21, 1
        %s432 = scalar_select %p431, %s21, 1
        %s433 = smul.addr %s432, 6
        %s434 = smul.addr %s433, 8
        %s435 = scalar_lea.vmem %s0, %s434
      $region76: #{tpu_custom_call.1} parent=71 // pred_fallthru
        _
    $region72: #{tpu_custom_call.1} parent=5 // pred_fallthru
      _
    %p436 = scmp.le.s32.totalorder 1, %s21
    %p437 = scmp.lt.s32.totalorder %s21, 3
    %p438 = pnand %p436, %p437
    %p439 = pneg %p438
    // Predicated region
    $region77: #{tpu_custom_call.1} parent=5 // pred_check
      _
    $region78: #{tpu_custom_call.1} parent=5 // pred_check_branch
      %441 = sbr.rel (%p438) target = $region80
    $region79: #{tpu_custom_call.1} parent=5 // pred_region
      %s442 = ssub.s32 %s21, 1
      %p443 = scmp.lt.s32.totalorder %s26, 1
      %s444 = scalar_select %p443, %s26, 1
      %s445 = smul.addr %s444, 6
      %s446 = smul.addr %s445, 8
      %s447 = scalar_lea.vmem %s0, %s446
      %p448 = pneg %p47
      %p449 = pneg %p44
      %p450 = pneg %p68
      %p451 = pneg %p65
      %p452 = pneg %p89
      %p453 = pneg %p86
      %p454 = pneg %p110
      %p455 = pneg %p107
      %p456 = pneg %p131
      %p457 = pneg %p128
      %p458 = pneg %p152
      %p459 = pneg %p149
      %p460 = pneg %p173
      %p461 = pneg %p170
      %p462 = pneg %p194
      %p463 = pneg %p191
      %p464 = pneg %p215
      %p465 = pneg %p212
      %p466 = pneg %p236
      %p467 = pneg %p233
      %p468 = pneg %p257
      %p469 = pneg %p254
      %p470 = pneg %p278
      %p471 = pneg %p275
      %p472 = pneg %p299
      %p473 = pneg %p296
      %p474 = pneg %p320
      %p475 = pneg %p317
      %p476 = pneg %p341
      %p477 = pneg %p338
      %p478 = pneg %p367
      %p479 = pneg %p364
      %p480 = scmp.lt.s32.totalorder %s26, 1
      %s481 = scalar_select %p480, %s26, 1
      %s482 = smul.addr %s481, 6
      %s483 = smul.addr %s482, 8
      %s484 = scalar_lea.vmem %s15, %s483
      %p485 = scmp.lt.s32.totalorder %s26, 1
      %s486 = scalar_select %p485, %s26, 1
      %s487 = smul.addr %s486, 6
      %s488 = smul.addr %s487, 8
      %s489 = scalar_lea.vmem %s0, %s488
      %p490 = scmp.lt.s32.totalorder %s26, 1
      %s491 = scalar_select %p490, %s26, 1
      %s492 = smul.addr %s491, 6
      %s493 = smul.addr %s492, 8
      %s494 = scalar_lea.vmem %s15, %s493
      %vm495 = vcmask 190464
      %496 = vst.msk [vmem:[#allocation2] sm:$0x7] %vm495, 0.0
      %497 = vst.msk [vmem:[#allocation2 + $0x18] sm:$0x7] %vm495, 0.0
      %498 = vst.msk [vmem:[#allocation2 + $0x30] sm:$0x7] %vm495, 0.0
      %499 = vst.msk [vmem:[#allocation2 + $0x13] sm:$0x7] %vm495, 0.0
      %500 = vst.msk [vmem:[#allocation2 + $0x2b] sm:$0x7] %vm495, 0.0
      %501 = vst.msk [vmem:[#allocation2 + $0x43] sm:$0x7] %vm495, 0.0
      %vm502 = vcmask 64512
      %503 = vst.msk [vmem:[#allocation3] sm:$0xff] %vm502, 0.0
      %504 = vst.msk [vmem:[#allocation3 + $0x8] sm:$0xff] %vm502, 0.0
      %vm505 = vcmask 58368
      %506 = vst.msk [vmem:[#allocation3 + $0x10] sm:$0x3] %vm505, 0.0
      %s507 = scalar_lea.vmem [#allocation3], 96
      %508 = vst.msk [vmem:[%s507] sm:$0xff] %vm502, 0.0
      %509 = vst.msk [vmem:[%s507 + $0x8] sm:$0xff] %vm502, 0.0
      %510 = vst.msk [vmem:[%s507 + $0x10] sm:$0x3] %vm505, 0.0
      %vm511 = vcmask 57344
      %512 = vst.msk [vmem:[#allocation3] sm:$0x1] %vm511, 0.0
      %513 = vst.msk [vmem:[#allocation3 + $0x18] sm:$0x1] %vm511, 0.0
      %514 = vst.msk [vmem:[#allocation3 + $0x30] sm:$0x1] %vm511, 0.0
      %515 = vst.msk [vmem:[#allocation3 + $0x48] sm:$0x1] %vm511, 0.0
      %516 = vst.msk [vmem:[#allocation3 + $0x60] sm:$0x1] %vm511, 0.0
      %517 = vst.msk [vmem:[#allocation3 + $0x11] sm:$0x1] %vm511, 0.0
      %518 = vst.msk [vmem:[#allocation3 + $0x29] sm:$0x1] %vm511, 0.0
      %519 = vst.msk [vmem:[#allocation3 + $0x41] sm:$0x1] %vm511, 0.0
      %520 = vst.msk [vmem:[#allocation3 + $0x59] sm:$0x1] %vm511, 0.0
      %521 = vst.msk [vmem:[#allocation3 + $0x71] sm:$0x1] %vm511, 0.0
      %v522 = vld [vmem:[%s489] sm:$0xff]
      %v523 = vld [vmem:[%s489 + $0x8] sm:$0xff]
      %v524 = vld [vmem:[%s489 + $0x10] sm:$0xff]
      %v525 = vld [vmem:[%s489 + $0x18] sm:$0xff]
      %v526 = vld [vmem:[%s489 + $0x20] sm:$0xff]
      %v527 = vld [vmem:[%s489 + $0x28] sm:$0xff]
      %528 = vst.msk [vmem:[#allocation2 + $0x3] sm:$0xff] %vm502, %v522
      %529 = vst.msk [vmem:[#allocation2 + $0xb] sm:$0xff] %vm502, %v523
      %530 = vst.msk [vmem:[#allocation2 + $0x1b] sm:$0xff] %vm502, %v524
      %531 = vst.msk [vmem:[#allocation2 + $0x23] sm:$0xff] %vm502, %v525
      %532 = vst.msk [vmem:[#allocation2 + $0x33] sm:$0xff] %vm502, %v526
      %533 = vst.msk [vmem:[#allocation2 + $0x3b] sm:$0xff] %vm502, %v527
      %v534 = vld [vmem:[%s1] sm:$0xff]
      %v535 = vld [vmem:[%s1 + $0x8] sm:$0xff]
      %v536 = vld [vmem:[%s1 + $0x10] sm:$0xff]
      %v537 = vld [vmem:[%s2] sm:$0x1]
      %v538 = vld [vmem:[%s3] sm:$0xff]
      %v539 = vld [vmem:[%s3 + $0x8] sm:$0xff]
      %v540 = vld [vmem:[%s3 + $0x10] sm:$0xff]
      %v541 = vld [vmem:[%s3 + $0x18] sm:$0xff]
      %v542 = vld [vmem:[%s3 + $0x20] sm:$0xff]
      %v543 = vld [vmem:[%s3 + $0x28] sm:$0xff]
      %v544 = vld [vmem:[%s3 + $0x30] sm:$0xff]
      %v545 = vld [vmem:[%s4] sm:$0x1]
      %v546 = vld [vmem:[%s5] sm:$0xff]
      %v547 = vld [vmem:[%s5 + $0x8] sm:$0xff]
      %v548 = vld [vmem:[%s5 + $0x10] sm:$0xff]
      %v549 = vld [vmem:[%s5 + $0x18] sm:$0xff]
      %v550 = vld [vmem:[%s5 + $0x20] sm:$0xff]
      %v551 = vld [vmem:[%s5 + $0x28] sm:$0xff]
      %v552 = vld [vmem:[%s5 + $0x30] sm:$0xff]
      %v553 = vld [vmem:[%s5 + $0x38] sm:$0xff]
      %v554 = vld [vmem:[%s5 + $0x40] sm:$0xff]
      %v555 = vld [vmem:[%s6] sm:$0x1]
      %v556 = vld [vmem:[#allocation2 + $0x3] sm:$0xff]
      %v557 = vld [vmem:[#allocation2 + $0xb] sm:$0xff]
      %558 = vst.msk [vmem:[#allocation4] sm:$0xff] %vm502, %v556
      %559 = vst.msk [vmem:[#allocation4 + $0x8] sm:$0xff] %vm502, %v557
      %s560 = scalar_lea.vmem [#allocation2], 24
      %v561 = vld [vmem:[%s560 + $0x3] sm:$0xff]
      %v562 = vld [vmem:[%s560 + $0xb] sm:$0xff]
      %565 = vrot.lane.b32.xlu0 %v561, 8
      %v566 = vpop.permute.xlu0 %565
      %567 = vrot.lane.b32.xlu0 %v562, 8
      %v568 = vpop.permute.xlu0 %567
      %vm571 = vcmask 130112
      %572 = vst.msk [vmem:[#allocation4] sm:$0xff] %vm571, %v566
      %573 = vst.msk [vmem:[#allocation4 + $0x8] sm:$0xff] %vm571, %v568
      %s574 = scalar_lea.vmem [#allocation2], 48
      %v575 = vld [vmem:[%s574 + $0x3] sm:$0xff]
      %v576 = vld [vmem:[%s574 + $0xb] sm:$0xff]
      %579 = vrot.lane.b32.xlu0 %v575, 16
      %v580 = vpop.permute.xlu0 %579
      %581 = vrot.lane.b32.xlu0 %v576, 16
      %v582 = vpop.permute.xlu0 %581
      %vm585 = vcmask 195712
      %586 = vst.msk [vmem:[#allocation4] sm:$0xff] %vm585, %v580
      %587 = vst.msk [vmem:[#allocation4 + $0x8] sm:$0xff] %vm585, %v582
      %v588 = vld [vmem:[#allocation4] sm:$0xff]
      %v589 = vld [vmem:[#allocation4 + $0x8] sm:$0xff]
      %v591 = vlaneseq
      %v592 = vshrl.u32 %v591, 7
      %v593 = vsub.s32 0, %v592
      %v594 = vrot.slane %v537, %v593
      %vm596 = vcmask 195584
      %v598 = vsel %vm596, %v588, 0
      %v601 = vsel %vm596, %v589, 0
      %603 = vmatprep.subr.mxu0 0.0
      %604 = vmatpush1.msra.mxu0 %v534
      %605 = vmatprep.subr.mxu0 0.0
      %606 = vmatpush1.msra.mxu0 %v535
      %607 = vmatprep.subr.mxu0 0.0
      %608 = vmatpush1.msra.mxu0 %v536
      %609 = vmatprep.subr.mxu0 0.0
      %610 = vmatpush1.msra.mxu0 0.0
      %611 = vmatprep.subr.mxu0 0.0
      %612 = vmatpush1.msra.mxu0 0.0
      %613 = vmatprep.subr.mxu0 0.0
      %614 = vmatpush1.msra.mxu0 0.0
      %615 = vmatprep.subr.mxu0 0.0
      %616 = vmatpush1.msra.mxu0 0.0
      %617 = vmatprep.subr.mxu0 0.0
      %618 = vmatpush1.msra.mxu0 0.0
      %619 = vmatprep.subr.mxu0 0.0
      %620 = vmatpush1.msra.mxu0 0.0
      %621 = vmatprep.subr.mxu0 0.0
      %622 = vmatpush1.msra.mxu0 0.0
      %623 = vmatprep.subr.mxu0 0.0
      %624 = vmatpush1.msra.mxu0 0.0
      %625 = vmatprep.subr.mxu0 0.0
      %626 = vmatpush1.msra.mxu0 0.0
      %627 = vmatprep.subr.mxu0 0.0
      %628 = vmatpush1.msra.mxu0 0.0
      %629 = vmatprep.subr.mxu0 0.0
      %630 = vmatpush1.msra.mxu0 0.0
      %631 = vmatprep.subr.mxu0 0.0
      %632 = vmatpush1.msra.mxu0 0.0
      %633 = vmatprep.subr.mxu0 0.0
      %634 = vmatpush1.msra.mxu0 0.0
      %635 = vmatprep.subr.mxu0 0.0
      %636 = vmatpush1.msra.mxu0 0.0
      %637 = vmatprep.subr.mxu0 0.0
      %638 = vmatpush1.msra.mxu0 0.0
      %639 = vmatprep.subr.mxu0 0.0
      %640 = vmatpush1.msra.mxu0 0.0
      %641 = vmatprep.subr.mxu0 0.0
      %642 = vmatpush1.msra.mxu0 0.0
      %643 = vmatprep.subr.mxu0 0.0
      %644 = vmatpush1.msra.mxu0 0.0
      %645 = vmatprep.subr.mxu0 0.0
      %646 = vmatpush1.msra.mxu0 0.0
      %647 = vmatprep.subr.mxu0 0.0
      %648 = vmatpush1.msra.mxu0 0.0
      %649 = vmatprep.subr.mxu0 0.0
      %650 = vmatpush1.msra.mxu0 0.0
      %651 = vmatprep.subr.mxu0 0.0
      %652 = vmatpush1.msra.mxu0 0.0
      %653 = vmatprep.subr.mxu0 0.0
      %654 = vmatpush1.msra.mxu0 0.0
      %655 = vmatprep.subr.mxu0 0.0
      %656 = vmatpush1.msra.mxu0 0.0
      %657 = vmatprep.subr.mxu0 0.0
      %658 = vmatpush1.msra.mxu0 0.0
      %659 = vmatprep.subr.mxu0 0.0
      %660 = vmatpush1.msra.mxu0 0.0
      %661 = vmatprep.subr.mxu0 0.0
      %662 = vmatpush1.msra.mxu0 0.0
      %663 = vmatprep.subr.mxu0 0.0
      %664 = vmatpush1.msra.mxu0 0.0
      %665 = vmatprep.subr.mxu0 0.0
      %666 = vmatpush1.msra.mxu0 0.0
      %667 = vmatprep.mubr.f32.mxu0 0.0
      %668 = vmatmul.mubr.f32.gmra.mrb[0].mxu0 %v598
      %v669 = vpop.f32.mrb[0].mxu0
      %v670 = vadd.f32 %v594, %v669
      %v671 = vpop.f32.mrb[0].mxu0
      %672 = vmatprep.mubr.f32.mxu0 0.0
      %673 = vmatmul.mubr.f32.gmra.mrb[0].mxu0 %v601
      %v674 = vpop.f32.mrb[0].mxu0
      %v675 = vadd.f32 %v594, %v674
      %v676 = vpop.f32.mrb[0].mxu0
      %677 = vdwg.mxu0
      %v678 = vmax.f32 %v670, 0.0
      %v679 = vmax.f32 %v675, 0.0
      %682 = vrot.lane.b32.xlu0 %v678, 120
      %v683 = vpop.permute.xlu0 %682
      %684 = vrot.lane.b32.xlu0 %v679, 120
      %v685 = vpop.permute.xlu0 %684
      %688 = vrot.lane.b32.xlu0 %v678, 112
      %v689 = vpop.permute.xlu0 %688
      %690 = vrot.lane.b32.xlu0 %v679, 112
      %v691 = vpop.permute.xlu0 %690
      %v694 = vld [vmem:[#allocation2] sm:$0xff]
      %v695 = vld [vmem:[#allocation2 + $0x8] sm:$0xff]
      %v696 = vld [vmem:[#allocation2 + $0x18] sm:$0xff]
      %v697 = vld [vmem:[#allocation2 + $0x20] sm:$0xff]
      %v698 = vld [vmem:[#allocation2 + $0x30] sm:$0xff]
      %v699 = vld [vmem:[#allocation2 + $0x38] sm:$0xff]
      %700 = vst.msk [vmem:[#allocation4] sm:$0xff] %vm502, %v694
      %701 = vst.msk [vmem:[#allocation4 + $0x8] sm:$0xff] %vm502, %v695
      %702 = vst.msk [vmem:[#allocation4 + $0x10] sm:$0xff] %vm502, %v696
      %703 = vst.msk [vmem:[#allocation4 + $0x18] sm:$0xff] %vm502, %v697
      %704 = vst.msk [vmem:[#allocation4 + $0x20] sm:$0xff] %vm502, %v698
      %705 = vst.msk [vmem:[#allocation4 + $0x28] sm:$0xff] %vm502, %v699
      %v706 = vld [vmem:[#allocation2 + $0x1] sm:$0xff]
      %v707 = vld [vmem:[#allocation2 + $0x9] sm:$0xff]
      %v708 = vld [vmem:[#allocation2 + $0x19] sm:$0xff]
      %v709 = vld [vmem:[#allocation2 + $0x21] sm:$0xff]
      %v710 = vld [vmem:[#allocation2 + $0x31] sm:$0xff]
      %v711 = vld [vmem:[#allocation2 + $0x39] sm:$0xff]
      %718 = vrot.lane.b32.xlu0 %v706, 8
      %v719 = vpop.permute.xlu0 %718
      %720 = vrot.lane.b32.xlu0 %v707, 8
      %v721 = vpop.permute.xlu0 %720
      %722 = vrot.lane.b32.xlu0 %v708, 8
      %v723 = vpop.permute.xlu0 %722
      %724 = vrot.lane.b32.xlu0 %v709, 8
      %v725 = vpop.permute.xlu0 %724
      %726 = vrot.lane.b32.xlu0 %v710, 8
      %v727 = vpop.permute.xlu0 %726
      %728 = vrot.lane.b32.xlu0 %v711, 8
      %v729 = vpop.permute.xlu0 %728
      %736 = vst.msk [vmem:[#allocation4] sm:$0xff] %vm571, %v719
      %737 = vst.msk [vmem:[#allocation4 + $0x8] sm:$0xff] %vm571, %v721
      %738 = vst.msk [vmem:[#allocation4 + $0x10] sm:$0xff] %vm571, %v723
      %739 = vst.msk [vmem:[#allocation4 + $0x18] sm:$0xff] %vm571, %v725
      %740 = vst.msk [vmem:[#allocation4 + $0x20] sm:$0xff] %vm571, %v727
      %741 = vst.msk [vmem:[#allocation4 + $0x28] sm:$0xff] %vm571, %v729
      %v742 = vld [vmem:[#allocation2 + $0x2] sm:$0xff]
      %v743 = vld [vmem:[#allocation2 + $0xa] sm:$0xff]
      %v744 = vld [vmem:[#allocation2 + $0x1a] sm:$0xff]
      %v745 = vld [vmem:[#allocation2 + $0x22] sm:$0xff]
      %v746 = vld [vmem:[#allocation2 + $0x32] sm:$0xff]
      %v747 = vld [vmem:[#allocation2 + $0x3a] sm:$0xff]
      %754 = vrot.lane.b32.xlu0 %v742, 16
      %v755 = vpop.permute.xlu0 %754
      %756 = vrot.lane.b32.xlu0 %v743, 16
      %v757 = vpop.permute.xlu0 %756
      %758 = vrot.lane.b32.xlu0 %v744, 16
      %v759 = vpop.permute.xlu0 %758
      %760 = vrot.lane.b32.xlu0 %v745, 16
      %v761 = vpop.permute.xlu0 %760
      %762 = vrot.lane.b32.xlu0 %v746, 16
      %v763 = vpop.permute.xlu0 %762
      %764 = vrot.lane.b32.xlu0 %v747, 16
      %v765 = vpop.permute.xlu0 %764
      %772 = vst.msk [vmem:[#allocation4] sm:$0xff] %vm585, %v755
      %773 = vst.msk [vmem:[#allocation4 + $0x8] sm:$0xff] %vm585, %v757
      %774 = vst.msk [vmem:[#allocation4 + $0x10] sm:$0xff] %vm585, %v759
      %775 = vst.msk [vmem:[#allocation4 + $0x18] sm:$0xff] %vm585, %v761
      %776 = vst.msk [vmem:[#allocation4 + $0x20] sm:$0xff] %vm585, %v763
      %777 = vst.msk [vmem:[#allocation4 + $0x28] sm:$0xff] %vm585, %v765
      %v778 = vld [vmem:[#allocation2 + $0x3] sm:$0xff]
      %v779 = vld [vmem:[#allocation2 + $0xb] sm:$0xff]
      %v780 = vld [vmem:[#allocation2 + $0x1b] sm:$0xff]
      %v781 = vld [vmem:[#allocation2 + $0x23] sm:$0xff]
      %v782 = vld [vmem:[#allocation2 + $0x33] sm:$0xff]
      %v783 = vld [vmem:[#allocation2 + $0x3b] sm:$0xff]
      %790 = vrot.lane.b32.xlu0 %v778, 24
      %v791 = vpop.permute.xlu0 %790
      %792 = vrot.lane.b32.xlu0 %v779, 24
      %v793 = vpop.permute.xlu0 %792
      %794 = vrot.lane.b32.xlu0 %v780, 24
      %v795 = vpop.permute.xlu0 %794
      %796 = vrot.lane.b32.xlu0 %v781, 24
      %v797 = vpop.permute.xlu0 %796
      %798 = vrot.lane.b32.xlu0 %v782, 24
      %v799 = vpop.permute.xlu0 %798
      %800 = vrot.lane.b32.xlu0 %v783, 24
      %v801 = vpop.permute.xlu0 %800
      %vm808 = vcmask 261312
      %809 = vst.msk [vmem:[#allocation4] sm:$0xff] %vm808, %v791
      %810 = vst.msk [vmem:[#allocation4 + $0x8] sm:$0xff] %vm808, %v793
      %811 = vst.msk [vmem:[#allocation4 + $0x10] sm:$0xff] %vm808, %v795
      %812 = vst.msk [vmem:[#allocation4 + $0x18] sm:$0xff] %vm808, %v797
      %813 = vst.msk [vmem:[#allocation4 + $0x20] sm:$0xff] %vm808, %v799
      %814 = vst.msk [vmem:[#allocation4 + $0x28] sm:$0xff] %vm808, %v801
      %v815 = vld [vmem:[#allocation2 + $0x4] sm:$0xff]
      %v816 = vld [vmem:[#allocation2 + $0xc] sm:$0xff]
      %v817 = vld [vmem:[#allocation2 + $0x1c] sm:$0xff]
      %v818 = vld [vmem:[#allocation2 + $0x24] sm:$0xff]
      %v819 = vld [vmem:[#allocation2 + $0x34] sm:$0xff]
      %v820 = vld [vmem:[#allocation2 + $0x3c] sm:$0xff]
      %827 = vrot.lane.b32.xlu0 %v815, 32
      %v828 = vpop.permute.xlu0 %827
      %829 = vrot.lane.b32.xlu0 %v816, 32
      %v830 = vpop.permute.xlu0 %829
      %831 = vrot.lane.b32.xlu0 %v817, 32
      %v832 = vpop.permute.xlu0 %831
      %833 = vrot.lane.b32.xlu0 %v818, 32
      %v834 = vpop.permute.xlu0 %833
      %835 = vrot.lane.b32.xlu0 %v819, 32
      %v836 = vpop.permute.xlu0 %835
      %837 = vrot.lane.b32.xlu0 %v820, 32
      %v838 = vpop.permute.xlu0 %837
      %vm845 = vcmask 326912
      %846 = vst.msk [vmem:[#allocation4] sm:$0xff] %vm845, %v828
      %847 = vst.msk [vmem:[#allocation4 + $0x8] sm:$0xff] %vm845, %v830
      %848 = vst.msk [vmem:[#allocation4 + $0x10] sm:$0xff] %vm845, %v832
      %849 = vst.msk [vmem:[#allocation4 + $0x18] sm:$0xff] %vm845, %v834
      %850 = vst.msk [vmem:[#allocation4 + $0x20] sm:$0xff] %vm845, %v836
      %851 = vst.msk [vmem:[#allocation4 + $0x28] sm:$0xff] %vm845, %v838
      %v852 = vld [vmem:[#allocation2 + $0x5] sm:$0xff]
      %v853 = vld [vmem:[#allocation2 + $0xd] sm:$0xff]
      %v854 = vld [vmem:[#allocation2 + $0x1d] sm:$0xff]
      %v855 = vld [vmem:[#allocation2 + $0x25] sm:$0xff]
      %v856 = vld [vmem:[#allocation2 + $0x35] sm:$0xff]
      %v857 = vld [vmem:[#allocation2 + $0x3d] sm:$0xff]
      %864 = vrot.lane.b32.xlu0 %v852, 40
      %v865 = vpop.permute.xlu0 %864
      %866 = vrot.lane.b32.xlu0 %v853, 40
      %v867 = vpop.permute.xlu0 %866
      %868 = vrot.lane.b32.xlu0 %v854, 40
      %v869 = vpop.permute.xlu0 %868
      %870 = vrot.lane.b32.xlu0 %v855, 40
      %v871 = vpop.permute.xlu0 %870
      %872 = vrot.lane.b32.xlu0 %v856, 40
      %v873 = vpop.permute.xlu0 %872
      %874 = vrot.lane.b32.xlu0 %v857, 40
      %v875 = vpop.permute.xlu0 %874
      %vm882 = vcmask 392512
      %883 = vst.msk [vmem:[#allocation4] sm:$0xff] %vm882, %v865
      %884 = vst.msk [vmem:[#allocation4 + $0x8] sm:$0xff] %vm882, %v867
      %885 = vst.msk [vmem:[#allocation4 + $0x10] sm:$0xff] %vm882, %v869
      %886 = vst.msk [vmem:[#allocation4 + $0x18] sm:$0xff] %vm882, %v871
      %887 = vst.msk [vmem:[#allocation4 + $0x20] sm:$0xff] %vm882, %v873
      %888 = vst.msk [vmem:[#allocation4 + $0x28] sm:$0xff] %vm882, %v875
      %v889 = vld [vmem:[#allocation2 + $0x6] sm:$0xff]
      %v890 = vld [vmem:[#allocation2 + $0xe] sm:$0xff]
      %v891 = vld [vmem:[#allocation2 + $0x1e] sm:$0xff]
      %v892 = vld [vmem:[#allocation2 + $0x26] sm:$0xff]
      %v893 = vld [vmem:[#allocation2 + $0x36] sm:$0xff]
      %v894 = vld [vmem:[#allocation2 + $0x3e] sm:$0xff]
      %901 = vrot.lane.b32.xlu0 %v889, 48
      %v902 = vpop.permute.xlu0 %901
      %903 = vrot.lane.b32.xlu0 %v890, 48
      %v904 = vpop.permute.xlu0 %903
      %905 = vrot.lane.b32.xlu0 %v891, 48
      %v906 = vpop.permute.xlu0 %905
      %907 = vrot.lane.b32.xlu0 %v892, 48
      %v908 = vpop.permute.xlu0 %907
      %909 = vrot.lane.b32.xlu0 %v893, 48
      %v910 = vpop.permute.xlu0 %909
      %911 = vrot.lane.b32.xlu0 %v894, 48
      %v912 = vpop.permute.xlu0 %911
      %vm919 = vcmask 458112
      %920 = vst.msk [vmem:[#allocation4] sm:$0xff] %vm919, %v902
      %921 = vst.msk [vmem:[#allocation4 + $0x8] sm:$0xff] %vm919, %v904
      %922 = vst.msk [vmem:[#allocation4 + $0x10] sm:$0xff] %vm919, %v906
      %923 = vst.msk [vmem:[#allocation4 + $0x18] sm:$0xff] %vm919, %v908
      %924 = vst.msk [vmem:[#allocation4 + $0x20] sm:$0xff] %vm919, %v910
      %925 = vst.msk [vmem:[#allocation4 + $0x28] sm:$0xff] %vm919, %v912
      %v926 = vld [vmem:[#allocation4] sm:$0xff]
      %v927 = vld [vmem:[#allocation4 + $0x8] sm:$0xff]
      %v928 = vld [vmem:[#allocation4 + $0x10] sm:$0xff]
      %v929 = vld [vmem:[#allocation4 + $0x18] sm:$0xff]
      %v930 = vld [vmem:[#allocation4 + $0x20] sm:$0xff]
      %v931 = vld [vmem:[#allocation4 + $0x28] sm:$0xff]
      %v933 = vlaneseq
      %v934 = vshrl.u32 %v933, 7
      %v935 = vsub.s32 0, %v934
      %v936 = vrot.slane %v545, %v935
      %vm938 = vcmask 457728
      %v940 = vsel %vm938, %v926, 0
      %v943 = vsel %vm938, %v927, 0
      %v946 = vsel %vm938, %v928, 0
      %v949 = vsel %vm938, %v929, 0
      %v952 = vsel %vm938, %v930, 0
      %v955 = vsel %vm938, %v931, 0
      %957 = vmatprep.subr.mxu0 0.0
      %958 = vmatpush1.msra.mxu0 %v538
      %959 = vmatprep.subr.mxu0 0.0
      %960 = vmatpush1.msra.mxu0 %v539
      %961 = vmatprep.subr.mxu0 0.0
      %962 = vmatpush1.msra.mxu0 %v540
      %963 = vmatprep.subr.mxu0 0.0
      %964 = vmatpush1.msra.mxu0 %v541
      %965 = vmatprep.subr.mxu0 0.0
      %966 = vmatpush1.msra.mxu0 %v542
      %967 = vmatprep.subr.mxu0 0.0
      %968 = vmatpush1.msra.mxu0 %v543
      %969 = vmatprep.subr.mxu0 0.0
      %970 = vmatpush1.msra.mxu0 %v544
      %971 = vmatprep.subr.mxu0 0.0
      %972 = vmatpush1.msra.mxu0 0.0
      %973 = vmatprep.subr.mxu0 0.0
      %974 = vmatpush1.msra.mxu0 0.0
      %975 = vmatprep.subr.mxu0 0.0
      %976 = vmatpush1.msra.mxu0 0.0
      %977 = vmatprep.subr.mxu0 0.0
      %978 = vmatpush1.msra.mxu0 0.0
      %979 = vmatprep.subr.mxu0 0.0
      %980 = vmatpush1.msra.mxu0 0.0
      %981 = vmatprep.subr.mxu0 0.0
      %982 = vmatpush1.msra.mxu0 0.0
      %983 = vmatprep.subr.mxu0 0.0
      %984 = vmatpush1.msra.mxu0 0.0
      %985 = vmatprep.subr.mxu0 0.0
      %986 = vmatpush1.msra.mxu0 0.0
      %987 = vmatprep.subr.mxu0 0.0
      %988 = vmatpush1.msra.mxu0 0.0
      %989 = vmatprep.subr.mxu0 0.0
      %990 = vmatpush1.msra.mxu0 0.0
      %991 = vmatprep.subr.mxu0 0.0
      %992 = vmatpush1.msra.mxu0 0.0
      %993 = vmatprep.subr.mxu0 0.0
      %994 = vmatpush1.msra.mxu0 0.0
      %995 = vmatprep.subr.mxu0 0.0
      %996 = vmatpush1.msra.mxu0 0.0
      %997 = vmatprep.subr.mxu0 0.0
      %998 = vmatpush1.msra.mxu0 0.0
      %999 = vmatprep.subr.mxu0 0.0
      %1000 = vmatpush1.msra.mxu0 0.0
      %1001 = vmatprep.subr.mxu0 0.0
      %1002 = vmatpush1.msra.mxu0 0.0
      %1003 = vmatprep.subr.mxu0 0.0
      %1004 = vmatpush1.msra.mxu0 0.0
      %1005 = vmatprep.subr.mxu0 0.0
      %1006 = vmatpush1.msra.mxu0 0.0
      %1007 = vmatprep.subr.mxu0 0.0
      %1008 = vmatpush1.msra.mxu0 0.0
      %1009 = vmatprep.subr.mxu0 0.0
      %1010 = vmatpush1.msra.mxu0 0.0
      %1011 = vmatprep.subr.mxu0 0.0
      %1012 = vmatpush1.msra.mxu0 0.0
      %1013 = vmatprep.subr.mxu0 0.0
      %1014 = vmatpush1.msra.mxu0 0.0
      %1015 = vmatprep.subr.mxu0 0.0
      %1016 = vmatpush1.msra.mxu0 0.0
      %1017 = vmatprep.subr.mxu0 0.0
      %1018 = vmatpush1.msra.mxu0 0.0
      %1019 = vmatprep.subr.mxu0 0.0
      %1020 = vmatpush1.msra.mxu0 0.0
      %1021 = vmatprep.mubr.f32.mxu0 0.0
      %1022 = vmatmul.mubr.f32.gmra.mrb[0].mxu0 %v940
      %v1023 = vpop.f32.mrb[0].mxu0
      %v1024 = vadd.f32 %v936, %v1023
      %v1025 = vpop.f32.mrb[0].mxu0
      %1026 = vmatprep.mubr.f32.mxu0 0.0
      %1027 = vmatmul.mubr.f32.gmra.mrb[0].mxu0 %v943
      %v1028 = vpop.f32.mrb[0].mxu0
      %v1029 = vadd.f32 %v936, %v1028
      %v1030 = vpop.f32.mrb[0].mxu0
      %1031 = vmatprep.mubr.f32.mxu0 0.0
      %1032 = vmatmul.mubr.f32.gmra.mrb[0].mxu0 %v946
      %v1033 = vpop.f32.mrb[0].mxu0
      %v1034 = vadd.f32 %v936, %v1033
      %v1035 = vpop.f32.mrb[0].mxu0
      %1036 = vmatprep.mubr.f32.mxu0 0.0
      %1037 = vmatmul.mubr.f32.gmra.mrb[0].mxu0 %v949
      %v1038 = vpop.f32.mrb[0].mxu0
      %v1039 = vadd.f32 %v936, %v1038
      %v1040 = vpop.f32.mrb[0].mxu0
      %1041 = vmatprep.mubr.f32.mxu0 0.0
      %1042 = vmatmul.mubr.f32.gmra.mrb[0].mxu0 %v952
      %v1043 = vpop.f32.mrb[0].mxu0
      %v1044 = vadd.f32 %v936, %v1043
      %v1045 = vpop.f32.mrb[0].mxu0
      %1046 = vmatprep.mubr.f32.mxu0 0.0
      %1047 = vmatmul.mubr.f32.gmra.mrb[0].mxu0 %v955
      %v1048 = vpop.f32.mrb[0].mxu0
      %v1049 = vadd.f32 %v936, %v1048
      %v1050 = vpop.f32.mrb[0].mxu0
      %1051 = vdwg.mxu0
      %v1052 = vmax.f32 %v1024, 0.0
      %v1053 = vmax.f32 %v1029, 0.0
      %v1054 = vmax.f32 %v1034, 0.0
      %v1055 = vmax.f32 %v1039, 0.0
      %v1056 = vmax.f32 %v1044, 0.0
      %v1057 = vmax.f32 %v1049, 0.0
      %v1058 = vadd.f32 %v678, %v1052
      %v1059 = vadd.f32 %v679, %v1053
      %v1060 = vadd.f32 %v683, %v1054
      %v1061 = vadd.f32 %v685, %v1055
      %v1062 = vadd.f32 %v689, %v1056
      %v1063 = vadd.f32 %v691, %v1057
      %s1064 = scalar_lea.vmem [#allocation3], 24
      %1065 = vst.msk [vmem:[%s1064 + $0x1] sm:$0xff] %vm502, %v1058
      %1066 = vst.msk [vmem:[%s1064 + $0x9] sm:$0xff] %vm502, %v1059
      %1067 = vst.msk [vmem:[%s1064 + $0x19] sm:$0xff] %vm502, %v1060
      %1068 = vst.msk [vmem:[%s1064 + $0x21] sm:$0xff] %vm502, %v1061
      %1069 = vst.msk [vmem:[%s1064 + $0x31] sm:$0xff] %vm502, %v1062
      %1070 = vst.msk [vmem:[%s1064 + $0x39] sm:$0xff] %vm502, %v1063
      %v1071 = vld [vmem:[#allocation3] sm:$0xff]
      %v1072 = vld [vmem:[#allocation3 + $0x8] sm:$0xff]
      %v1073 = vld [vmem:[#allocation3 + $0x18] sm:$0xff]
      %v1074 = vld [vmem:[#allocation3 + $0x20] sm:$0xff]
      %v1075 = vld [vmem:[#allocation3 + $0x30] sm:$0xff]
      %v1076 = vld [vmem:[#allocation3 + $0x38] sm:$0xff]
      %1077 = vst.msk [vmem:[#allocation4] sm:$0xff] %vm502, %v1071
      %1078 = vst.msk [vmem:[#allocation4 + $0x8] sm:$0xff] %vm502, %v1072
      %1079 = vst.msk [vmem:[#allocation4 + $0x10] sm:$0xff] %vm502, %v1073
      %1080 = vst.msk [vmem:[#allocation4 + $0x18] sm:$0xff] %vm502, %v1074
      %1081 = vst.msk [vmem:[#allocation4 + $0x20] sm:$0xff] %vm502, %v1075
      %1082 = vst.msk [vmem:[#allocation4 + $0x28] sm:$0xff] %vm502, %v1076
      %v1083 = vld [vmem:[#allocation3 + $0x1] sm:$0xff]
      %v1084 = vld [vmem:[#allocation3 + $0x9] sm:$0xff]
      %v1085 = vld [vmem:[#allocation3 + $0x19] sm:$0xff]
      %v1086 = vld [vmem:[#allocation3 + $0x21] sm:$0xff]
      %v1087 = vld [vmem:[#allocation3 + $0x31] sm:$0xff]
      %v1088 = vld [vmem:[#allocation3 + $0x39] sm:$0xff]
      %1095 = vrot.lane.b32.xlu0 %v1083, 8
      %v1096 = vpop.permute.xlu0 %1095
      %1097 = vrot.lane.b32.xlu0 %v1084, 8
      %v1098 = vpop.permute.xlu0 %1097
      %1099 = vrot.lane.b32.xlu0 %v1085, 8
      %v1100 = vpop.permute.xlu0 %1099
      %1101 = vrot.lane.b32.xlu0 %v1086, 8
      %v1102 = vpop.permute.xlu0 %1101
      %1103 = vrot.lane.b32.xlu0 %v1087, 8
      %v1104 = vpop.permute.xlu0 %1103
      %1105 = vrot.lane.b32.xlu0 %v1088, 8
      %v1106 = vpop.permute.xlu0 %1105
      %1113 = vst.msk [vmem:[#allocation4] sm:$0xff] %vm571, %v1096
      %1114 = vst.msk [vmem:[#allocation4 + $0x8] sm:$0xff] %vm571, %v1098
      %1115 = vst.msk [vmem:[#allocation4 + $0x10] sm:$0xff] %vm571, %v1100
      %1116 = vst.msk [vmem:[#allocation4 + $0x18] sm:$0xff] %vm571, %v1102
      %1117 = vst.msk [vmem:[#allocation4 + $0x20] sm:$0xff] %vm571, %v1104
      %1118 = vst.msk [vmem:[#allocation4 + $0x28] sm:$0xff] %vm571, %v1106
      %v1119 = vld [vmem:[#allocation3 + $0x2] sm:$0xff]
      %v1120 = vld [vmem:[#allocation3 + $0xa] sm:$0xff]
      %v1121 = vld [vmem:[#allocation3 + $0x1a] sm:$0xff]
      %v1122 = vld [vmem:[#allocation3 + $0x22] sm:$0xff]
      %v1123 = vld [vmem:[#allocation3 + $0x32] sm:$0xff]
      %v1124 = vld [vmem:[#allocation3 + $0x3a] sm:$0xff]
      %1131 = vrot.lane.b32.xlu0 %v1119, 16
      %v1132 = vpop.permute.xlu0 %1131
      %1133 = vrot.lane.b32.xlu0 %v1120, 16
      %v1134 = vpop.permute.xlu0 %1133
      %1135 = vrot.lane.b32.xlu0 %v1121, 16
      %v1136 = vpop.permute.xlu0 %1135
      %1137 = vrot.lane.b32.xlu0 %v1122, 16
      %v1138 = vpop.permute.xlu0 %1137
      %1139 = vrot.lane.b32.xlu0 %v1123, 16
      %v1140 = vpop.permute.xlu0 %1139
      %1141 = vrot.lane.b32.xlu0 %v1124, 16
      %v1142 = vpop.permute.xlu0 %1141
      %1149 = vst.msk [vmem:[#allocation4] sm:$0xff] %vm585, %v1132
      %1150 = vst.msk [vmem:[#allocation4 + $0x8] sm:$0xff] %vm585, %v1134
      %1151 = vst.msk [vmem:[#allocation4 + $0x10] sm:$0xff] %vm585, %v1136
      %1152 = vst.msk [vmem:[#allocation4 + $0x18] sm:$0xff] %vm585, %v1138
      %1153 = vst.msk [vmem:[#allocation4 + $0x20] sm:$0xff] %vm585, %v1140
      %1154 = vst.msk [vmem:[#allocation4 + $0x28] sm:$0xff] %vm585, %v1142
      %v1155 = vld [vmem:[%s1064] sm:$0xff]
      %v1156 = vld [vmem:[%s1064 + $0x8] sm:$0xff]
      %v1157 = vld [vmem:[%s1064 + $0x18] sm:$0xff]
      %v1158 = vld [vmem:[%s1064 + $0x20] sm:$0xff]
      %v1159 = vld [vmem:[%s1064 + $0x30] sm:$0xff]
      %v1160 = vld [vmem:[%s1064 + $0x38] sm:$0xff]
      %1167 = vrot.lane.b32.xlu0 %v1155, 24
      %v1168 = vpop.permute.xlu0 %1167
      %1169 = vrot.lane.b32.xlu0 %v1156, 24
      %v1170 = vpop.permute.xlu0 %1169
      %1171 = vrot.lane.b32.xlu0 %v1157, 24
      %v1172 = vpop.permute.xlu0 %1171
      %1173 = vrot.lane.b32.xlu0 %v1158, 24
      %v1174 = vpop.permute.xlu0 %1173
      %1175 = vrot.lane.b32.xlu0 %v1159, 24
      %v1176 = vpop.permute.xlu0 %1175
      %1177 = vrot.lane.b32.xlu0 %v1160, 24
      %v1178 = vpop.permute.xlu0 %1177
      %1185 = vst.msk [vmem:[#allocation4] sm:$0xff] %vm808, %v1168
      %1186 = vst.msk [vmem:[#allocation4 + $0x8] sm:$0xff] %vm808, %v1170
      %1187 = vst.msk [vmem:[#allocation4 + $0x10] sm:$0xff] %vm808, %v1172
      %1188 = vst.msk [vmem:[#allocation4 + $0x18] sm:$0xff] %vm808, %v1174
      %1189 = vst.msk [vmem:[#allocation4 + $0x20] sm:$0xff] %vm808, %v1176
      %1190 = vst.msk [vmem:[#allocation4 + $0x28] sm:$0xff] %vm808, %v1178
      %v1191 = vld [vmem:[%s1064 + $0x1] sm:$0xff]
      %v1192 = vld [vmem:[%s1064 + $0x9] sm:$0xff]
      %v1193 = vld [vmem:[%s1064 + $0x19] sm:$0xff]
      %v1194 = vld [vmem:[%s1064 + $0x21] sm:$0xff]
      %v1195 = vld [vmem:[%s1064 + $0x31] sm:$0xff]
      %v1196 = vld [vmem:[%s1064 + $0x39] sm:$0xff]
      %1203 = vrot.lane.b32.xlu0 %v1191, 32
      %v1204 = vpop.permute.xlu0 %1203
      %1205 = vrot.lane.b32.xlu0 %v1192, 32
      %v1206 = vpop.permute.xlu0 %1205
      %1207 = vrot.lane.b32.xlu0 %v1193, 32
      %v1208 = vpop.permute.xlu0 %1207
      %1209 = vrot.lane.b32.xlu0 %v1194, 32
      %v1210 = vpop.permute.xlu0 %1209
      %1211 = vrot.lane.b32.xlu0 %v1195, 32
      %v1212 = vpop.permute.xlu0 %1211
      %1213 = vrot.lane.b32.xlu0 %v1196, 32
      %v1214 = vpop.permute.xlu0 %1213
      %1221 = vst.msk [vmem:[#allocation4] sm:$0xff] %vm845, %v1204
      %1222 = vst.msk [vmem:[#allocation4 + $0x8] sm:$0xff] %vm845, %v1206
      %1223 = vst.msk [vmem:[#allocation4 + $0x10] sm:$0xff] %vm845, %v1208
      %1224 = vst.msk [vmem:[#allocation4 + $0x18] sm:$0xff] %vm845, %v1210
      %1225 = vst.msk [vmem:[#allocation4 + $0x20] sm:$0xff] %vm845, %v1212
      %1226 = vst.msk [vmem:[#allocation4 + $0x28] sm:$0xff] %vm845, %v1214
      %v1227 = vld [vmem:[%s1064 + $0x2] sm:$0xff]
      %v1228 = vld [vmem:[%s1064 + $0xa] sm:$0xff]
      %v1229 = vld [vmem:[%s1064 + $0x1a] sm:$0xff]
      %v1230 = vld [vmem:[%s1064 + $0x22] sm:$0xff]
      %v1231 = vld [vmem:[%s1064 + $0x32] sm:$0xff]
      %v1232 = vld [vmem:[%s1064 + $0x3a] sm:$0xff]
      %1239 = vrot.lane.b32.xlu0 %v1227, 40
      %v1240 = vpop.permute.xlu0 %1239
      %1241 = vrot.lane.b32.xlu0 %v1228, 40
      %v1242 = vpop.permute.xlu0 %1241
      %1243 = vrot.lane.b32.xlu0 %v1229, 40
      %v1244 = vpop.permute.xlu0 %1243
      %1245 = vrot.lane.b32.xlu0 %v1230, 40
      %v1246 = vpop.permute.xlu0 %1245
      %1247 = vrot.lane.b32.xlu0 %v1231, 40
      %v1248 = vpop.permute.xlu0 %1247
      %1249 = vrot.lane.b32.xlu0 %v1232, 40
      %v1250 = vpop.permute.xlu0 %1249
      %1257 = vst.msk [vmem:[#allocation4] sm:$0xff] %vm882, %v1240
      %1258 = vst.msk [vmem:[#allocation4 + $0x8] sm:$0xff] %vm882, %v1242
      %1259 = vst.msk [vmem:[#allocation4 + $0x10] sm:$0xff] %vm882, %v1244
      %1260 = vst.msk [vmem:[#allocation4 + $0x18] sm:$0xff] %vm882, %v1246
      %1261 = vst.msk [vmem:[#allocation4 + $0x20] sm:$0xff] %vm882, %v1248
      %1262 = vst.msk [vmem:[#allocation4 + $0x28] sm:$0xff] %vm882, %v1250
      %s1263 = scalar_lea.vmem [#allocation3], 48
      %v1264 = vld [vmem:[%s1263] sm:$0xff]
      %v1265 = vld [vmem:[%s1263 + $0x8] sm:$0xff]
      %v1266 = vld [vmem:[%s1263 + $0x18] sm:$0xff]
      %v1267 = vld [vmem:[%s1263 + $0x20] sm:$0xff]
      %v1268 = vld [vmem:[%s1263 + $0x30] sm:$0xff]
      %v1269 = vld [vmem:[%s1263 + $0x38] sm:$0xff]
      %1276 = vrot.lane.b32.xlu0 %v1264, 48
      %v1277 = vpop.permute.xlu0 %1276
      %1278 = vrot.lane.b32.xlu0 %v1265, 48
      %v1279 = vpop.permute.xlu0 %1278
      %1280 = vrot.lane.b32.xlu0 %v1266, 48
      %v1281 = vpop.permute.xlu0 %1280
      %1282 = vrot.lane.b32.xlu0 %v1267, 48
      %v1283 = vpop.permute.xlu0 %1282
      %1284 = vrot.lane.b32.xlu0 %v1268, 48
      %v1285 = vpop.permute.xlu0 %1284
      %1286 = vrot.lane.b32.xlu0 %v1269, 48
      %v1287 = vpop.permute.xlu0 %1286
      %1294 = vst.msk [vmem:[#allocation4] sm:$0xff] %vm919, %v1277
      %1295 = vst.msk [vmem:[#allocation4 + $0x8] sm:$0xff] %vm919, %v1279
      %1296 = vst.msk [vmem:[#allocation4 + $0x10] sm:$0xff] %vm919, %v1281
      %1297 = vst.msk [vmem:[#allocation4 + $0x18] sm:$0xff] %vm919, %v1283
      %1298 = vst.msk [vmem:[#allocation4 + $0x20] sm:$0xff] %vm919, %v1285
      %1299 = vst.msk [vmem:[#allocation4 + $0x28] sm:$0xff] %vm919, %v1287
      %v1300 = vld [vmem:[%s1263 + $0x1] sm:$0xff]
      %v1301 = vld [vmem:[%s1263 + $0x9] sm:$0xff]
      %v1302 = vld [vmem:[%s1263 + $0x19] sm:$0xff]
      %v1303 = vld [vmem:[%s1263 + $0x21] sm:$0xff]
      %v1304 = vld [vmem:[%s1263 + $0x31] sm:$0xff]
      %v1305 = vld [vmem:[%s1263 + $0x39] sm:$0xff]
      %1312 = vrot.lane.b32.xlu0 %v1300, 56
      %v1313 = vpop.permute.xlu0 %1312
      %1314 = vrot.lane.b32.xlu0 %v1301, 56
      %v1315 = vpop.permute.xlu0 %1314
      %1316 = vrot.lane.b32.xlu0 %v1302, 56
      %v1317 = vpop.permute.xlu0 %1316
      %1318 = vrot.lane.b32.xlu0 %v1303, 56
      %v1319 = vpop.permute.xlu0 %1318
      %1320 = vrot.lane.b32.xlu0 %v1304, 56
      %v1321 = vpop.permute.xlu0 %1320
      %1322 = vrot.lane.b32.xlu0 %v1305, 56
      %v1323 = vpop.permute.xlu0 %1322
      %vm1330 = vcmask 523712
      %1331 = vst.msk [vmem:[#allocation4] sm:$0xff] %vm1330, %v1313
      %1332 = vst.msk [vmem:[#allocation4 + $0x8] sm:$0xff] %vm1330, %v1315
      %1333 = vst.msk [vmem:[#allocation4 + $0x10] sm:$0xff] %vm1330, %v1317
      %1334 = vst.msk [vmem:[#allocation4 + $0x18] sm:$0xff] %vm1330, %v1319
      %1335 = vst.msk [vmem:[#allocation4 + $0x20] sm:$0xff] %vm1330, %v1321
      %1336 = vst.msk [vmem:[#allocation4 + $0x28] sm:$0xff] %vm1330, %v1323
      %v1337 = vld [vmem:[%s1263 + $0x2] sm:$0xff]
      %v1338 = vld [vmem:[%s1263 + $0xa] sm:$0xff]
      %v1339 = vld [vmem:[%s1263 + $0x1a] sm:$0xff]
      %v1340 = vld [vmem:[%s1263 + $0x22] sm:$0xff]
      %v1341 = vld [vmem:[%s1263 + $0x32] sm:$0xff]
      %v1342 = vld [vmem:[%s1263 + $0x3a] sm:$0xff]
      %1349 = vrot.lane.b32.xlu0 %v1337, 64
      %v1350 = vpop.permute.xlu0 %1349
      %1351 = vrot.lane.b32.xlu0 %v1338, 64
      %v1352 = vpop.permute.xlu0 %1351
      %1353 = vrot.lane.b32.xlu0 %v1339, 64
      %v1354 = vpop.permute.xlu0 %1353
      %1355 = vrot.lane.b32.xlu0 %v1340, 64
      %v1356 = vpop.permute.xlu0 %1355
      %1357 = vrot.lane.b32.xlu0 %v1341, 64
      %v1358 = vpop.permute.xlu0 %1357
      %1359 = vrot.lane.b32.xlu0 %v1342, 64
      %v1360 = vpop.permute.xlu0 %1359
      %vm1367 = vcmask 589312
      %1368 = vst.msk [vmem:[#allocation4] sm:$0xff] %vm1367, %v1350
      %1369 = vst.msk [vmem:[#allocation4 + $0x8] sm:$0xff] %vm1367, %v1352
      %1370 = vst.msk [vmem:[#allocation4 + $0x10] sm:$0xff] %vm1367, %v1354
      %1371 = vst.msk [vmem:[#allocation4 + $0x18] sm:$0xff] %vm1367, %v1356
      %1372 = vst.msk [vmem:[#allocation4 + $0x20] sm:$0xff] %vm1367, %v1358
      %1373 = vst.msk [vmem:[#allocation4 + $0x28] sm:$0xff] %vm1367, %v1360
      %v1374 = vld [vmem:[#allocation4] sm:$0xff]
      %v1375 = vld [vmem:[#allocation4 + $0x8] sm:$0xff]
      %v1376 = vld [vmem:[#allocation4 + $0x10] sm:$0xff]
      %v1377 = vld [vmem:[#allocation4 + $0x18] sm:$0xff]
      %v1378 = vld [vmem:[#allocation4 + $0x20] sm:$0xff]
      %v1379 = vld [vmem:[#allocation4 + $0x28] sm:$0xff]
      %v1381 = vlaneseq
      %v1382 = vshrl.u32 %v1381, 7
      %v1383 = vsub.s32 0, %v1382
      %v1384 = vrot.slane %v555, %v1383
      %vm1386 = vcmask 588800
      %v1388 = vsel %vm1386, %v1374, 0
      %v1391 = vsel %vm1386, %v1375, 0
      %v1394 = vsel %vm1386, %v1376, 0
      %v1397 = vsel %vm1386, %v1377, 0
      %v1400 = vsel %vm1386, %v1378, 0
      %v1403 = vsel %vm1386, %v1379, 0
      %1405 = vmatprep.subr.mxu0 0.0
      %1406 = vmatpush1.msra.mxu0 %v546
      %1407 = vmatprep.subr.mxu0 0.0
      %1408 = vmatpush1.msra.mxu0 %v547
      %1409 = vmatprep.subr.mxu0 0.0
      %1410 = vmatpush1.msra.mxu0 %v548
      %1411 = vmatprep.subr.mxu0 0.0
      %1412 = vmatpush1.msra.mxu0 %v549
      %1413 = vmatprep.subr.mxu0 0.0
      %1414 = vmatpush1.msra.mxu0 %v550
      %1415 = vmatprep.subr.mxu0 0.0
      %1416 = vmatpush1.msra.mxu0 %v551
      %1417 = vmatprep.subr.mxu0 0.0
      %1418 = vmatpush1.msra.mxu0 %v552
      %1419 = vmatprep.subr.mxu0 0.0
      %1420 = vmatpush1.msra.mxu0 %v553
      %1421 = vmatprep.subr.mxu0 0.0
      %1422 = vmatpush1.msra.mxu0 %v554
      %1423 = vmatprep.subr.mxu0 0.0
      %1424 = vmatpush1.msra.mxu0 0.0
      %1425 = vmatprep.subr.mxu0 0.0
      %1426 = vmatpush1.msra.mxu0 0.0
      %1427 = vmatprep.subr.mxu0 0.0
      %1428 = vmatpush1.msra.mxu0 0.0
      %1429 = vmatprep.subr.mxu0 0.0
      %1430 = vmatpush1.msra.mxu0 0.0
      %1431 = vmatprep.subr.mxu0 0.0
      %1432 = vmatpush1.msra.mxu0 0.0
      %1433 = vmatprep.subr.mxu0 0.0
      %1434 = vmatpush1.msra.mxu0 0.0
      %1435 = vmatprep.subr.mxu0 0.0
      %1436 = vmatpush1.msra.mxu0 0.0
      %1437 = vmatprep.subr.mxu0 0.0
      %1438 = vmatpush1.msra.mxu0 0.0
      %1439 = vmatprep.subr.mxu0 0.0
      %1440 = vmatpush1.msra.mxu0 0.0
      %1441 = vmatprep.subr.mxu0 0.0
      %1442 = vmatpush1.msra.mxu0 0.0
      %1443 = vmatprep.subr.mxu0 0.0
      %1444 = vmatpush1.msra.mxu0 0.0
      %1445 = vmatprep.subr.mxu0 0.0
      %1446 = vmatpush1.msra.mxu0 0.0
      %1447 = vmatprep.subr.mxu0 0.0
      %1448 = vmatpush1.msra.mxu0 0.0
      %1449 = vmatprep.subr.mxu0 0.0
      %1450 = vmatpush1.msra.mxu0 0.0
      %1451 = vmatprep.subr.mxu0 0.0
      %1452 = vmatpush1.msra.mxu0 0.0
      %1453 = vmatprep.subr.mxu0 0.0
      %1454 = vmatpush1.msra.mxu0 0.0
      %1455 = vmatprep.subr.mxu0 0.0
      %1456 = vmatpush1.msra.mxu0 0.0
      %1457 = vmatprep.subr.mxu0 0.0
      %1458 = vmatpush1.msra.mxu0 0.0
      %1459 = vmatprep.subr.mxu0 0.0
      %1460 = vmatpush1.msra.mxu0 0.0
      %1461 = vmatprep.subr.mxu0 0.0
      %1462 = vmatpush1.msra.mxu0 0.0
      %1463 = vmatprep.subr.mxu0 0.0
      %1464 = vmatpush1.msra.mxu0 0.0
      %1465 = vmatprep.subr.mxu0 0.0
      %1466 = vmatpush1.msra.mxu0 0.0
      %1467 = vmatprep.subr.mxu0 0.0
      %1468 = vmatpush1.msra.mxu0 0.0
      %1469 = vmatprep.mubr.f32.mxu0 0.0
      %1470 = vmatmul.mubr.f32.gmra.mrb[0].mxu0 %v1388
      %v1471 = vpop.f32.mrb[0].mxu0
      %v1472 = vadd.f32 %v1384, %v1471
      %v1473 = vpop.f32.mrb[0].mxu0
      %1474 = vmatprep.mubr.f32.mxu0 0.0
      %1475 = vmatmul.mubr.f32.gmra.mrb[0].mxu0 %v1391
      %v1476 = vpop.f32.mrb[0].mxu0
      %v1477 = vadd.f32 %v1384, %v1476
      %v1478 = vpop.f32.mrb[0].mxu0
      %1479 = vmatprep.mubr.f32.mxu0 0.0
      %1480 = vmatmul.mubr.f32.gmra.mrb[0].mxu0 %v1394
      %v1481 = vpop.f32.mrb[0].mxu0
      %v1482 = vadd.f32 %v1384, %v1481
      %v1483 = vpop.f32.mrb[0].mxu0
      %1484 = vmatprep.mubr.f32.mxu0 0.0
      %1485 = vmatmul.mubr.f32.gmra.mrb[0].mxu0 %v1397
      %v1486 = vpop.f32.mrb[0].mxu0
      %v1487 = vadd.f32 %v1384, %v1486
      %v1488 = vpop.f32.mrb[0].mxu0
      %1489 = vmatprep.mubr.f32.mxu0 0.0
      %1490 = vmatmul.mubr.f32.gmra.mrb[0].mxu0 %v1400
      %v1491 = vpop.f32.mrb[0].mxu0
      %v1492 = vadd.f32 %v1384, %v1491
      %v1493 = vpop.f32.mrb[0].mxu0
      %1494 = vmatprep.mubr.f32.mxu0 0.0
      %1495 = vmatmul.mubr.f32.gmra.mrb[0].mxu0 %v1403
      %v1496 = vpop.f32.mrb[0].mxu0
      %v1497 = vadd.f32 %v1384, %v1496
      %v1498 = vpop.f32.mrb[0].mxu0
      %1499 = vdwg.mxu0
      %1506 = vrot.lane.b32.xlu0 %v1472, 8
      %v1507 = vpop.permute.xlu0 %1506
      %1508 = vrot.lane.b32.xlu0 %v1477, 8
      %v1509 = vpop.permute.xlu0 %1508
      %1510 = vrot.lane.b32.xlu0 %v1482, 8
      %v1511 = vpop.permute.xlu0 %1510
      %1512 = vrot.lane.b32.xlu0 %v1487, 8
      %v1513 = vpop.permute.xlu0 %1512
      %1514 = vrot.lane.b32.xlu0 %v1492, 8
      %v1515 = vpop.permute.xlu0 %1514
      %1516 = vrot.lane.b32.xlu0 %v1497, 8
      %v1517 = vpop.permute.xlu0 %1516
      %1524 = vst.msk [vmem:[#allocation2 + $0x3] sm:$0xff] %vm571, %v1507
      %1525 = vst.msk [vmem:[#allocation2 + $0xb] sm:$0xff] %vm571, %v1509
      %1526 = vst.msk [vmem:[#allocation2 + $0x1b] sm:$0xff] %vm571, %v1511
      %1527 = vst.msk [vmem:[#allocation2 + $0x23] sm:$0xff] %vm571, %v1513
      %1528 = vst.msk [vmem:[#allocation2 + $0x33] sm:$0xff] %vm571, %v1515
      %1529 = vst.msk [vmem:[#allocation2 + $0x3b] sm:$0xff] %vm571, %v1517
      %v1530 = vld [vmem:[%s7] sm:$0xff]
      %v1531 = vld [vmem:[%s7 + $0x8] sm:$0xff]
      %v1532 = vld [vmem:[%s7 + $0x10] sm:$0xff]
      %v1533 = vld [vmem:[%s7 + $0x18] sm:$0xff]
      %v1534 = vld [vmem:[%s7 + $0x20] sm:$0xff]
      %v1535 = vld [vmem:[%s7 + $0x28] sm:$0xff]
      %v1536 = vld [vmem:[%s8] sm:$0x1]
      %v1537 = vld [vmem:[%s9] sm:$0xff]
      %v1538 = vld [vmem:[%s9 + $0x8] sm:$0xff]
      %v1539 = vld [vmem:[%s9 + $0x10] sm:$0xff]
      %v1540 = vld [vmem:[%s9 + $0x18] sm:$0xff]
      %v1541 = vld [vmem:[%s9 + $0x20] sm:$0xff]
      %v1542 = vld [vmem:[%s9 + $0x28] sm:$0xff]
      %v1543 = vld [vmem:[%s9 + $0x30] sm:$0xff]
      %v1544 = vld [vmem:[%s9 + $0x38] sm:$0xff]
      %v1545 = vld [vmem:[%s9 + $0x40] sm:$0xff]
      %v1546 = vld [vmem:[%s9 + $0x48] sm:$0xff]
      %v1547 = vld [vmem:[%s9 + $0x50] sm:$0xff]
      %v1548 = vld [vmem:[%s9 + $0x58] sm:$0xff]
      %v1549 = vld [vmem:[%s9 + $0x60] sm:$0xff]
      %v1550 = vld [vmem:[%s9 + $0x68] sm:$0xff]
      %v1551 = vld [vmem:[%s10] sm:$0x1]
      %v1552 = vld [vmem:[%s11] sm:$0xff]
      %v1553 = vld [vmem:[%s11 + $0x8] sm:$0xff]
      %v1554 = vld [vmem:[%s11 + $0x10] sm:$0xff]
      %v1555 = vld [vmem:[%s11 + $0x18] sm:$0xff]
      %v1556 = vld [vmem:[%s11 + $0x20] sm:$0xff]
      %v1557 = vld [vmem:[%s11 + $0x28] sm:$0xff]
      %v1558 = vld [vmem:[%s11 + $0x30] sm:$0xff]
      %v1559 = vld [vmem:[%s11 + $0x38] sm:$0xff]
      %v1560 = vld [vmem:[%s11 + $0x40] sm:$0xff]
      %v1561 = vld [vmem:[%s12] sm:$0x1]
      %v1562 = vld [vmem:[#allocation2 + $0x3] sm:$0xff]
      %v1563 = vld [vmem:[#allocation2 + $0xb] sm:$0xff]
      %vm1564 = vcmask 130048
      %1565 = vst.msk [vmem:[#allocation4] sm:$0xff] %vm1564, %v1562
      %1566 = vst.msk [vmem:[#allocation4 + $0x8] sm:$0xff] %vm1564, %v1563
      %v1567 = vld [vmem:[%s560 + $0x3] sm:$0xff]
      %v1568 = vld [vmem:[%s560 + $0xb] sm:$0xff]
      %1571 = vrot.lane.b32.xlu0 %v1567, 16
      %v1572 = vpop.permute.xlu0 %1571
      %1573 = vrot.lane.b32.xlu0 %v1568, 16
      %v1574 = vpop.permute.xlu0 %1573
      %vm1577 = vcmask 261248
      %1578 = vst.msk [vmem:[#allocation4] sm:$0xff] %vm1577, %v1572
      %1579 = vst.msk [vmem:[#allocation4 + $0x8] sm:$0xff] %vm1577, %v1574
      %v1580 = vld [vmem:[%s574 + $0x3] sm:$0xff]
      %v1581 = vld [vmem:[%s574 + $0xb] sm:$0xff]
      %1584 = vrot.lane.b32.xlu0 %v1580, 32
      %v1585 = vpop.permute.xlu0 %1584
      %1586 = vrot.lane.b32.xlu0 %v1581, 32
      %v1587 = vpop.permute.xlu0 %1586
      %vm1590 = vcmask 392448
      %1591 = vst.msk [vmem:[#allocation4] sm:$0xff] %vm1590, %v1585
      %1592 = vst.msk [vmem:[#allocation4 + $0x8] sm:$0xff] %vm1590, %v1587
      %v1593 = vld [vmem:[#allocation4] sm:$0xff]
      %v1594 = vld [vmem:[#allocation4 + $0x8] sm:$0xff]
      %v1596 = vlaneseq
      %v1597 = vshrl.u32 %v1596, 7
      %v1598 = vsub.s32 0, %v1597
      %v1599 = vrot.slane %v1536, %v1598
      %vm1601 = vcmask 392192
      %v1603 = vsel %vm1601, %v1593, 0
      %v1606 = vsel %vm1601, %v1594, 0
      %1608 = vmatprep.subr.mxu0 0.0
      %1609 = vmatpush1.msra.mxu0 %v1530
      %1610 = vmatprep.subr.mxu0 0.0
      %1611 = vmatpush1.msra.mxu0 %v1531
      %1612 = vmatprep.subr.mxu0 0.0
      %1613 = vmatpush1.msra.mxu0 %v1532
      %1614 = vmatprep.subr.mxu0 0.0
      %1615 = vmatpush1.msra.mxu0 %v1533
      %1616 = vmatprep.subr.mxu0 0.0
      %1617 = vmatpush1.msra.mxu0 %v1534
      %1618 = vmatprep.subr.mxu0 0.0
      %1619 = vmatpush1.msra.mxu0 %v1535
      %1620 = vmatprep.subr.mxu0 0.0
      %1621 = vmatpush1.msra.mxu0 0.0
      %1622 = vmatprep.subr.mxu0 0.0
      %1623 = vmatpush1.msra.mxu0 0.0
      %1624 = vmatprep.subr.mxu0 0.0
      %1625 = vmatpush1.msra.mxu0 0.0
      %1626 = vmatprep.subr.mxu0 0.0
      %1627 = vmatpush1.msra.mxu0 0.0
      %1628 = vmatprep.subr.mxu0 0.0
      %1629 = vmatpush1.msra.mxu0 0.0
      %1630 = vmatprep.subr.mxu0 0.0
      %1631 = vmatpush1.msra.mxu0 0.0
      %1632 = vmatprep.subr.mxu0 0.0
      %1633 = vmatpush1.msra.mxu0 0.0
      %1634 = vmatprep.subr.mxu0 0.0
      %1635 = vmatpush1.msra.mxu0 0.0
      %1636 = vmatprep.subr.mxu0 0.0
      %1637 = vmatpush1.msra.mxu0 0.0
      %1638 = vmatprep.subr.mxu0 0.0
      %1639 = vmatpush1.msra.mxu0 0.0
      %1640 = vmatprep.subr.mxu0 0.0
      %1641 = vmatpush1.msra.mxu0 0.0
      %1642 = vmatprep.subr.mxu0 0.0
      %1643 = vmatpush1.msra.mxu0 0.0
      %1644 = vmatprep.subr.mxu0 0.0
      %1645 = vmatpush1.msra.mxu0 0.0
      %1646 = vmatprep.subr.mxu0 0.0
      %1647 = vmatpush1.msra.mxu0 0.0
      %1648 = vmatprep.subr.mxu0 0.0
      %1649 = vmatpush1.msra.mxu0 0.0
      %1650 = vmatprep.subr.mxu0 0.0
      %1651 = vmatpush1.msra.mxu0 0.0
      %1652 = vmatprep.subr.mxu0 0.0
      %1653 = vmatpush1.msra.mxu0 0.0
      %1654 = vmatprep.subr.mxu0 0.0
      %1655 = vmatpush1.msra.mxu0 0.0
      %1656 = vmatprep.subr.mxu0 0.0
      %1657 = vmatpush1.msra.mxu0 0.0
      %1658 = vmatprep.subr.mxu0 0.0
      %1659 = vmatpush1.msra.mxu0 0.0
      %1660 = vmatprep.subr.mxu0 0.0
      %1661 = vmatpush1.msra.mxu0 0.0
      %1662 = vmatprep.subr.mxu0 0.0
      %1663 = vmatpush1.msra.mxu0 0.0
      %1664 = vmatprep.subr.mxu0 0.0
      %1665 = vmatpush1.msra.mxu0 0.0
      %1666 = vmatprep.subr.mxu0 0.0
      %1667 = vmatpush1.msra.mxu0 0.0
      %1668 = vmatprep.subr.mxu0 0.0
      %1669 = vmatpush1.msra.mxu0 0.0
      %1670 = vmatprep.subr.mxu0 0.0
      %1671 = vmatpush1.msra.mxu0 0.0
      %1672 = vmatprep.mubr.f32.mxu0 0.0
      %1673 = vmatmul.mubr.f32.gmra.mrb[0].mxu0 %v1603
      %v1674 = vpop.f32.mrb[0].mxu0
      %v1675 = vadd.f32 %v1599, %v1674
      %v1676 = vpop.f32.mrb[0].mxu0
      %1677 = vmatprep.mubr.f32.mxu0 0.0
      %1678 = vmatmul.mubr.f32.gmra.mrb[0].mxu0 %v1606
      %v1679 = vpop.f32.mrb[0].mxu0
      %v1680 = vadd.f32 %v1599, %v1679
      %v1681 = vpop.f32.mrb[0].mxu0
      %1682 = vdwg.mxu0
      %v1683 = vmax.f32 %v1675, 0.0
      %v1684 = vmax.f32 %v1680, 0.0
      %1687 = vrot.lane.b32.xlu0 %v1683, 120
      %v1688 = vpop.permute.xlu0 %1687
      %1689 = vrot.lane.b32.xlu0 %v1684, 120
      %v1690 = vpop.permute.xlu0 %1689
      %1693 = vrot.lane.b32.xlu0 %v1683, 112
      %v1694 = vpop.permute.xlu0 %1693
      %1695 = vrot.lane.b32.xlu0 %v1684, 112
      %v1696 = vpop.permute.xlu0 %1695
      %v1699 = vld [vmem:[#allocation2] sm:$0xff]
      %v1700 = vld [vmem:[#allocation2 + $0x8] sm:$0xff]
      %v1701 = vld [vmem:[#allocation2 + $0x18] sm:$0xff]
      %v1702 = vld [vmem:[#allocation2 + $0x20] sm:$0xff]
      %v1703 = vld [vmem:[#allocation2 + $0x30] sm:$0xff]
      %v1704 = vld [vmem:[#allocation2 + $0x38] sm:$0xff]
      %1705 = vst.msk [vmem:[#allocation4] sm:$0xff] %vm1564, %v1699
      %1706 = vst.msk [vmem:[#allocation4 + $0x8] sm:$0xff] %vm1564, %v1700
      %1707 = vst.msk [vmem:[#allocation4 + $0x10] sm:$0xff] %vm1564, %v1701
      %1708 = vst.msk [vmem:[#allocation4 + $0x18] sm:$0xff] %vm1564, %v1702
      %1709 = vst.msk [vmem:[#allocation4 + $0x20] sm:$0xff] %vm1564, %v1703
      %1710 = vst.msk [vmem:[#allocation4 + $0x28] sm:$0xff] %vm1564, %v1704
      %v1711 = vld [vmem:[#allocation2 + $0x1] sm:$0xff]
      %v1712 = vld [vmem:[#allocation2 + $0x9] sm:$0xff]
      %v1713 = vld [vmem:[#allocation2 + $0x19] sm:$0xff]
      %v1714 = vld [vmem:[#allocation2 + $0x21] sm:$0xff]
      %v1715 = vld [vmem:[#allocation2 + $0x31] sm:$0xff]
      %v1716 = vld [vmem:[#allocation2 + $0x39] sm:$0xff]
      %1723 = vrot.lane.b32.xlu0 %v1711, 16
      %v1724 = vpop.permute.xlu0 %1723
      %1725 = vrot.lane.b32.xlu0 %v1712, 16
      %v1726 = vpop.permute.xlu0 %1725
      %1727 = vrot.lane.b32.xlu0 %v1713, 16
      %v1728 = vpop.permute.xlu0 %1727
      %1729 = vrot.lane.b32.xlu0 %v1714, 16
      %v1730 = vpop.permute.xlu0 %1729
      %1731 = vrot.lane.b32.xlu0 %v1715, 16
      %v1732 = vpop.permute.xlu0 %1731
      %1733 = vrot.lane.b32.xlu0 %v1716, 16
      %v1734 = vpop.permute.xlu0 %1733
      %1741 = vst.msk [vmem:[#allocation4] sm:$0xff] %vm1577, %v1724
      %1742 = vst.msk [vmem:[#allocation4 + $0x8] sm:$0xff] %vm1577, %v1726
      %1743 = vst.msk [vmem:[#allocation4 + $0x10] sm:$0xff] %vm1577, %v1728
      %1744 = vst.msk [vmem:[#allocation4 + $0x18] sm:$0xff] %vm1577, %v1730
      %1745 = vst.msk [vmem:[#allocation4 + $0x20] sm:$0xff] %vm1577, %v1732
      %1746 = vst.msk [vmem:[#allocation4 + $0x28] sm:$0xff] %vm1577, %v1734
      %v1747 = vld [vmem:[#allocation2 + $0x2] sm:$0xff]
      %v1748 = vld [vmem:[#allocation2 + $0xa] sm:$0xff]
      %v1749 = vld [vmem:[#allocation2 + $0x1a] sm:$0xff]
      %v1750 = vld [vmem:[#allocation2 + $0x22] sm:$0xff]
      %v1751 = vld [vmem:[#allocation2 + $0x32] sm:$0xff]
      %v1752 = vld [vmem:[#allocation2 + $0x3a] sm:$0xff]
      %1759 = vrot.lane.b32.xlu0 %v1747, 32
      %v1760 = vpop.permute.xlu0 %1759
      %1761 = vrot.lane.b32.xlu0 %v1748, 32
      %v1762 = vpop.permute.xlu0 %1761
      %1763 = vrot.lane.b32.xlu0 %v1749, 32
      %v1764 = vpop.permute.xlu0 %1763
      %1765 = vrot.lane.b32.xlu0 %v1750, 32
      %v1766 = vpop.permute.xlu0 %1765
      %1767 = vrot.lane.b32.xlu0 %v1751, 32
      %v1768 = vpop.permute.xlu0 %1767
      %1769 = vrot.lane.b32.xlu0 %v1752, 32
      %v1770 = vpop.permute.xlu0 %1769
      %1777 = vst.msk [vmem:[#allocation4] sm:$0xff] %vm1590, %v1760
      %1778 = vst.msk [vmem:[#allocation4 + $0x8] sm:$0xff] %vm1590, %v1762
      %1779 = vst.msk [vmem:[#allocation4 + $0x10] sm:$0xff] %vm1590, %v1764
      %1780 = vst.msk [vmem:[#allocation4 + $0x18] sm:$0xff] %vm1590, %v1766
      %1781 = vst.msk [vmem:[#allocation4 + $0x20] sm:$0xff] %vm1590, %v1768
      %1782 = vst.msk [vmem:[#allocation4 + $0x28] sm:$0xff] %vm1590, %v1770
      %v1783 = vld [vmem:[#allocation2 + $0x3] sm:$0xff]
      %v1784 = vld [vmem:[#allocation2 + $0xb] sm:$0xff]
      %v1785 = vld [vmem:[#allocation2 + $0x1b] sm:$0xff]
      %v1786 = vld [vmem:[#allocation2 + $0x23] sm:$0xff]
      %v1787 = vld [vmem:[#allocation2 + $0x33] sm:$0xff]
      %v1788 = vld [vmem:[#allocation2 + $0x3b] sm:$0xff]
      %1795 = vrot.lane.b32.xlu0 %v1783, 48
      %v1796 = vpop.permute.xlu0 %1795
      %1797 = vrot.lane.b32.xlu0 %v1784, 48
      %v1798 = vpop.permute.xlu0 %1797
      %1799 = vrot.lane.b32.xlu0 %v1785, 48
      %v1800 = vpop.permute.xlu0 %1799
      %1801 = vrot.lane.b32.xlu0 %v1786, 48
      %v1802 = vpop.permute.xlu0 %1801
      %1803 = vrot.lane.b32.xlu0 %v1787, 48
      %v1804 = vpop.permute.xlu0 %1803
      %1805 = vrot.lane.b32.xlu0 %v1788, 48
      %v1806 = vpop.permute.xlu0 %1805
      %vm1813 = vcmask 523648
      %1814 = vst.msk [vmem:[#allocation4] sm:$0xff] %vm1813, %v1796
      %1815 = vst.msk [vmem:[#allocation4 + $0x8] sm:$0xff] %vm1813, %v1798
      %1816 = vst.msk [vmem:[#allocation4 + $0x10] sm:$0xff] %vm1813, %v1800
      %1817 = vst.msk [vmem:[#allocation4 + $0x18] sm:$0xff] %vm1813, %v1802
      %1818 = vst.msk [vmem:[#allocation4 + $0x20] sm:$0xff] %vm1813, %v1804
      %1819 = vst.msk [vmem:[#allocation4 + $0x28] sm:$0xff] %vm1813, %v1806
      %v1820 = vld [vmem:[#allocation2 + $0x4] sm:$0xff]
      %v1821 = vld [vmem:[#allocation2 + $0xc] sm:$0xff]
      %v1822 = vld [vmem:[#allocation2 + $0x1c] sm:$0xff]
      %v1823 = vld [vmem:[#allocation2 + $0x24] sm:$0xff]
      %v1824 = vld [vmem:[#allocation2 + $0x34] sm:$0xff]
      %v1825 = vld [vmem:[#allocation2 + $0x3c] sm:$0xff]
      %1832 = vrot.lane.b32.xlu0 %v1820, 64
      %v1833 = vpop.permute.xlu0 %1832
      %1834 = vrot.lane.b32.xlu0 %v1821, 64
      %v1835 = vpop.permute.xlu0 %1834
      %1836 = vrot.lane.b32.xlu0 %v1822, 64
      %v1837 = vpop.permute.xlu0 %1836
      %1838 = vrot.lane.b32.xlu0 %v1823, 64
      %v1839 = vpop.permute.xlu0 %1838
      %1840 = vrot.lane.b32.xlu0 %v1824, 64
      %v1841 = vpop.permute.xlu0 %1840
      %1842 = vrot.lane.b32.xlu0 %v1825, 64
      %v1843 = vpop.permute.xlu0 %1842
      %vm1850 = vcmask 654848
      %1851 = vst.msk [vmem:[#allocation4] sm:$0xff] %vm1850, %v1833
      %1852 = vst.msk [vmem:[#allocation4 + $0x8] sm:$0xff] %vm1850, %v1835
      %1853 = vst.msk [vmem:[#allocation4 + $0x10] sm:$0xff] %vm1850, %v1837
      %1854 = vst.msk [vmem:[#allocation4 + $0x18] sm:$0xff] %vm1850, %v1839
      %1855 = vst.msk [vmem:[#allocation4 + $0x20] sm:$0xff] %vm1850, %v1841
      %1856 = vst.msk [vmem:[#allocation4 + $0x28] sm:$0xff] %vm1850, %v1843
      %v1857 = vld [vmem:[#allocation2 + $0x5] sm:$0xff]
      %v1858 = vld [vmem:[#allocation2 + $0xd] sm:$0xff]
      %v1859 = vld [vmem:[#allocation2 + $0x1d] sm:$0xff]
      %v1860 = vld [vmem:[#allocation2 + $0x25] sm:$0xff]
      %v1861 = vld [vmem:[#allocation2 + $0x35] sm:$0xff]
      %v1862 = vld [vmem:[#allocation2 + $0x3d] sm:$0xff]
      %1869 = vrot.lane.b32.xlu0 %v1857, 80
      %v1870 = vpop.permute.xlu0 %1869
      %1871 = vrot.lane.b32.xlu0 %v1858, 80
      %v1872 = vpop.permute.xlu0 %1871
      %1873 = vrot.lane.b32.xlu0 %v1859, 80
      %v1874 = vpop.permute.xlu0 %1873
      %1875 = vrot.lane.b32.xlu0 %v1860, 80
      %v1876 = vpop.permute.xlu0 %1875
      %1877 = vrot.lane.b32.xlu0 %v1861, 80
      %v1878 = vpop.permute.xlu0 %1877
      %1879 = vrot.lane.b32.xlu0 %v1862, 80
      %v1880 = vpop.permute.xlu0 %1879
      %vm1887 = vcmask 786048
      %1888 = vst.msk [vmem:[#allocation4] sm:$0xff] %vm1887, %v1870
      %1889 = vst.msk [vmem:[#allocation4 + $0x8] sm:$0xff] %vm1887, %v1872
      %1890 = vst.msk [vmem:[#allocation4 + $0x10] sm:$0xff] %vm1887, %v1874
      %1891 = vst.msk [vmem:[#allocation4 + $0x18] sm:$0xff] %vm1887, %v1876
      %1892 = vst.msk [vmem:[#allocation4 + $0x20] sm:$0xff] %vm1887, %v1878
      %1893 = vst.msk [vmem:[#allocation4 + $0x28] sm:$0xff] %vm1887, %v1880
      %v1894 = vld [vmem:[#allocation2 + $0x6] sm:$0xff]
      %v1895 = vld [vmem:[#allocation2 + $0xe] sm:$0xff]
      %v1896 = vld [vmem:[#allocation2 + $0x1e] sm:$0xff]
      %v1897 = vld [vmem:[#allocation2 + $0x26] sm:$0xff]
      %v1898 = vld [vmem:[#allocation2 + $0x36] sm:$0xff]
      %v1899 = vld [vmem:[#allocation2 + $0x3e] sm:$0xff]
      %1906 = vrot.lane.b32.xlu0 %v1894, 96
      %v1907 = vpop.permute.xlu0 %1906
      %1908 = vrot.lane.b32.xlu0 %v1895, 96
      %v1909 = vpop.permute.xlu0 %1908
      %1910 = vrot.lane.b32.xlu0 %v1896, 96
      %v1911 = vpop.permute.xlu0 %1910
      %1912 = vrot.lane.b32.xlu0 %v1897, 96
      %v1913 = vpop.permute.xlu0 %1912
      %1914 = vrot.lane.b32.xlu0 %v1898, 96
      %v1915 = vpop.permute.xlu0 %1914
      %1916 = vrot.lane.b32.xlu0 %v1899, 96
      %v1917 = vpop.permute.xlu0 %1916
      %vm1924 = vcmask 917248
      %1925 = vst.msk [vmem:[#allocation4] sm:$0xff] %vm1924, %v1907
      %1926 = vst.msk [vmem:[#allocation4 + $0x8] sm:$0xff] %vm1924, %v1909
      %1927 = vst.msk [vmem:[#allocation4 + $0x10] sm:$0xff] %vm1924, %v1911
      %1928 = vst.msk [vmem:[#allocation4 + $0x18] sm:$0xff] %vm1924, %v1913
      %1929 = vst.msk [vmem:[#allocation4 + $0x20] sm:$0xff] %vm1924, %v1915
      %1930 = vst.msk [vmem:[#allocation4 + $0x28] sm:$0xff] %vm1924, %v1917
      %v1931 = vld [vmem:[#allocation4] sm:$0xff]
      %v1932 = vld [vmem:[#allocation4 + $0x8] sm:$0xff]
      %v1933 = vld [vmem:[#allocation4 + $0x10] sm:$0xff]
      %v1934 = vld [vmem:[#allocation4 + $0x18] sm:$0xff]
      %v1935 = vld [vmem:[#allocation4 + $0x20] sm:$0xff]
      %v1936 = vld [vmem:[#allocation4 + $0x28] sm:$0xff]
      %v1938 = vlaneseq
      %v1939 = vshrl.u32 %v1938, 7
      %v1940 = vsub.s32 0, %v1939
      %v1941 = vrot.slane %v1551, %v1940
      %vm1943 = vcmask 916480
      %v1945 = vsel %vm1943, %v1931, 0
      %v1948 = vsel %vm1943, %v1932, 0
      %v1951 = vsel %vm1943, %v1933, 0
      %v1954 = vsel %vm1943, %v1934, 0
      %v1957 = vsel %vm1943, %v1935, 0
      %v1960 = vsel %vm1943, %v1936, 0
      %1962 = vmatprep.subr.mxu0 0.0
      %1963 = vmatpush1.msra.mxu0 %v1537
      %1964 = vmatprep.subr.mxu0 0.0
      %1965 = vmatpush1.msra.mxu0 %v1538
      %1966 = vmatprep.subr.mxu0 0.0
      %1967 = vmatpush1.msra.mxu0 %v1539
      %1968 = vmatprep.subr.mxu0 0.0
      %1969 = vmatpush1.msra.mxu0 %v1540
      %1970 = vmatprep.subr.mxu0 0.0
      %1971 = vmatpush1.msra.mxu0 %v1541
      %1972 = vmatprep.subr.mxu0 0.0
      %1973 = vmatpush1.msra.mxu0 %v1542
      %1974 = vmatprep.subr.mxu0 0.0
      %1975 = vmatpush1.msra.mxu0 %v1543
      %1976 = vmatprep.subr.mxu0 0.0
      %1977 = vmatpush1.msra.mxu0 %v1544
      %1978 = vmatprep.subr.mxu0 0.0
      %1979 = vmatpush1.msra.mxu0 %v1545
      %1980 = vmatprep.subr.mxu0 0.0
      %1981 = vmatpush1.msra.mxu0 %v1546
      %1982 = vmatprep.subr.mxu0 0.0
      %1983 = vmatpush1.msra.mxu0 %v1547
      %1984 = vmatprep.subr.mxu0 0.0
      %1985 = vmatpush1.msra.mxu0 %v1548
      %1986 = vmatprep.subr.mxu0 0.0
      %1987 = vmatpush1.msra.mxu0 %v1549
      %1988 = vmatprep.subr.mxu0 0.0
      %1989 = vmatpush1.msra.mxu0 %v1550
      %1990 = vmatprep.subr.mxu0 0.0
      %1991 = vmatpush1.msra.mxu0 0.0
      %1992 = vmatprep.subr.mxu0 0.0
      %1993 = vmatpush1.msra.mxu0 0.0
      %1994 = vmatprep.subr.mxu0 0.0
      %1995 = vmatpush1.msra.mxu0 0.0
      %1996 = vmatprep.subr.mxu0 0.0
      %1997 = vmatpush1.msra.mxu0 0.0
      %1998 = vmatprep.subr.mxu0 0.0
      %1999 = vmatpush1.msra.mxu0 0.0
      %2000 = vmatprep.subr.mxu0 0.0
      %2001 = vmatpush1.msra.mxu0 0.0
      %2002 = vmatprep.subr.mxu0 0.0
      %2003 = vmatpush1.msra.mxu0 0.0
      %2004 = vmatprep.subr.mxu0 0.0
      %2005 = vmatpush1.msra.mxu0 0.0
      %2006 = vmatprep.subr.mxu0 0.0
      %2007 = vmatpush1.msra.mxu0 0.0
      %2008 = vmatprep.subr.mxu0 0.0
      %2009 = vmatpush1.msra.mxu0 0.0
      %2010 = vmatprep.subr.mxu0 0.0
      %2011 = vmatpush1.msra.mxu0 0.0
      %2012 = vmatprep.subr.mxu0 0.0
      %2013 = vmatpush1.msra.mxu0 0.0
      %2014 = vmatprep.subr.mxu0 0.0
      %2015 = vmatpush1.msra.mxu0 0.0
      %2016 = vmatprep.subr.mxu0 0.0
      %2017 = vmatpush1.msra.mxu0 0.0
      %2018 = vmatprep.subr.mxu0 0.0
      %2019 = vmatpush1.msra.mxu0 0.0
      %2020 = vmatprep.subr.mxu0 0.0
      %2021 = vmatpush1.msra.mxu0 0.0
      %2022 = vmatprep.subr.mxu0 0.0
      %2023 = vmatpush1.msra.mxu0 0.0
      %2024 = vmatprep.subr.mxu0 0.0
      %2025 = vmatpush1.msra.mxu0 0.0
      %2026 = vmatprep.mubr.f32.mxu0 0.0
      %2027 = vmatmul.mubr.f32.gmra.mrb[0].mxu0 %v1945
      %v2028 = vpop.f32.mrb[0].mxu0
      %v2029 = vadd.f32 %v1941, %v2028
      %v2030 = vpop.f32.mrb[0].mxu0
      %2031 = vmatprep.mubr.f32.mxu0 0.0
      %2032 = vmatmul.mubr.f32.gmra.mrb[0].mxu0 %v1948
      %v2033 = vpop.f32.mrb[0].mxu0
      %v2034 = vadd.f32 %v1941, %v2033
      %v2035 = vpop.f32.mrb[0].mxu0
      %2036 = vmatprep.mubr.f32.mxu0 0.0
      %2037 = vmatmul.mubr.f32.gmra.mrb[0].mxu0 %v1951
      %v2038 = vpop.f32.mrb[0].mxu0
      %v2039 = vadd.f32 %v1941, %v2038
      %v2040 = vpop.f32.mrb[0].mxu0
      %2041 = vmatprep.mubr.f32.mxu0 0.0
      %2042 = vmatmul.mubr.f32.gmra.mrb[0].mxu0 %v1954
      %v2043 = vpop.f32.mrb[0].mxu0
      %v2044 = vadd.f32 %v1941, %v2043
      %v2045 = vpop.f32.mrb[0].mxu0
      %2046 = vmatprep.mubr.f32.mxu0 0.0
      %2047 = vmatmul.mubr.f32.gmra.mrb[0].mxu0 %v1957
      %v2048 = vpop.f32.mrb[0].mxu0
      %v2049 = vadd.f32 %v1941, %v2048
      %v2050 = vpop.f32.mrb[0].mxu0
      %2051 = vmatprep.mubr.f32.mxu0 0.0
      %2052 = vmatmul.mubr.f32.gmra.mrb[0].mxu0 %v1960
      %v2053 = vpop.f32.mrb[0].mxu0
      %v2054 = vadd.f32 %v1941, %v2053
      %v2055 = vpop.f32.mrb[0].mxu0
      %2056 = vdwg.mxu0
      %v2057 = vmax.f32 %v2029, 0.0
      %v2058 = vmax.f32 %v2034, 0.0
      %v2059 = vmax.f32 %v2039, 0.0
      %v2060 = vmax.f32 %v2044, 0.0
      %v2061 = vmax.f32 %v2049, 0.0
      %v2062 = vmax.f32 %v2054, 0.0
      %v2063 = vadd.f32 %v1683, %v2057
      %v2064 = vadd.f32 %v1684, %v2058
      %v2065 = vadd.f32 %v1688, %v2059
      %v2066 = vadd.f32 %v1690, %v2060
      %v2067 = vadd.f32 %v1694, %v2061
      %v2068 = vadd.f32 %v1696, %v2062
      %2069 = vst.msk [vmem:[%s1064 + $0x1] sm:$0xff] %vm502, %v2063
      %2070 = vst.msk [vmem:[%s1064 + $0x9] sm:$0xff] %vm502, %v2064
      %2071 = vst.msk [vmem:[%s1064 + $0x19] sm:$0xff] %vm502, %v2065
      %2072 = vst.msk [vmem:[%s1064 + $0x21] sm:$0xff] %vm502, %v2066
      %2073 = vst.msk [vmem:[%s1064 + $0x31] sm:$0xff] %vm502, %v2067
      %2074 = vst.msk [vmem:[%s1064 + $0x39] sm:$0xff] %vm502, %v2068
      %v2075 = vld [vmem:[#allocation3] sm:$0xff]
      %v2076 = vld [vmem:[#allocation3 + $0x8] sm:$0xff]
      %v2077 = vld [vmem:[#allocation3 + $0x18] sm:$0xff]
      %v2078 = vld [vmem:[#allocation3 + $0x20] sm:$0xff]
      %v2079 = vld [vmem:[#allocation3 + $0x30] sm:$0xff]
      %v2080 = vld [vmem:[#allocation3 + $0x38] sm:$0xff]
      %2081 = vst.msk [vmem:[#allocation4] sm:$0xff] %vm502, %v2075
      %2082 = vst.msk [vmem:[#allocation4 + $0x8] sm:$0xff] %vm502, %v2076
      %2083 = vst.msk [vmem:[#allocation4 + $0x10] sm:$0xff] %vm502, %v2077
      %2084 = vst.msk [vmem:[#allocation4 + $0x18] sm:$0xff] %vm502, %v2078
      %2085 = vst.msk [vmem:[#allocation4 + $0x20] sm:$0xff] %vm502, %v2079
      %2086 = vst.msk [vmem:[#allocation4 + $0x28] sm:$0xff] %vm502, %v2080
      %v2087 = vld [vmem:[#allocation3 + $0x1] sm:$0xff]
      %v2088 = vld [vmem:[#allocation3 + $0x9] sm:$0xff]
      %v2089 = vld [vmem:[#allocation3 + $0x19] sm:$0xff]
      %v2090 = vld [vmem:[#allocation3 + $0x21] sm:$0xff]
      %v2091 = vld [vmem:[#allocation3 + $0x31] sm:$0xff]
      %v2092 = vld [vmem:[#allocation3 + $0x39] sm:$0xff]
      %2099 = vrot.lane.b32.xlu0 %v2087, 8
      %v2100 = vpop.permute.xlu0 %2099
      %2101 = vrot.lane.b32.xlu0 %v2088, 8
      %v2102 = vpop.permute.xlu0 %2101
      %2103 = vrot.lane.b32.xlu0 %v2089, 8
      %v2104 = vpop.permute.xlu0 %2103
      %2105 = vrot.lane.b32.xlu0 %v2090, 8
      %v2106 = vpop.permute.xlu0 %2105
      %2107 = vrot.lane.b32.xlu0 %v2091, 8
      %v2108 = vpop.permute.xlu0 %2107
      %2109 = vrot.lane.b32.xlu0 %v2092, 8
      %v2110 = vpop.permute.xlu0 %2109
      %2117 = vst.msk [vmem:[#allocation4] sm:$0xff] %vm571, %v2100
      %2118 = vst.msk [vmem:[#allocation4 + $0x8] sm:$0xff] %vm571, %v2102
      %2119 = vst.msk [vmem:[#allocation4 + $0x10] sm:$0xff] %vm571, %v2104
      %2120 = vst.msk [vmem:[#allocation4 + $0x18] sm:$0xff] %vm571, %v2106
      %2121 = vst.msk [vmem:[#allocation4 + $0x20] sm:$0xff] %vm571, %v2108
      %2122 = vst.msk [vmem:[#allocation4 + $0x28] sm:$0xff] %vm571, %v2110
      %v2123 = vld [vmem:[#allocation3 + $0x2] sm:$0xff]
      %v2124 = vld [vmem:[#allocation3 + $0xa] sm:$0xff]
      %v2125 = vld [vmem:[#allocation3 + $0x1a] sm:$0xff]
      %v2126 = vld [vmem:[#allocation3 + $0x22] sm:$0xff]
      %v2127 = vld [vmem:[#allocation3 + $0x32] sm:$0xff]
      %v2128 = vld [vmem:[#allocation3 + $0x3a] sm:$0xff]
      %2135 = vrot.lane.b32.xlu0 %v2123, 16
      %v2136 = vpop.permute.xlu0 %2135
      %2137 = vrot.lane.b32.xlu0 %v2124, 16
      %v2138 = vpop.permute.xlu0 %2137
      %2139 = vrot.lane.b32.xlu0 %v2125, 16
      %v2140 = vpop.permute.xlu0 %2139
      %2141 = vrot.lane.b32.xlu0 %v2126, 16
      %v2142 = vpop.permute.xlu0 %2141
      %2143 = vrot.lane.b32.xlu0 %v2127, 16
      %v2144 = vpop.permute.xlu0 %2143
      %2145 = vrot.lane.b32.xlu0 %v2128, 16
      %v2146 = vpop.permute.xlu0 %2145
      %2153 = vst.msk [vmem:[#allocation4] sm:$0xff] %vm585, %v2136
      %2154 = vst.msk [vmem:[#allocation4 + $0x8] sm:$0xff] %vm585, %v2138
      %2155 = vst.msk [vmem:[#allocation4 + $0x10] sm:$0xff] %vm585, %v2140
      %2156 = vst.msk [vmem:[#allocation4 + $0x18] sm:$0xff] %vm585, %v2142
      %2157 = vst.msk [vmem:[#allocation4 + $0x20] sm:$0xff] %vm585, %v2144
      %2158 = vst.msk [vmem:[#allocation4 + $0x28] sm:$0xff] %vm585, %v2146
      %v2159 = vld [vmem:[%s1064] sm:$0xff]
      %v2160 = vld [vmem:[%s1064 + $0x8] sm:$0xff]
      %v2161 = vld [vmem:[%s1064 + $0x18] sm:$0xff]
      %v2162 = vld [vmem:[%s1064 + $0x20] sm:$0xff]
      %v2163 = vld [vmem:[%s1064 + $0x30] sm:$0xff]
      %v2164 = vld [vmem:[%s1064 + $0x38] sm:$0xff]
      %2171 = vrot.lane.b32.xlu0 %v2159, 24
      %v2172 = vpop.permute.xlu0 %2171
      %2173 = vrot.lane.b32.xlu0 %v2160, 24
      %v2174 = vpop.permute.xlu0 %2173
      %2175 = vrot.lane.b32.xlu0 %v2161, 24
      %v2176 = vpop.permute.xlu0 %2175
      %2177 = vrot.lane.b32.xlu0 %v2162, 24
      %v2178 = vpop.permute.xlu0 %2177
      %2179 = vrot.lane.b32.xlu0 %v2163, 24
      %v2180 = vpop.permute.xlu0 %2179
      %2181 = vrot.lane.b32.xlu0 %v2164, 24
      %v2182 = vpop.permute.xlu0 %2181
      %2189 = vst.msk [vmem:[#allocation4] sm:$0xff] %vm808, %v2172
      %2190 = vst.msk [vmem:[#allocation4 + $0x8] sm:$0xff] %vm808, %v2174
      %2191 = vst.msk [vmem:[#allocation4 + $0x10] sm:$0xff] %vm808, %v2176
      %2192 = vst.msk [vmem:[#allocation4 + $0x18] sm:$0xff] %vm808, %v2178
      %2193 = vst.msk [vmem:[#allocation4 + $0x20] sm:$0xff] %vm808, %v2180
      %2194 = vst.msk [vmem:[#allocation4 + $0x28] sm:$0xff] %vm808, %v2182
      %v2195 = vld [vmem:[%s1064 + $0x1] sm:$0xff]
      %v2196 = vld [vmem:[%s1064 + $0x9] sm:$0xff]
      %v2197 = vld [vmem:[%s1064 + $0x19] sm:$0xff]
      %v2198 = vld [vmem:[%s1064 + $0x21] sm:$0xff]
      %v2199 = vld [vmem:[%s1064 + $0x31] sm:$0xff]
      %v2200 = vld [vmem:[%s1064 + $0x39] sm:$0xff]
      %2207 = vrot.lane.b32.xlu0 %v2195, 32
      %v2208 = vpop.permute.xlu0 %2207
      %2209 = vrot.lane.b32.xlu0 %v2196, 32
      %v2210 = vpop.permute.xlu0 %2209
      %2211 = vrot.lane.b32.xlu0 %v2197, 32
      %v2212 = vpop.permute.xlu0 %2211
      %2213 = vrot.lane.b32.xlu0 %v2198, 32
      %v2214 = vpop.permute.xlu0 %2213
      %2215 = vrot.lane.b32.xlu0 %v2199, 32
      %v2216 = vpop.permute.xlu0 %2215
      %2217 = vrot.lane.b32.xlu0 %v2200, 32
      %v2218 = vpop.permute.xlu0 %2217
      %2225 = vst.msk [vmem:[#allocation4] sm:$0xff] %vm845, %v2208
      %2226 = vst.msk [vmem:[#allocation4 + $0x8] sm:$0xff] %vm845, %v2210
      %2227 = vst.msk [vmem:[#allocation4 + $0x10] sm:$0xff] %vm845, %v2212
      %2228 = vst.msk [vmem:[#allocation4 + $0x18] sm:$0xff] %vm845, %v2214
      %2229 = vst.msk [vmem:[#allocation4 + $0x20] sm:$0xff] %vm845, %v2216
      %2230 = vst.msk [vmem:[#allocation4 + $0x28] sm:$0xff] %vm845, %v2218
      %v2231 = vld [vmem:[%s1064 + $0x2] sm:$0xff]
      %v2232 = vld [vmem:[%s1064 + $0xa] sm:$0xff]
      %v2233 = vld [vmem:[%s1064 + $0x1a] sm:$0xff]
      %v2234 = vld [vmem:[%s1064 + $0x22] sm:$0xff]
      %v2235 = vld [vmem:[%s1064 + $0x32] sm:$0xff]
      %v2236 = vld [vmem:[%s1064 + $0x3a] sm:$0xff]
      %2243 = vrot.lane.b32.xlu0 %v2231, 40
      %v2244 = vpop.permute.xlu0 %2243
      %2245 = vrot.lane.b32.xlu0 %v2232, 40
      %v2246 = vpop.permute.xlu0 %2245
      %2247 = vrot.lane.b32.xlu0 %v2233, 40
      %v2248 = vpop.permute.xlu0 %2247
      %2249 = vrot.lane.b32.xlu0 %v2234, 40
      %v2250 = vpop.permute.xlu0 %2249
      %2251 = vrot.lane.b32.xlu0 %v2235, 40
      %v2252 = vpop.permute.xlu0 %2251
      %2253 = vrot.lane.b32.xlu0 %v2236, 40
      %v2254 = vpop.permute.xlu0 %2253
      %2261 = vst.msk [vmem:[#allocation4] sm:$0xff] %vm882, %v2244
      %2262 = vst.msk [vmem:[#allocation4 + $0x8] sm:$0xff] %vm882, %v2246
      %2263 = vst.msk [vmem:[#allocation4 + $0x10] sm:$0xff] %vm882, %v2248
      %2264 = vst.msk [vmem:[#allocation4 + $0x18] sm:$0xff] %vm882, %v2250
      %2265 = vst.msk [vmem:[#allocation4 + $0x20] sm:$0xff] %vm882, %v2252
      %2266 = vst.msk [vmem:[#allocation4 + $0x28] sm:$0xff] %vm882, %v2254
      %v2267 = vld [vmem:[%s1263] sm:$0xff]
      %v2268 = vld [vmem:[%s1263 + $0x8] sm:$0xff]
      %v2269 = vld [vmem:[%s1263 + $0x18] sm:$0xff]
      %v2270 = vld [vmem:[%s1263 + $0x20] sm:$0xff]
      %v2271 = vld [vmem:[%s1263 + $0x30] sm:$0xff]
      %v2272 = vld [vmem:[%s1263 + $0x38] sm:$0xff]
      %2279 = vrot.lane.b32.xlu0 %v2267, 48
      %v2280 = vpop.permute.xlu0 %2279
      %2281 = vrot.lane.b32.xlu0 %v2268, 48
      %v2282 = vpop.permute.xlu0 %2281
      %2283 = vrot.lane.b32.xlu0 %v2269, 48
      %v2284 = vpop.permute.xlu0 %2283
      %2285 = vrot.lane.b32.xlu0 %v2270, 48
      %v2286 = vpop.permute.xlu0 %2285
      %2287 = vrot.lane.b32.xlu0 %v2271, 48
      %v2288 = vpop.permute.xlu0 %2287
      %2289 = vrot.lane.b32.xlu0 %v2272, 48
      %v2290 = vpop.permute.xlu0 %2289
      %2297 = vst.msk [vmem:[#allocation4] sm:$0xff] %vm919, %v2280
      %2298 = vst.msk [vmem:[#allocation4 + $0x8] sm:$0xff] %vm919, %v2282
      %2299 = vst.msk [vmem:[#allocation4 + $0x10] sm:$0xff] %vm919, %v2284
      %2300 = vst.msk [vmem:[#allocation4 + $0x18] sm:$0xff] %vm919, %v2286
      %2301 = vst.msk [vmem:[#allocation4 + $0x20] sm:$0xff] %vm919, %v2288
      %2302 = vst.msk [vmem:[#allocation4 + $0x28] sm:$0xff] %vm919, %v2290
      %v2303 = vld [vmem:[%s1263 + $0x1] sm:$0xff]
      %v2304 = vld [vmem:[%s1263 + $0x9] sm:$0xff]
      %v2305 = vld [vmem:[%s1263 + $0x19] sm:$0xff]
      %v2306 = vld [vmem:[%s1263 + $0x21] sm:$0xff]
      %v2307 = vld [vmem:[%s1263 + $0x31] sm:$0xff]
      %v2308 = vld [vmem:[%s1263 + $0x39] sm:$0xff]
      %2315 = vrot.lane.b32.xlu0 %v2303, 56
      %v2316 = vpop.permute.xlu0 %2315
      %2317 = vrot.lane.b32.xlu0 %v2304, 56
      %v2318 = vpop.permute.xlu0 %2317
      %2319 = vrot.lane.b32.xlu0 %v2305, 56
      %v2320 = vpop.permute.xlu0 %2319
      %2321 = vrot.lane.b32.xlu0 %v2306, 56
      %v2322 = vpop.permute.xlu0 %2321
      %2323 = vrot.lane.b32.xlu0 %v2307, 56
      %v2324 = vpop.permute.xlu0 %2323
      %2325 = vrot.lane.b32.xlu0 %v2308, 56
      %v2326 = vpop.permute.xlu0 %2325
      %2333 = vst.msk [vmem:[#allocation4] sm:$0xff] %vm1330, %v2316
      %2334 = vst.msk [vmem:[#allocation4 + $0x8] sm:$0xff] %vm1330, %v2318
      %2335 = vst.msk [vmem:[#allocation4 + $0x10] sm:$0xff] %vm1330, %v2320
      %2336 = vst.msk [vmem:[#allocation4 + $0x18] sm:$0xff] %vm1330, %v2322
      %2337 = vst.msk [vmem:[#allocation4 + $0x20] sm:$0xff] %vm1330, %v2324
      %2338 = vst.msk [vmem:[#allocation4 + $0x28] sm:$0xff] %vm1330, %v2326
      %v2339 = vld [vmem:[%s1263 + $0x2] sm:$0xff]
      %v2340 = vld [vmem:[%s1263 + $0xa] sm:$0xff]
      %v2341 = vld [vmem:[%s1263 + $0x1a] sm:$0xff]
      %v2342 = vld [vmem:[%s1263 + $0x22] sm:$0xff]
      %v2343 = vld [vmem:[%s1263 + $0x32] sm:$0xff]
      %v2344 = vld [vmem:[%s1263 + $0x3a] sm:$0xff]
      %2351 = vrot.lane.b32.xlu0 %v2339, 64
      %v2352 = vpop.permute.xlu0 %2351
      %2353 = vrot.lane.b32.xlu0 %v2340, 64
      %v2354 = vpop.permute.xlu0 %2353
      %2355 = vrot.lane.b32.xlu0 %v2341, 64
      %v2356 = vpop.permute.xlu0 %2355
      %2357 = vrot.lane.b32.xlu0 %v2342, 64
      %v2358 = vpop.permute.xlu0 %2357
      %2359 = vrot.lane.b32.xlu0 %v2343, 64
      %v2360 = vpop.permute.xlu0 %2359
      %2361 = vrot.lane.b32.xlu0 %v2344, 64
      %v2362 = vpop.permute.xlu0 %2361
      %2369 = vst.msk [vmem:[#allocation4] sm:$0xff] %vm1367, %v2352
      %2370 = vst.msk [vmem:[#allocation4 + $0x8] sm:$0xff] %vm1367, %v2354
      %2371 = vst.msk [vmem:[#allocation4 + $0x10] sm:$0xff] %vm1367, %v2356
      %2372 = vst.msk [vmem:[#allocation4 + $0x18] sm:$0xff] %vm1367, %v2358
      %2373 = vst.msk [vmem:[#allocation4 + $0x20] sm:$0xff] %vm1367, %v2360
      %2374 = vst.msk [vmem:[#allocation4 + $0x28] sm:$0xff] %vm1367, %v2362
      %v2375 = vld [vmem:[#allocation4] sm:$0xff]
      %v2376 = vld [vmem:[#allocation4 + $0x8] sm:$0xff]
      %v2377 = vld [vmem:[#allocation4 + $0x10] sm:$0xff]
      %v2378 = vld [vmem:[#allocation4 + $0x18] sm:$0xff]
      %v2379 = vld [vmem:[#allocation4 + $0x20] sm:$0xff]
      %v2380 = vld [vmem:[#allocation4 + $0x28] sm:$0xff]
      %v2382 = vlaneseq
      %v2383 = vshrl.u32 %v2382, 7
      %v2384 = vsub.s32 0, %v2383
      %v2385 = vrot.slane %v1561, %v2384
      %v2388 = vsel %vm1386, %v2375, 0
      %v2391 = vsel %vm1386, %v2376, 0
      %v2394 = vsel %vm1386, %v2377, 0
      %v2397 = vsel %vm1386, %v2378, 0
      %v2400 = vsel %vm1386, %v2379, 0
      %v2403 = vsel %vm1386, %v2380, 0
      %2405 = vmatprep.subr.mxu0 0.0
      %2406 = vmatpush1.msra.mxu0 %v1552
      %2407 = vmatprep.subr.mxu0 0.0
      %2408 = vmatpush1.msra.mxu0 %v1553
      %2409 = vmatprep.subr.mxu0 0.0
      %2410 = vmatpush1.msra.mxu0 %v1554
      %2411 = vmatprep.subr.mxu0 0.0
      %2412 = vmatpush1.msra.mxu0 %v1555
      %2413 = vmatprep.subr.mxu0 0.0
      %2414 = vmatpush1.msra.mxu0 %v1556
      %2415 = vmatprep.subr.mxu0 0.0
      %2416 = vmatpush1.msra.mxu0 %v1557
      %2417 = vmatprep.subr.mxu0 0.0
      %2418 = vmatpush1.msra.mxu0 %v1558
      %2419 = vmatprep.subr.mxu0 0.0
      %2420 = vmatpush1.msra.mxu0 %v1559
      %2421 = vmatprep.subr.mxu0 0.0
      %2422 = vmatpush1.msra.mxu0 %v1560
      %2423 = vmatprep.subr.mxu0 0.0
      %2424 = vmatpush1.msra.mxu0 0.0
      %2425 = vmatprep.subr.mxu0 0.0
      %2426 = vmatpush1.msra.mxu0 0.0
      %2427 = vmatprep.subr.mxu0 0.0
      %2428 = vmatpush1.msra.mxu0 0.0
      %2429 = vmatprep.subr.mxu0 0.0
      %2430 = vmatpush1.msra.mxu0 0.0
      %2431 = vmatprep.subr.mxu0 0.0
      %2432 = vmatpush1.msra.mxu0 0.0
      %2433 = vmatprep.subr.mxu0 0.0
      %2434 = vmatpush1.msra.mxu0 0.0
      %2435 = vmatprep.subr.mxu0 0.0
      %2436 = vmatpush1.msra.mxu0 0.0
      %2437 = vmatprep.subr.mxu0 0.0
      %2438 = vmatpush1.msra.mxu0 0.0
      %2439 = vmatprep.subr.mxu0 0.0
      %2440 = vmatpush1.msra.mxu0 0.0
      %2441 = vmatprep.subr.mxu0 0.0
      %2442 = vmatpush1.msra.mxu0 0.0
      %2443 = vmatprep.subr.mxu0 0.0
      %2444 = vmatpush1.msra.mxu0 0.0
      %2445 = vmatprep.subr.mxu0 0.0
      %2446 = vmatpush1.msra.mxu0 0.0
      %2447 = vmatprep.subr.mxu0 0.0
      %2448 = vmatpush1.msra.mxu0 0.0
      %2449 = vmatprep.subr.mxu0 0.0
      %2450 = vmatpush1.msra.mxu0 0.0
      %2451 = vmatprep.subr.mxu0 0.0
      %2452 = vmatpush1.msra.mxu0 0.0
      %2453 = vmatprep.subr.mxu0 0.0
      %2454 = vmatpush1.msra.mxu0 0.0
      %2455 = vmatprep.subr.mxu0 0.0
      %2456 = vmatpush1.msra.mxu0 0.0
      %2457 = vmatprep.subr.mxu0 0.0
      %2458 = vmatpush1.msra.mxu0 0.0
      %2459 = vmatprep.subr.mxu0 0.0
      %2460 = vmatpush1.msra.mxu0 0.0
      %2461 = vmatprep.subr.mxu0 0.0
      %2462 = vmatpush1.msra.mxu0 0.0
      %2463 = vmatprep.subr.mxu0 0.0
      %2464 = vmatpush1.msra.mxu0 0.0
      %2465 = vmatprep.subr.mxu0 0.0
      %2466 = vmatpush1.msra.mxu0 0.0
      %2467 = vmatprep.subr.mxu0 0.0
      %2468 = vmatpush1.msra.mxu0 0.0
      %2469 = vmatprep.mubr.f32.mxu0 0.0
      %2470 = vmatmul.mubr.f32.gmra.mrb[0].mxu0 %v2388
      %v2471 = vpop.f32.mrb[0].mxu0
      %v2472 = vadd.f32 %v2385, %v2471
      %v2473 = vpop.f32.mrb[0].mxu0
      %2474 = vmatprep.mubr.f32.mxu0 0.0
      %2475 = vmatmul.mubr.f32.gmra.mrb[0].mxu0 %v2391
      %v2476 = vpop.f32.mrb[0].mxu0
      %v2477 = vadd.f32 %v2385, %v2476
      %v2478 = vpop.f32.mrb[0].mxu0
      %2479 = vmatprep.mubr.f32.mxu0 0.0
      %2480 = vmatmul.mubr.f32.gmra.mrb[0].mxu0 %v2394
      %v2481 = vpop.f32.mrb[0].mxu0
      %v2482 = vadd.f32 %v2385, %v2481
      %v2483 = vpop.f32.mrb[0].mxu0
      %2484 = vmatprep.mubr.f32.mxu0 0.0
      %2485 = vmatmul.mubr.f32.gmra.mrb[0].mxu0 %v2397
      %v2486 = vpop.f32.mrb[0].mxu0
      %v2487 = vadd.f32 %v2385, %v2486
      %v2488 = vpop.f32.mrb[0].mxu0
      %2489 = vmatprep.mubr.f32.mxu0 0.0
      %2490 = vmatmul.mubr.f32.gmra.mrb[0].mxu0 %v2400
      %v2491 = vpop.f32.mrb[0].mxu0
      %v2492 = vadd.f32 %v2385, %v2491
      %v2493 = vpop.f32.mrb[0].mxu0
      %2494 = vmatprep.mubr.f32.mxu0 0.0
      %2495 = vmatmul.mubr.f32.gmra.mrb[0].mxu0 %v2403
      %v2496 = vpop.f32.mrb[0].mxu0
      %v2497 = vadd.f32 %v2385, %v2496
      %v2498 = vpop.f32.mrb[0].mxu0
      %2499 = vdwg.mxu0
      %2506 = vrot.lane.b32.xlu0 %v2472, 16
      %v2507 = vpop.permute.xlu0 %2506
      %2508 = vrot.lane.b32.xlu0 %v2477, 16
      %v2509 = vpop.permute.xlu0 %2508
      %2510 = vrot.lane.b32.xlu0 %v2482, 16
      %v2511 = vpop.permute.xlu0 %2510
      %2512 = vrot.lane.b32.xlu0 %v2487, 16
      %v2513 = vpop.permute.xlu0 %2512
      %2514 = vrot.lane.b32.xlu0 %v2492, 16
      %v2515 = vpop.permute.xlu0 %2514
      %2516 = vrot.lane.b32.xlu0 %v2497, 16
      %v2517 = vpop.permute.xlu0 %2516
      %2524 = vst.msk [vmem:[#allocation2 + $0x3] sm:$0xff] %vm585, %v2507
      %2525 = vst.msk [vmem:[#allocation2 + $0xb] sm:$0xff] %vm585, %v2509
      %2526 = vst.msk [vmem:[#allocation2 + $0x1b] sm:$0xff] %vm585, %v2511
      %2527 = vst.msk [vmem:[#allocation2 + $0x23] sm:$0xff] %vm585, %v2513
      %2528 = vst.msk [vmem:[#allocation2 + $0x33] sm:$0xff] %vm585, %v2515
      %2529 = vst.msk [vmem:[#allocation2 + $0x3b] sm:$0xff] %vm585, %v2517
      %v2530 = vld [vmem:[%s13] sm:$0xff]
      %v2531 = vld [vmem:[%s13 + $0x8] sm:$0xff]
      %v2532 = vld [vmem:[%s13 + $0x10] sm:$0xff]
      %v2533 = vld [vmem:[%s14] sm:$0x1]
      %v2534 = vld [vmem:[#allocation2 + $0x3] sm:$0xff]
      %v2535 = vld [vmem:[#allocation2 + $0xb] sm:$0xff]
      %v2536 = vld [vmem:[#allocation2 + $0x1b] sm:$0xff]
      %v2537 = vld [vmem:[#allocation2 + $0x23] sm:$0xff]
      %v2538 = vld [vmem:[#allocation2 + $0x33] sm:$0xff]
      %v2539 = vld [vmem:[#allocation2 + $0x3b] sm:$0xff]
      %v2541 = vlaneseq
      %v2542 = vshrl.u32 %v2541, 7
      %v2543 = vsub.s32 0, %v2542
      %v2544 = vrot.slane %v2533, %v2543
      %v2547 = vsel %vm596, %v2534, 0
      %v2550 = vsel %vm596, %v2535, 0
      %v2553 = vsel %vm596, %v2536, 0
      %v2556 = vsel %vm596, %v2537, 0
      %v2559 = vsel %vm596, %v2538, 0
      %v2562 = vsel %vm596, %v2539, 0
      %2564 = vmatprep.subr.mxu0 0.0
      %2565 = vmatpush1.msra.mxu0 %v2530
      %2566 = vmatprep.subr.mxu0 0.0
      %2567 = vmatpush1.msra.mxu0 %v2531
      %2568 = vmatprep.subr.mxu0 0.0
      %2569 = vmatpush1.msra.mxu0 %v2532
      %2570 = vmatprep.subr.mxu0 0.0
      %2571 = vmatpush1.msra.mxu0 0.0
      %2572 = vmatprep.subr.mxu0 0.0
      %2573 = vmatpush1.msra.mxu0 0.0
      %2574 = vmatprep.subr.mxu0 0.0
      %2575 = vmatpush1.msra.mxu0 0.0
      %2576 = vmatprep.subr.mxu0 0.0
      %2577 = vmatpush1.msra.mxu0 0.0
      %2578 = vmatprep.subr.mxu0 0.0
      %2579 = vmatpush1.msra.mxu0 0.0
      %2580 = vmatprep.subr.mxu0 0.0
      %2581 = vmatpush1.msra.mxu0 0.0
      %2582 = vmatprep.subr.mxu0 0.0
      %2583 = vmatpush1.msra.mxu0 0.0
      %2584 = vmatprep.subr.mxu0 0.0
      %2585 = vmatpush1.msra.mxu0 0.0
      %2586 = vmatprep.subr.mxu0 0.0
      %2587 = vmatpush1.msra.mxu0 0.0
      %2588 = vmatprep.subr.mxu0 0.0
      %2589 = vmatpush1.msra.mxu0 0.0
      %2590 = vmatprep.subr.mxu0 0.0
      %2591 = vmatpush1.msra.mxu0 0.0
      %2592 = vmatprep.subr.mxu0 0.0
      %2593 = vmatpush1.msra.mxu0 0.0
      %2594 = vmatprep.subr.mxu0 0.0
      %2595 = vmatpush1.msra.mxu0 0.0
      %2596 = vmatprep.subr.mxu0 0.0
      %2597 = vmatpush1.msra.mxu0 0.0
      %2598 = vmatprep.subr.mxu0 0.0
      %2599 = vmatpush1.msra.mxu0 0.0
      %2600 = vmatprep.subr.mxu0 0.0
      %2601 = vmatpush1.msra.mxu0 0.0
      %2602 = vmatprep.subr.mxu0 0.0
      %2603 = vmatpush1.msra.mxu0 0.0
      %2604 = vmatprep.subr.mxu0 0.0
      %2605 = vmatpush1.msra.mxu0 0.0
      %2606 = vmatprep.subr.mxu0 0.0
      %2607 = vmatpush1.msra.mxu0 0.0
      %2608 = vmatprep.subr.mxu0 0.0
      %2609 = vmatpush1.msra.mxu0 0.0
      %2610 = vmatprep.subr.mxu0 0.0
      %2611 = vmatpush1.msra.mxu0 0.0
      %2612 = vmatprep.subr.mxu0 0.0
      %2613 = vmatpush1.msra.mxu0 0.0
      %2614 = vmatprep.subr.mxu0 0.0
      %2615 = vmatpush1.msra.mxu0 0.0
      %2616 = vmatprep.subr.mxu0 0.0
      %2617 = vmatpush1.msra.mxu0 0.0
      %2618 = vmatprep.subr.mxu0 0.0
      %2619 = vmatpush1.msra.mxu0 0.0
      %2620 = vmatprep.subr.mxu0 0.0
      %2621 = vmatpush1.msra.mxu0 0.0
      %2622 = vmatprep.subr.mxu0 0.0
      %2623 = vmatpush1.msra.mxu0 0.0
      %2624 = vmatprep.subr.mxu0 0.0
      %2625 = vmatpush1.msra.mxu0 0.0
      %2626 = vmatprep.subr.mxu0 0.0
      %2627 = vmatpush1.msra.mxu0 0.0
      %2628 = vmatprep.mubr.f32.mxu0 0.0
      %2629 = vmatmul.mubr.f32.gmra.mrb[0].mxu0 %v2547
      %v2630 = vpop.f32.mrb[0].mxu0
      %v2631 = vadd.f32 %v2544, %v2630
      %v2632 = vpop.f32.mrb[0].mxu0
      %2633 = vmatprep.mubr.f32.mxu0 0.0
      %2634 = vmatmul.mubr.f32.gmra.mrb[0].mxu0 %v2550
      %v2635 = vpop.f32.mrb[0].mxu0
      %v2636 = vadd.f32 %v2544, %v2635
      %v2637 = vpop.f32.mrb[0].mxu0
      %2638 = vmatprep.mubr.f32.mxu0 0.0
      %2639 = vmatmul.mubr.f32.gmra.mrb[0].mxu0 %v2553
      %v2640 = vpop.f32.mrb[0].mxu0
      %v2641 = vadd.f32 %v2544, %v2640
      %v2642 = vpop.f32.mrb[0].mxu0
      %2643 = vmatprep.mubr.f32.mxu0 0.0
      %2644 = vmatmul.mubr.f32.gmra.mrb[0].mxu0 %v2556
      %v2645 = vpop.f32.mrb[0].mxu0
      %v2646 = vadd.f32 %v2544, %v2645
      %v2647 = vpop.f32.mrb[0].mxu0
      %2648 = vmatprep.mubr.f32.mxu0 0.0
      %2649 = vmatmul.mubr.f32.gmra.mrb[0].mxu0 %v2559
      %v2650 = vpop.f32.mrb[0].mxu0
      %v2651 = vadd.f32 %v2544, %v2650
      %v2652 = vpop.f32.mrb[0].mxu0
      %2653 = vmatprep.mubr.f32.mxu0 0.0
      %2654 = vmatmul.mubr.f32.gmra.mrb[0].mxu0 %v2562
      %v2655 = vpop.f32.mrb[0].mxu0
      %v2656 = vadd.f32 %v2544, %v2655
      %v2657 = vpop.f32.mrb[0].mxu0
      %2658 = vdwg.mxu0
      %v2659 = vld [vmem:[%s489] sm:$0xff]
      %v2660 = vld [vmem:[%s489 + $0x8] sm:$0xff]
      %v2661 = vld [vmem:[%s489 + $0x10] sm:$0xff]
      %v2662 = vld [vmem:[%s489 + $0x18] sm:$0xff]
      %v2663 = vld [vmem:[%s489 + $0x20] sm:$0xff]
      %v2664 = vld [vmem:[%s489 + $0x28] sm:$0xff]
      %v2665 = vadd.f32 %v2631, %v2659
      %v2666 = vadd.f32 %v2636, %v2660
      %v2667 = vadd.f32 %v2641, %v2661
      %v2668 = vadd.f32 %v2646, %v2662
      %v2669 = vadd.f32 %v2651, %v2663
      %v2670 = vadd.f32 %v2656, %v2664
      %2671 = vst.msk [vmem:[%s494] sm:$0xff] %vm502, %v2665
      %2672 = vst.msk [vmem:[%s494 + $0x8] sm:$0xff] %vm502, %v2666
      %2673 = vst.msk [vmem:[%s494 + $0x10] sm:$0xff] %vm502, %v2667
      %2674 = vst.msk [vmem:[%s494 + $0x18] sm:$0xff] %vm502, %v2668
      %2675 = vst.msk [vmem:[%s494 + $0x20] sm:$0xff] %vm502, %v2669
      %2676 = vst.msk [vmem:[%s494 + $0x28] sm:$0xff] %vm502, %v2670
      %p2677 = scmp.lt.s32.totalorder %s26, 1
      %s2678 = scalar_select %p2677, %s26, 1
      %s2679 = smul.addr %s2678, 6
      %s2680 = smul.addr %s2679, 8
      %s2681 = scalar_lea.vmem %s15, %s2680
      // Predicated region
      $region81: #{tpu_custom_call.1} parent=79 // pred_check
        %p2682 = pneg %p364
      $region82: #{tpu_custom_call.1} parent=79 // pred_check_branch
        %2684 = sbr.rel (%p2682) target = $region84
      $region83: #{tpu_custom_call.1} parent=79 // pred_region
        _
      $region84: #{tpu_custom_call.1} parent=79 // pred_fallthru
        _
    $region80: #{tpu_custom_call.1} parent=5 // pred_fallthru
      _
    %p2685 = scmp.le.s32.totalorder 2, %s21
    // Predicated region
    $region85: #{tpu_custom_call.1} parent=5 // pred_check
      %p2686 = pneg %p2685
    $region86: #{tpu_custom_call.1} parent=5 // pred_check_branch
      %2688 = sbr.rel (%p2686) target = $region88
    $region87: #{tpu_custom_call.1} parent=5 // pred_region
      %s2689 = ssub.s32 %s21, 2
      // Predicated region
      $region89: #{tpu_custom_call.1} parent=87 // pred_check
        %p2690 = pneg %p370
      $region90: #{tpu_custom_call.1} parent=87 // pred_check_branch
        %2692 = sbr.rel (%p2690) target = $region92
      $region91: #{tpu_custom_call.1} parent=87 // pred_region
        %p2693 = scmp.lt.s32.totalorder %s27, 1
        %s2694 = scalar_select %p2693, %s27, 1
        %s2695 = smul.addr %s2694, 6
        %s2696 = smul.addr %s2695, 8
        %s2697 = scalar_lea.vmem %s15, %s2696
      $region92: #{tpu_custom_call.1} parent=87 // pred_fallthru
        _
    $region88: #{tpu_custom_call.1} parent=5 // pred_fallthru
      _
  $region6: #{tpu_custom_call.1} parent=0 // loop_footer
    %s25 = sadd.s32 1, %s21
  $region7: #{tpu_custom_call.1} parent=0 // loop_footer_branch
    %20 = sbr.rel target = $region3
  $region8: #{tpu_custom_call.1} parent=0 // loop_exit
    _

</llo_original>
